<compile_context>
chip_gen: v7x
topology: tpu7x:2x2x1
jax: 0.10.0
libtpu: 0.0.40
codegen_flags: <defaults>
</compile_context>

<pallas_src>
import jax
import jax.numpy as jnp
from jax.experimental import pallas as pl
from jax.experimental.pallas import tpu as pltpu


# ---------------------------------------------------------------------------
# Pallas kernel: fused (stacked im2col-matmul + 2x2 max-pool + bias + ReLU)
# ---------------------------------------------------------------------------
def _conv_relu_pool_kernel(p_ref, w_ref, b_ref, o_ref):
    # p_ref: (4, tm, K) bf16 -- patches for the 4 corners of each 2x2 pool window
    # w_ref: (K, C_out) bf16;  b_ref: (1, C_out) f32;  o_ref: (tm, C_out)
    tm = o_ref.shape[0]
    k = w_ref.shape[0]
    # Merge the corner axis into rows (layout-free: tm % 16 == 0) so the four
    # corner matmuls become ONE MXU pass with 4x more LHS rows.
    lhs = p_ref[...].reshape(4 * tm, k)
    acc = jnp.dot(lhs, w_ref[...], preferred_element_type=jnp.float32)
    # Max over the 4 pooling corners first (static, sublane-aligned row slabs),
    # then a single bias add + ReLU.
    pooled = jnp.maximum(jnp.maximum(acc[0 * tm:1 * tm], acc[1 * tm:2 * tm]),
                         jnp.maximum(acc[2 * tm:3 * tm], acc[3 * tm:4 * tm]))
    o_ref[...] = jnp.maximum(pooled + b_ref[...], 0.0).astype(o_ref.dtype)


def _pick_tm(mp, k):
    """Row-tile size: multiple of 16 (clean bf16 leading-dim merge), bounded by
    a v5e-safe VMEM budget, and aiming for a 2-step grid so both v7x
    TensorCores get work under dimension_semantics=("parallel",)."""
    bytes_per_row = 4 * k * 2 * 2                 # stacked bf16 patches, 2 pipeline buffers
    budget = 10 * 1024 * 1024                     # under v5e's 16 MiB scoped VMEM default
    cap = max(16, min(512, (budget // bytes_per_row) // 16 * 16))
    want = max(16, (((mp + 1) // 2 + 15) // 16) * 16)
    return min(want, cap)


# ---------------------------------------------------------------------------
# Wrapper: Conv2d -> ReLU -> MaxPool2d(2,2), channels-last in / channels-last out
# ---------------------------------------------------------------------------
def conv_relu_pool(x_nhwc, w, b, *, stride, padding, out_dtype=jnp.float32):
    """x_nhwc: (N, H, W, C_in); w: (C_out, C_in, KH, KW) [torch layout]; b: (C_out,).

    Returns NHWC (N, PH, PW, C_out) with PH = OH//2, PW = OW//2 (floor pooling).
    """
    N, H, W, C_in = x_nhwc.shape
    C_out, _, KH, KW = w.shape

    x = x_nhwc.astype(jnp.bfloat16)               # bf16 operands for the MXU
    if padding:
        x = jnp.pad(x, ((0, 0), (padding, padding), (padding, padding), (0, 0)))
        H += 2 * padding
        W += 2 * padding

    OH = (H - KH) // stride + 1
    OW = (W - KW) // stride + 1
    PH, PW = OH // 2, OW // 2                     # floor-mode MaxPool2d(2,2)
    K = C_in * KH * KW
    Mp = N * PH * PW                              # pooled output rows

    # Single im2col over the 2PH x 2PW conv positions kept by the pool
    # (K ordered (C_in, KH, KW) to match torch weight.reshape(C_out, -1)),
    # then split the 4 pooling corners with a reshape/transpose.
    taps = []
    for kh in range(KH):
        for kw in range(KW):
            taps.append(x[:, kh: kh + stride * (2 * PH - 1) + 1: stride,
                             kw: kw + stride * (2 * PW - 1) + 1: stride, :])
    p = jnp.stack(taps, axis=-1).reshape(N, 2 * PH, 2 * PW, K)
    p = p.reshape(N, PH, 2, PW, 2, K).transpose(2, 4, 0, 1, 3, 5)   # (dr, dc, N, PH, PW, K)
    stacked = p.reshape(4, Mp, K)                 # corner = 2*dr + dc

    tm = _pick_tm(Mp, K)
    Mp_pad = pl.cdiv(Mp, tm) * tm
    if Mp_pad != Mp:
        stacked = jnp.pad(stacked, ((0, 0), (0, Mp_pad - Mp), (0, 0)))

    w2 = jnp.transpose(w.reshape(C_out, K)).astype(jnp.bfloat16)    # (K, C_out)
    b2 = b.reshape(1, C_out).astype(jnp.float32)

    grid = (Mp_pad // tm,)
    out_bytes = jnp.dtype(out_dtype).itemsize
    cost = pl.CostEstimate(
        flops=2 * 4 * Mp_pad * K * C_out,
        transcendentals=0,
        bytes_accessed=4 * Mp_pad * K * 2 + K * C_out * 2
                       + C_out * 4 + Mp_pad * C_out * out_bytes,
    )

    out = pl.pallas_call(
        _conv_relu_pool_kernel,
        out_shape=jax.ShapeDtypeStruct((Mp_pad, C_out), out_dtype),
        grid=grid,
        in_specs=[pl.BlockSpec((4, tm, K), lambda i: (0, i, 0)),
                  pl.BlockSpec((K, C_out), lambda i: (0, 0)),
                  pl.BlockSpec((1, C_out), lambda i: (0, 0))],
        out_specs=pl.BlockSpec((tm, C_out), lambda i: (i, 0)),
        compiler_params=pltpu.CompilerParams(
            dimension_semantics=("parallel",)),
        cost_estimate=cost,
    )(stacked, w2, b2)

    # Padded rows hold relu(bias) garbage; slice them off before reshaping.
    return out[:Mp].reshape(N, PH, PW, C_out)     # NHWC


# ---------------------------------------------------------------------------
# Full forward pass (NCHW in / NCHW out, matching the PyTorch module)
# ---------------------------------------------------------------------------
def simple_cnn_forward(x_nchw, params):
    x = jnp.transpose(x_nchw, (0, 2, 3, 1))       # NCHW -> NHWC once
    x = conv_relu_pool(x, params["w1"], params["b1"], stride=1, padding=0,
                       out_dtype=jnp.bfloat16)    # layer-2 consumes bf16 anyway
    x = conv_relu_pool(x, params["w2"], params["b2"], stride=2, padding=2,
                       out_dtype=jnp.float32)
    # conv3 and classifier are empty nn.Sequential -> identity
    return jnp.transpose(x, (0, 3, 1, 2))         # NHWC -> NCHW once, at the end


def init_params(key):
    k1, k2, k3, k4 = jax.random.split(key, 4)
    w1 = jax.random.normal(k1, (64, 3, 7, 7), jnp.float32) * (1.0 / (3 * 49)) ** 0.5
    b1 = jax.random.normal(k2, (64,), jnp.float32) * 0.01
    w2 = jax.random.normal(k3, (128, 64, 7, 7), jnp.float32) * (1.0 / (64 * 49)) ** 0.5
    b2 = jax.random.normal(k4, (128,), jnp.float32) * 0.01
    return {"w1": w1, "b1": b1, "w2": w2, "b2": b2}


if __name__ == "__main__":
    key = jax.random.PRNGKey(0)
    pkey, xkey = jax.random.split(key)
    params = init_params(pkey)

    # NCHW input: 32x32 -> conv1(7,s1): 26x26 -> pool: 13x13
    #             -> conv2(7,s2,p2): 6x6 -> pool: 3x3
    x = jax.random.normal(xkey, (2, 3, 32, 32), jnp.float32)

    y = jax.jit(simple_cnn_forward)(x, params)
    y = jax.block_until_ready(y)
    assert y.shape == (2, 128, 3, 3), y.shape
    assert bool(jnp.all(jnp.isfinite(y)))
    print("KERNEL_OK")
</pallas_src>

<mosaic_0001>
module attributes {stable_mosaic.version = 11 : i64} {
  func.func @_conv_relu_pool_kernel(%arg0: i32, %arg1: memref<4x176x147xbf16, #tpu.memory_space<vmem>>, %arg2: memref<147x64xbf16, #tpu.memory_space<vmem>>, %arg3: memref<1x64xf32, #tpu.memory_space<vmem>>, %arg4: memref<176x64xbf16, #tpu.memory_space<vmem>>) attributes {dimension_semantics = [#tpu.dimension_semantics<parallel>], iteration_bounds = array<i64: 2>, scalar_prefetch = 0 : i64, scratch_operands = 0 : i64, tpu.core_type = #tpu.core_type<tc>, window_params = [{transform_indices = @transform_0, window_bounds = array<i64: 4, 176, 147>}, {pipeline_mode = #tpu.pipeline_mode<synchronous>, transform_indices = @transform_1, window_bounds = array<i64: 147, 64>}, {pipeline_mode = #tpu.pipeline_mode<synchronous>, transform_indices = @transform_2, window_bounds = array<i64: 1, 64>}, {transform_indices = @transform_3, window_bounds = array<i64: 176, 64>}]} {
    %c0 = arith.constant 0 : index
    %c0_0 = arith.constant 0 : index
    %c0_1 = arith.constant 0 : index
    %0 = vector.load %arg1[%c0, %c0_0, %c0_1] : memref<4x176x147xbf16, #tpu.memory_space<vmem>>, vector<4x176x147xbf16>
    %1 = vector.shape_cast %0 : vector<4x176x147xbf16> to vector<704x147xbf16>
    %c0_2 = arith.constant 0 : index
    %c0_3 = arith.constant 0 : index
    %2 = vector.load %arg2[%c0_2, %c0_3] : memref<147x64xbf16, #tpu.memory_space<vmem>>, vector<147x64xbf16>
    %cst = arith.constant dense<0.000000e+00> : vector<704x64xf32>
    %3 = tpu.matmul %1, %2, %cst {dimension_numbers = #tpu.dot_dimension_numbers<[1], [0], [0], [1], [0, 0, 1, 1], [], []>} : vector<704x147xbf16>, vector<147x64xbf16>, vector<704x64xf32> -> vector<704x64xf32>
    %4 = vector.extract_strided_slice %3 {offsets = [0, 0], sizes = [176, 64], strides = [1, 1]} : vector<704x64xf32> to vector<176x64xf32>
    %5 = vector.extract_strided_slice %3 {offsets = [176, 0], sizes = [176, 64], strides = [1, 1]} : vector<704x64xf32> to vector<176x64xf32>
    %6 = arith.maximumf %4, %5 : vector<176x64xf32>
    %7 = vector.extract_strided_slice %3 {offsets = [352, 0], sizes = [176, 64], strides = [1, 1]} : vector<704x64xf32> to vector<176x64xf32>
    %8 = vector.extract_strided_slice %3 {offsets = [528, 0], sizes = [176, 64], strides = [1, 1]} : vector<704x64xf32> to vector<176x64xf32>
    %9 = arith.maximumf %7, %8 : vector<176x64xf32>
    %10 = arith.maximumf %6, %9 : vector<176x64xf32>
    %c0_4 = arith.constant 0 : index
    %c0_5 = arith.constant 0 : index
    %11 = vector.load %arg3[%c0_4, %c0_5] : memref<1x64xf32, #tpu.memory_space<vmem>>, vector<1x64xf32>
    %12 = vector.broadcast %11 : vector<1x64xf32> to vector<176x64xf32>
    %13 = arith.addf %10, %12 : vector<176x64xf32>
    %cst_6 = arith.constant 0.000000e+00 : f32
    %14 = vector.broadcast %cst_6 : f32 to vector<176x64xf32>
    %15 = arith.maximumf %13, %14 : vector<176x64xf32>
    %16 = arith.truncf %15 : vector<176x64xf32> to vector<176x64xbf16>
    %c0_7 = arith.constant 0 : index
    %c0_8 = arith.constant 0 : index
    %17 = vector.load %arg4[%c0_7, %c0_8] : memref<176x64xbf16, #tpu.memory_space<vmem>>, vector<176x64xbf16>
    tpu.vector_store %arg4[%c0_7, %c0_8], %16 {strides = array<i32>} : memref<176x64xbf16, #tpu.memory_space<vmem>>, vector<176x64xbf16>,
    return
  }
  func.func @transform_0(%arg0: i32) -> (i32, i32, i32) {
    %c0_i32 = arith.constant 0 : i32
    %c0_i32_0 = arith.constant 0 : i32
    %c0_i32_1 = arith.constant 0 : i32
    return %c0_i32, %arg0, %c0_i32_0 : i32, i32, i32
  }
  func.func @transform_1(%arg0: i32) -> (i32, i32) {
    %c0_i32 = arith.constant 0 : i32
    %c0_i32_0 = arith.constant 0 : i32
    %c0_i32_1 = arith.constant 0 : i32
    return %c0_i32, %c0_i32_0 : i32, i32
  }
  func.func @transform_2(%arg0: i32) -> (i32, i32) {
    %c0_i32 = arith.constant 0 : i32
    %c0_i32_0 = arith.constant 0 : i32
    %c0_i32_1 = arith.constant 0 : i32
    return %c0_i32, %c0_i32_0 : i32, i32
  }
  func.func @transform_3(%arg0: i32) -> (i32, i32) {
    %c0_i32 = arith.constant 0 : i32
    %c0_i32_0 = arith.constant 0 : i32
    return %arg0, %c0_i32 : i32, i32
  }
}

module attributes {stable_mosaic.version = 11 : i64} {
  func.func @_conv_relu_pool_kernel(%arg0: i32, %arg1: memref<4x16x3136xbf16, #tpu.memory_space<vmem>>, %arg2: memref<3136x128xbf16, #tpu.memory_space<vmem>>, %arg3: memref<1x128xf32, #tpu.memory_space<vmem>>, %arg4: memref<16x128xf32, #tpu.memory_space<vmem>>) attributes {dimension_semantics = [#tpu.dimension_semantics<parallel>], iteration_bounds = array<i64: 2>, scalar_prefetch = 0 : i64, scratch_operands = 0 : i64, tpu.core_type = #tpu.core_type<tc>, window_params = [{transform_indices = @transform_0, window_bounds = array<i64: 4, 16, 3136>}, {pipeline_mode = #tpu.pipeline_mode<synchronous>, transform_indices = @transform_1, window_bounds = array<i64: 3136, 128>}, {pipeline_mode = #tpu.pipeline_mode<synchronous>, transform_indices = @transform_2, window_bounds = array<i64: 1, 128>}, {transform_indices = @transform_3, window_bounds = array<i64: 16, 128>}]} {
    %c0 = arith.constant 0 : index
    %c0_0 = arith.constant 0 : index
    %c0_1 = arith.constant 0 : index
    %0 = vector.load %arg1[%c0, %c0_0, %c0_1] : memref<4x16x3136xbf16, #tpu.memory_space<vmem>>, vector<4x16x3136xbf16>
    %1 = vector.shape_cast %0 : vector<4x16x3136xbf16> to vector<64x3136xbf16>
    %c0_2 = arith.constant 0 : index
    %c0_3 = arith.constant 0 : index
    %2 = vector.load %arg2[%c0_2, %c0_3] : memref<3136x128xbf16, #tpu.memory_space<vmem>>, vector<3136x128xbf16>
    %cst = arith.constant dense<0.000000e+00> : vector<64x128xf32>
    %3 = tpu.matmul %1, %2, %cst {dimension_numbers = #tpu.dot_dimension_numbers<[1], [0], [0], [1], [0, 0, 1, 1], [], []>} : vector<64x3136xbf16>, vector<3136x128xbf16>, vector<64x128xf32> -> vector<64x128xf32>
    %4 = vector.extract_strided_slice %3 {offsets = [0, 0], sizes = [16, 128], strides = [1, 1]} : vector<64x128xf32> to vector<16x128xf32>
    %5 = vector.extract_strided_slice %3 {offsets = [16, 0], sizes = [16, 128], strides = [1, 1]} : vector<64x128xf32> to vector<16x128xf32>
    %6 = arith.maximumf %4, %5 : vector<16x128xf32>
    %7 = vector.extract_strided_slice %3 {offsets = [32, 0], sizes = [16, 128], strides = [1, 1]} : vector<64x128xf32> to vector<16x128xf32>
    %8 = vector.extract_strided_slice %3 {offsets = [48, 0], sizes = [16, 128], strides = [1, 1]} : vector<64x128xf32> to vector<16x128xf32>
    %9 = arith.maximumf %7, %8 : vector<16x128xf32>
    %10 = arith.maximumf %6, %9 : vector<16x128xf32>
    %c0_4 = arith.constant 0 : index
    %c0_5 = arith.constant 0 : index
    %11 = vector.load %arg3[%c0_4, %c0_5] : memref<1x128xf32, #tpu.memory_space<vmem>>, vector<1x128xf32>
    %12 = vector.broadcast %11 : vector<1x128xf32> to vector<16x128xf32>
    %13 = arith.addf %10, %12 : vector<16x128xf32>
    %cst_6 = arith.constant 0.000000e+00 : f32
    %14 = vector.broadcast %cst_6 : f32 to vector<16x128xf32>
    %15 = arith.maximumf %13, %14 : vector<16x128xf32>
    %c0_7 = arith.constant 0 : index
    %c0_8 = arith.constant 0 : index
    %16 = vector.load %arg4[%c0_7, %c0_8] : memref<16x128xf32, #tpu.memory_space<vmem>>, vector<16x128xf32>
    tpu.vector_store %arg4[%c0_7, %c0_8], %15 {strides = array<i32>} : memref<16x128xf32, #tpu.memory_space<vmem>>, vector<16x128xf32>,
    return
  }
  func.func @transform_0(%arg0: i32) -> (i32, i32, i32) {
    %c0_i32 = arith.constant 0 : i32
    %c0_i32_0 = arith.constant 0 : i32
    %c0_i32_1 = arith.constant 0 : i32
    return %c0_i32, %arg0, %c0_i32_0 : i32, i32, i32
  }
  func.func @transform_1(%arg0: i32) -> (i32, i32) {
    %c0_i32 = arith.constant 0 : i32
    %c0_i32_0 = arith.constant 0 : i32
    %c0_i32_1 = arith.constant 0 : i32
    return %c0_i32, %c0_i32_0 : i32, i32
  }
  func.func @transform_2(%arg0: i32) -> (i32, i32) {
    %c0_i32 = arith.constant 0 : i32
    %c0_i32_0 = arith.constant 0 : i32
    %c0_i32_1 = arith.constant 0 : i32
    return %c0_i32, %c0_i32_0 : i32, i32
  }
  func.func @transform_3(%arg0: i32) -> (i32, i32) {
    %c0_i32 = arith.constant 0 : i32
    %c0_i32_0 = arith.constant 0 : i32
    return %arg0, %c0_i32 : i32, i32
  }
}

</mosaic_0001>

<llo_original>
// kernel: simple_cnn_forward.2
$region0: #{simple_cnn_forward.2}
  #allocation0 [shape = 'u32[]', space=smem, size = 0x4, offset = 0x4, fixed_abs, tag = 'smem constant byte address 0x4 - core index']
  #allocation1 [shape = 'u32[144,128]{1,0:T(1,128)}', space=vmem, size = 0x12000, scoped, tag = 'internal scratch']
  %s0 = inlined_call_operand.vmem [shape: bf16[4,352,147], index: 0, kind: input, shape index: {}]
  %s1 = inlined_call_operand.vmem [shape: bf16[147,64], index: 1, kind: input, shape index: {}]
  %s2 = inlined_call_operand.vmem [shape: f32[1,64], index: 2, kind: input, shape index: {}]
  %s3 = inlined_call_operand.vmem [shape: bf16[352,64], index: 3, kind: output, shape index: {}]
  %s4 = sld [smem:[#allocation0]]
  $region83: #{simple_cnn_forward.2} parent=0
    _
  %s6 = ssub.s32 1, %s4
  %s7 = scalar_select 0, %s6, %s4
  $region1: #{simple_cnn_forward.2} parent=0
    #allocation2 [shape = 'u8[720896]{0}', space=vmem, size = 0xb0000, scoped, tag = 'input window, operand 0']
    loop: start=0, step=1, limit=4
    $region2: #{simple_cnn_forward.2} parent=1 // loop_pre_header
      _
    $region3: #{simple_cnn_forward.2} parent=1 // loop_header
      %s9 = sphi 0, %s13
      %p10 = scmp.ge.s32.totalorder %s9, 4
      %s19 = sphi 0, %s21
      %s22 = sphi 0, %s19
      %s23 = sphi 0, %s22
      %s39 = sphi 0, %s23
      %s43 = sphi 0, %s43
      %s45 = sphi 0, %s43
      %s46 = sphi 0, %s45
      %s60 = sphi 0, %s46
      %s64 = sphi 0, %s64
      %s66 = sphi 0, %s64
      %s67 = sphi 0, %s66
      %s81 = sphi 0, %s67
      %s87 = sphi 0, %s89
      %s90 = sphi 0, %s87
      %s91 = sphi 0, %s90
      %s107 = sphi 0, %s91
    $region4: #{simple_cnn_forward.2} parent=1 // loop_header_branch
      %12 = sbr.rel (%p10) target = $region8
    $region5: #{simple_cnn_forward.2} parent=1 // loop_body
      %s14 = ssub.s32 %s9, 1
      %s15 = ssub.s32 %s9, 2
      %s16 = sadd.s32 %s9, 1
      %s17 = ssub.s32 %s9, %s16
      %p18 = scmp.eq.s32.totalorder %s17, 0
      %s20 = sadd.s32 %s19, 1
      %s21 = scalar_select %p18, %s19, %s20
      %p24 = pneg %p18
      %p25 = scmp.eq.s32.totalorder %s9, 1
      %p26 = por %p24, %p25
      %p27 = scmp.ne.s32.totalorder %s19, %s22
      %p28 = scmp.eq.s32.totalorder %s9, 0
      %p29 = por %p27, %p28
      %p30 = scmp.ne.s32.totalorder %s19, %s22
      %p31 = scmp.eq.s32.totalorder %s14, 1
      %p32 = por %p30, %p31
      %p33 = scmp.ne.s32.totalorder %s22, %s23
      %p34 = scmp.eq.s32.totalorder %s14, 0
      %p35 = por %p33, %p34
      %p36 = scmp.ne.s32.totalorder %s22, %s23
      %p37 = scmp.eq.s32.totalorder %s15, 1
      %p38 = por %p36, %p37
      %p40 = scmp.ne.s32.totalorder %s23, %s39
      %p41 = scmp.eq.s32.totalorder %s15, 0
      %p42 = por %p40, %p41
      %s44 = sadd.s32 %s43, 1
      %p47 = scmp.eq.s32.totalorder %s9, 1
      %p48 = scmp.ne.s32.totalorder %s43, %s45
      %p49 = scmp.eq.s32.totalorder %s9, 0
      %p50 = por %p48, %p49
      %p51 = scmp.ne.s32.totalorder %s43, %s45
      %p52 = scmp.eq.s32.totalorder %s14, 1
      %p53 = por %p51, %p52
      %p54 = scmp.ne.s32.totalorder %s45, %s46
      %p55 = scmp.eq.s32.totalorder %s14, 0
      %p56 = por %p54, %p55
      %p57 = scmp.ne.s32.totalorder %s45, %s46
      %p58 = scmp.eq.s32.totalorder %s15, 1
      %p59 = por %p57, %p58
      %p61 = scmp.ne.s32.totalorder %s46, %s60
      %p62 = scmp.eq.s32.totalorder %s15, 0
      %p63 = por %p61, %p62
      %s65 = sadd.s32 %s64, 1
      %p68 = scmp.eq.s32.totalorder %s9, 1
      %p69 = scmp.ne.s32.totalorder %s64, %s66
      %p70 = scmp.eq.s32.totalorder %s9, 0
      %p71 = por %p69, %p70
      %p72 = scmp.ne.s32.totalorder %s64, %s66
      %p73 = scmp.eq.s32.totalorder %s14, 1
      %p74 = por %p72, %p73
      %p75 = scmp.ne.s32.totalorder %s66, %s67
      %p76 = scmp.eq.s32.totalorder %s14, 0
      %p77 = por %p75, %p76
      %p78 = scmp.ne.s32.totalorder %s66, %s67
      %p79 = scmp.eq.s32.totalorder %s15, 1
      %p80 = por %p78, %p79
      %p82 = scmp.ne.s32.totalorder %s67, %s81
      %p83 = scmp.eq.s32.totalorder %s15, 0
      %p84 = por %p82, %p83
      %s85 = ssub.s32 %s9, %s16
      %p86 = scmp.eq.s32.totalorder %s85, 0
      %s88 = sadd.s32 %s87, 1
      %s89 = scalar_select %p86, %s87, %s88
      %p92 = pneg %p86
      %p93 = scmp.eq.s32.totalorder %s9, 1
      %p94 = por %p92, %p93
      %p95 = scmp.ne.s32.totalorder %s87, %s90
      %p96 = scmp.eq.s32.totalorder %s9, 0
      %p97 = por %p95, %p96
      %p98 = scmp.ne.s32.totalorder %s87, %s90
      %p99 = scmp.eq.s32.totalorder %s14, 1
      %p100 = por %p98, %p99
      %p101 = scmp.ne.s32.totalorder %s90, %s91
      %p102 = scmp.eq.s32.totalorder %s14, 0
      %p103 = por %p101, %p102
      %p104 = scmp.ne.s32.totalorder %s90, %s91
      %p105 = scmp.eq.s32.totalorder %s15, 1
      %p106 = por %p104, %p105
      %p108 = scmp.ne.s32.totalorder %s91, %s107
      %p109 = scmp.eq.s32.totalorder %s15, 0
      %p110 = por %p108, %p109
      %p111 = scmp.le.s32.totalorder 1, %s9
      %p112 = scmp.lt.s32.totalorder %s9, 3
      %p113 = pnand %p111, %p112
      %p114 = pneg %p113
      // Predicated region
      $region9: #{simple_cnn_forward.2} parent=5 // pred_check
        _
      $region10: #{simple_cnn_forward.2} parent=5 // pred_check_branch
        %116 = sbr.rel (%p113) target = $region12
      $region11: #{simple_cnn_forward.2} parent=5 // pred_region
        %s117 = ssub.s32 %s9, 1
        // Predicated region
        $region13: #{simple_cnn_forward.2} parent=11 // pred_check
          %p118 = pneg %p56
        $region14: #{simple_cnn_forward.2} parent=11 // pred_check_branch
          %120 = sbr.rel (%p118) target = $region16
        $region15: #{simple_cnn_forward.2} parent=11 // pred_region
          _
        $region16: #{simple_cnn_forward.2} parent=11 // pred_fallthru
          _
        // Predicated region
        $region17: #{simple_cnn_forward.2} parent=11 // pred_check
          %p121 = pneg %p77
        $region18: #{simple_cnn_forward.2} parent=11 // pred_check_branch
          %123 = sbr.rel (%p121) target = $region20
        $region19: #{simple_cnn_forward.2} parent=11 // pred_region
          _
        $region20: #{simple_cnn_forward.2} parent=11 // pred_fallthru
          _
      $region12: #{simple_cnn_forward.2} parent=5 // pred_fallthru
        _
      %p124 = scmp.lt.s32.totalorder %s9, 2
      // Predicated region
      $region21: #{simple_cnn_forward.2} parent=5 // pred_check
        %p125 = pneg %p124
      $region22: #{simple_cnn_forward.2} parent=5 // pred_check_branch
        %127 = sbr.rel (%p125) target = $region24
      $region23: #{simple_cnn_forward.2} parent=5 // pred_region
        // Predicated region
        $region25: #{simple_cnn_forward.2} parent=23 // pred_check
          %p128 = pneg %p29
        $region26: #{simple_cnn_forward.2} parent=23 // pred_check_branch
          %130 = sbr.rel (%p128) target = $region28
        $region27: #{simple_cnn_forward.2} parent=23 // pred_region
          %s131 = sand.u32 %s19, 1
          %s132 = sand.u32 %s19, 1
          %s133 = smul.addr %s132, 704
          %s134 = scalar_lea.vmem [#allocation2], %s133
          %s135 = smul.u32 22, %s9
          %s136 = smul.addr %s135, 2
          %s137 = smul.addr %s136, 4
          %s138 = scalar_lea.vmem %s0, %s137
          // Predicated region
          $region29: #{simple_cnn_forward.2} parent=27 // pred_check
            _
          $region30: #{simple_cnn_forward.2} parent=27 // pred_check_branch
            %140 = sbr.rel (0) target = $region32
          $region31: #{simple_cnn_forward.2} parent=27 // pred_region
            // Predicated region
            $region33: #{simple_cnn_forward.2} parent=31 // pred_check
              _
            $region34: #{simple_cnn_forward.2} parent=31 // pred_check_branch
              %142 = sbr.rel (0) target = $region36
            $region35: #{simple_cnn_forward.2} parent=31 // pred_region
              // Predicated region
              $region48: #{simple_cnn_forward.2} parent=35 // pred_check
                _
              $region49: #{simple_cnn_forward.2} parent=35 // pred_check_branch
                %331 = sbr.rel (0) target = $region51
              $region50: #{simple_cnn_forward.2} parent=35 // pred_region
                loop: start=0, step=1, limit=1
                $region52: #{simple_cnn_forward.2} parent=50 // loop_pre_header
                  _
                $region53: #{simple_cnn_forward.2} parent=50 // loop_header
                  %s333 = sphi 0, %s337
                  %p334 = scmp.ge.s32.totalorder %s333, 1
                  %s338 = sphi %s138, %s138
                  %s339 = sphi %s134, %s134
                $region54: #{simple_cnn_forward.2} parent=50 // loop_header_branch
                  %336 = sbr.rel (%p334) target = $region58
                $region55: #{simple_cnn_forward.2} parent=50 // loop_body
                  %v340 = vld [vmem:[%s338] sm:$0xff]
                  %341 = vst [vmem:[%s339] sm:$0xff] %v340
                  %v342 = vld [vmem:[%s338 + $0x8] sm:$0xff]
                  %343 = vst [vmem:[%s339 + $0x8] sm:$0xff] %v342
                  %v344 = vld [vmem:[%s338 + $0x10] sm:$0xff]
                  %345 = vst [vmem:[%s339 + $0x10] sm:$0xff] %v344
                  %v346 = vld [vmem:[%s338 + $0x18] sm:$0xff]
                  %347 = vst [vmem:[%s339 + $0x18] sm:$0xff] %v346
                  %v348 = vld [vmem:[%s338 + $0x20] sm:$0xff]
                  %349 = vst [vmem:[%s339 + $0x20] sm:$0xff] %v348
                  %v350 = vld [vmem:[%s338 + $0x28] sm:$0xff]
                  %351 = vst [vmem:[%s339 + $0x28] sm:$0xff] %v350
                  %v352 = vld [vmem:[%s338 + $0x30] sm:$0xff]
                  %353 = vst [vmem:[%s339 + $0x30] sm:$0xff] %v352
                  %v354 = vld [vmem:[%s338 + $0x38] sm:$0xff]
                  %355 = vst [vmem:[%s339 + $0x38] sm:$0xff] %v354
                  %v356 = vld [vmem:[%s338 + $0x40] sm:$0xff]
                  %357 = vst [vmem:[%s339 + $0x40] sm:$0xff] %v356
                  %v358 = vld [vmem:[%s338 + $0x48] sm:$0xff]
                  %359 = vst [vmem:[%s339 + $0x48] sm:$0xff] %v358
                  %v360 = vld [vmem:[%s338 + $0x50] sm:$0xff]
                  %361 = vst [vmem:[%s339 + $0x50] sm:$0xff] %v360
                  %v362 = vld [vmem:[%s338 + $0x58] sm:$0xff]
                  %363 = vst [vmem:[%s339 + $0x58] sm:$0xff] %v362
                  %v364 = vld [vmem:[%s338 + $0x60] sm:$0xff]
                  %365 = vst [vmem:[%s339 + $0x60] sm:$0xff] %v364
                  %v366 = vld [vmem:[%s338 + $0x68] sm:$0xff]
                  %367 = vst [vmem:[%s339 + $0x68] sm:$0xff] %v366
                  %v368 = vld [vmem:[%s338 + $0x70] sm:$0xff]
                  %369 = vst [vmem:[%s339 + $0x70] sm:$0xff] %v368
                  %v370 = vld [vmem:[%s338 + $0x78] sm:$0xff]
                  %371 = vst [vmem:[%s339 + $0x78] sm:$0xff] %v370
                  %v372 = vld [vmem:[%s338 + $0x80] sm:$0xff]
                  %373 = vst [vmem:[%s339 + $0x80] sm:$0xff] %v372
                  %v374 = vld [vmem:[%s338 + $0x88] sm:$0xff]
                  %375 = vst [vmem:[%s339 + $0x88] sm:$0xff] %v374
                  %v376 = vld [vmem:[%s338 + $0x90] sm:$0xff]
                  %377 = vst [vmem:[%s339 + $0x90] sm:$0xff] %v376
                  %v378 = vld [vmem:[%s338 + $0x98] sm:$0xff]
                  %379 = vst [vmem:[%s339 + $0x98] sm:$0xff] %v378
                  %v380 = vld [vmem:[%s338 + $0xa0] sm:$0xff]
                  %381 = vst [vmem:[%s339 + $0xa0] sm:$0xff] %v380
                  %v382 = vld [vmem:[%s338 + $0xa8] sm:$0xff]
                  %383 = vst [vmem:[%s339 + $0xa8] sm:$0xff] %v382
                  %v384 = vld [vmem:[%s338 + $0x160] sm:$0xff]
                  %385 = vst [vmem:[%s339 + $0xb0] sm:$0xff] %v384
                  %v386 = vld [vmem:[%s338 + $0x168] sm:$0xff]
                  %387 = vst [vmem:[%s339 + $0xb8] sm:$0xff] %v386
                  %v388 = vld [vmem:[%s338 + $0x170] sm:$0xff]
                  %389 = vst [vmem:[%s339 + $0xc0] sm:$0xff] %v388
                  %v390 = vld [vmem:[%s338 + $0x178] sm:$0xff]
                  %391 = vst [vmem:[%s339 + $0xc8] sm:$0xff] %v390
                  %v392 = vld [vmem:[%s338 + $0x180] sm:$0xff]
                  %393 = vst [vmem:[%s339 + $0xd0] sm:$0xff] %v392
                  %v394 = vld [vmem:[%s338 + $0x188] sm:$0xff]
                  %395 = vst [vmem:[%s339 + $0xd8] sm:$0xff] %v394
                  %v396 = vld [vmem:[%s338 + $0x190] sm:$0xff]
                  %397 = vst [vmem:[%s339 + $0xe0] sm:$0xff] %v396
                  %v398 = vld [vmem:[%s338 + $0x198] sm:$0xff]
                  %399 = vst [vmem:[%s339 + $0xe8] sm:$0xff] %v398
                  %v400 = vld [vmem:[%s338 + $0x1a0] sm:$0xff]
                  %401 = vst [vmem:[%s339 + $0xf0] sm:$0xff] %v400
                  %v402 = vld [vmem:[%s338 + $0x1a8] sm:$0xff]
                  %403 = vst [vmem:[%s339 + $0xf8] sm:$0xff] %v402
                  %v404 = vld [vmem:[%s338 + $0x1b0] sm:$0xff]
                  %405 = vst [vmem:[%s339 + $0x100] sm:$0xff] %v404
                  %v406 = vld [vmem:[%s338 + $0x1b8] sm:$0xff]
                  %407 = vst [vmem:[%s339 + $0x108] sm:$0xff] %v406
                  %v408 = vld [vmem:[%s338 + $0x1c0] sm:$0xff]
                  %409 = vst [vmem:[%s339 + $0x110] sm:$0xff] %v408
                  %v410 = vld [vmem:[%s338 + $0x1c8] sm:$0xff]
                  %411 = vst [vmem:[%s339 + $0x118] sm:$0xff] %v410
                  %v412 = vld [vmem:[%s338 + $0x1d0] sm:$0xff]
                  %413 = vst [vmem:[%s339 + $0x120] sm:$0xff] %v412
                  %v414 = vld [vmem:[%s338 + $0x1d8] sm:$0xff]
                  %415 = vst [vmem:[%s339 + $0x128] sm:$0xff] %v414
                  %v416 = vld [vmem:[%s338 + $0x1e0] sm:$0xff]
                  %417 = vst [vmem:[%s339 + $0x130] sm:$0xff] %v416
                  %v418 = vld [vmem:[%s338 + $0x1e8] sm:$0xff]
                  %419 = vst [vmem:[%s339 + $0x138] sm:$0xff] %v418
                  %v420 = vld [vmem:[%s338 + $0x1f0] sm:$0xff]
                  %421 = vst [vmem:[%s339 + $0x140] sm:$0xff] %v420
                  %v422 = vld [vmem:[%s338 + $0x1f8] sm:$0xff]
                  %423 = vst [vmem:[%s339 + $0x148] sm:$0xff] %v422
                  %v424 = vld [vmem:[%s338 + $0x200] sm:$0xff]
                  %425 = vst [vmem:[%s339 + $0x150] sm:$0xff] %v424
                  %v426 = vld [vmem:[%s338 + $0x208] sm:$0xff]
                  %427 = vst [vmem:[%s339 + $0x158] sm:$0xff] %v426
                  %v428 = vld [vmem:[%s338 + $0x2c0] sm:$0xff]
                  %429 = vst [vmem:[%s339 + $0x160] sm:$0xff] %v428
                  %v430 = vld [vmem:[%s338 + $0x2c8] sm:$0xff]
                  %431 = vst [vmem:[%s339 + $0x168] sm:$0xff] %v430
                  %v432 = vld [vmem:[%s338 + $0x2d0] sm:$0xff]
                  %433 = vst [vmem:[%s339 + $0x170] sm:$0xff] %v432
                  %v434 = vld [vmem:[%s338 + $0x2d8] sm:$0xff]
                  %435 = vst [vmem:[%s339 + $0x178] sm:$0xff] %v434
                  %v436 = vld [vmem:[%s338 + $0x2e0] sm:$0xff]
                  %437 = vst [vmem:[%s339 + $0x180] sm:$0xff] %v436
                  %v438 = vld [vmem:[%s338 + $0x2e8] sm:$0xff]
                  %439 = vst [vmem:[%s339 + $0x188] sm:$0xff] %v438
                  %v440 = vld [vmem:[%s338 + $0x2f0] sm:$0xff]
                  %441 = vst [vmem:[%s339 + $0x190] sm:$0xff] %v440
                  %v442 = vld [vmem:[%s338 + $0x2f8] sm:$0xff]
                  %443 = vst [vmem:[%s339 + $0x198] sm:$0xff] %v442
                  %v444 = vld [vmem:[%s338 + $0x300] sm:$0xff]
                  %445 = vst [vmem:[%s339 + $0x1a0] sm:$0xff] %v444
                  %v446 = vld [vmem:[%s338 + $0x308] sm:$0xff]
                  %447 = vst [vmem:[%s339 + $0x1a8] sm:$0xff] %v446
                  %v448 = vld [vmem:[%s338 + $0x310] sm:$0xff]
                  %449 = vst [vmem:[%s339 + $0x1b0] sm:$0xff] %v448
                  %v450 = vld [vmem:[%s338 + $0x318] sm:$0xff]
                  %451 = vst [vmem:[%s339 + $0x1b8] sm:$0xff] %v450
                  %v452 = vld [vmem:[%s338 + $0x320] sm:$0xff]
                  %453 = vst [vmem:[%s339 + $0x1c0] sm:$0xff] %v452
                  %v454 = vld [vmem:[%s338 + $0x328] sm:$0xff]
                  %455 = vst [vmem:[%s339 + $0x1c8] sm:$0xff] %v454
                  %v456 = vld [vmem:[%s338 + $0x330] sm:$0xff]
                  %457 = vst [vmem:[%s339 + $0x1d0] sm:$0xff] %v456
                  %v458 = vld [vmem:[%s338 + $0x338] sm:$0xff]
                  %459 = vst [vmem:[%s339 + $0x1d8] sm:$0xff] %v458
                  %v460 = vld [vmem:[%s338 + $0x340] sm:$0xff]
                  %461 = vst [vmem:[%s339 + $0x1e0] sm:$0xff] %v460
                  %v462 = vld [vmem:[%s338 + $0x348] sm:$0xff]
                  %463 = vst [vmem:[%s339 + $0x1e8] sm:$0xff] %v462
                  %v464 = vld [vmem:[%s338 + $0x350] sm:$0xff]
                  %465 = vst [vmem:[%s339 + $0x1f0] sm:$0xff] %v464
                  %v466 = vld [vmem:[%s338 + $0x358] sm:$0xff]
                  %467 = vst [vmem:[%s339 + $0x1f8] sm:$0xff] %v466
                  %v468 = vld [vmem:[%s338 + $0x360] sm:$0xff]
                  %469 = vst [vmem:[%s339 + $0x200] sm:$0xff] %v468
                  %v470 = vld [vmem:[%s338 + $0x368] sm:$0xff]
                  %471 = vst [vmem:[%s339 + $0x208] sm:$0xff] %v470
                  %v472 = vld [vmem:[%s338 + $0x420] sm:$0xff]
                  %473 = vst [vmem:[%s339 + $0x210] sm:$0xff] %v472
                  %v474 = vld [vmem:[%s338 + $0x428] sm:$0xff]
                  %475 = vst [vmem:[%s339 + $0x218] sm:$0xff] %v474
                  %v476 = vld [vmem:[%s338 + $0x430] sm:$0xff]
                  %477 = vst [vmem:[%s339 + $0x220] sm:$0xff] %v476
                  %v478 = vld [vmem:[%s338 + $0x438] sm:$0xff]
                  %479 = vst [vmem:[%s339 + $0x228] sm:$0xff] %v478
                  %v480 = vld [vmem:[%s338 + $0x440] sm:$0xff]
                  %481 = vst [vmem:[%s339 + $0x230] sm:$0xff] %v480
                  %v482 = vld [vmem:[%s338 + $0x448] sm:$0xff]
                  %483 = vst [vmem:[%s339 + $0x238] sm:$0xff] %v482
                  %v484 = vld [vmem:[%s338 + $0x450] sm:$0xff]
                  %485 = vst [vmem:[%s339 + $0x240] sm:$0xff] %v484
                  %v486 = vld [vmem:[%s338 + $0x458] sm:$0xff]
                  %487 = vst [vmem:[%s339 + $0x248] sm:$0xff] %v486
                  %v488 = vld [vmem:[%s338 + $0x460] sm:$0xff]
                  %489 = vst [vmem:[%s339 + $0x250] sm:$0xff] %v488
                  %v490 = vld [vmem:[%s338 + $0x468] sm:$0xff]
                  %491 = vst [vmem:[%s339 + $0x258] sm:$0xff] %v490
                  %v492 = vld [vmem:[%s338 + $0x470] sm:$0xff]
                  %493 = vst [vmem:[%s339 + $0x260] sm:$0xff] %v492
                  %v494 = vld [vmem:[%s338 + $0x478] sm:$0xff]
                  %495 = vst [vmem:[%s339 + $0x268] sm:$0xff] %v494
                  %v496 = vld [vmem:[%s338 + $0x480] sm:$0xff]
                  %497 = vst [vmem:[%s339 + $0x270] sm:$0xff] %v496
                  %v498 = vld [vmem:[%s338 + $0x488] sm:$0xff]
                  %499 = vst [vmem:[%s339 + $0x278] sm:$0xff] %v498
                  %v500 = vld [vmem:[%s338 + $0x490] sm:$0xff]
                  %501 = vst [vmem:[%s339 + $0x280] sm:$0xff] %v500
                  %v502 = vld [vmem:[%s338 + $0x498] sm:$0xff]
                  %503 = vst [vmem:[%s339 + $0x288] sm:$0xff] %v502
                  %v504 = vld [vmem:[%s338 + $0x4a0] sm:$0xff]
                  %505 = vst [vmem:[%s339 + $0x290] sm:$0xff] %v504
                  %v506 = vld [vmem:[%s338 + $0x4a8] sm:$0xff]
                  %507 = vst [vmem:[%s339 + $0x298] sm:$0xff] %v506
                  %v508 = vld [vmem:[%s338 + $0x4b0] sm:$0xff]
                  %509 = vst [vmem:[%s339 + $0x2a0] sm:$0xff] %v508
                  %v510 = vld [vmem:[%s338 + $0x4b8] sm:$0xff]
                  %511 = vst [vmem:[%s339 + $0x2a8] sm:$0xff] %v510
                  %v512 = vld [vmem:[%s338 + $0x4c0] sm:$0xff]
                  %513 = vst [vmem:[%s339 + $0x2b0] sm:$0xff] %v512
                  %v514 = vld [vmem:[%s338 + $0x4c8] sm:$0xff]
                  %515 = vst [vmem:[%s339 + $0x2b8] sm:$0xff] %v514
                $region56: #{simple_cnn_forward.2} parent=50 // loop_footer
                  %s337 = sadd.s32 1, %s333
                $region57: #{simple_cnn_forward.2} parent=50 // loop_footer_branch
                  %332 = sbr.rel target = $region53
                $region58: #{simple_cnn_forward.2} parent=50 // loop_exit
                  _
              $region51: #{simple_cnn_forward.2} parent=35 // pred_fallthru
                _
              // Predicated region
              $region59: #{simple_cnn_forward.2} parent=35 // pred_check
                _
              $region60: #{simple_cnn_forward.2} parent=35 // pred_check_branch
                %517 = sbr.rel target = $region62
              $region61: #{simple_cnn_forward.2} parent=35 // pred_region
                _
              $region62: #{simple_cnn_forward.2} parent=35 // pred_fallthru
                _
            $region36: #{simple_cnn_forward.2} parent=31 // pred_fallthru
              _
            // Predicated region
            $region37: #{simple_cnn_forward.2} parent=31 // pred_check
              _
            $region38: #{simple_cnn_forward.2} parent=31 // pred_check_branch
              %144 = sbr.rel target = $region40
            $region39: #{simple_cnn_forward.2} parent=31 // pred_region
              loop: start=0, step=1, limit=1
              $region41: #{simple_cnn_forward.2} parent=39 // loop_pre_header
                _
              $region42: #{simple_cnn_forward.2} parent=39 // loop_header
                %s147 = sphi 0, %s151
                %p148 = scmp.ge.s32.totalorder %s147, 1
                %s152 = sphi %s138, %s138
                %s153 = sphi %s134, %s134
              $region43: #{simple_cnn_forward.2} parent=39 // loop_header_branch
                %150 = sbr.rel (%p148) target = $region47
              $region44: #{simple_cnn_forward.2} parent=39 // loop_body
                %v154 = vld [vmem:[%s152] sm:$0xff]
                %155 = vst [vmem:[%s153] sm:$0xff] %v154
                %v156 = vld [vmem:[%s152 + $0x8] sm:$0xff]
                %157 = vst [vmem:[%s153 + $0x8] sm:$0xff] %v156
                %v158 = vld [vmem:[%s152 + $0x10] sm:$0xff]
                %159 = vst [vmem:[%s153 + $0x10] sm:$0xff] %v158
                %v160 = vld [vmem:[%s152 + $0x18] sm:$0xff]
                %161 = vst [vmem:[%s153 + $0x18] sm:$0xff] %v160
                %v162 = vld [vmem:[%s152 + $0x20] sm:$0xff]
                %163 = vst [vmem:[%s153 + $0x20] sm:$0xff] %v162
                %v164 = vld [vmem:[%s152 + $0x28] sm:$0xff]
                %165 = vst [vmem:[%s153 + $0x28] sm:$0xff] %v164
                %v166 = vld [vmem:[%s152 + $0x30] sm:$0xff]
                %167 = vst [vmem:[%s153 + $0x30] sm:$0xff] %v166
                %v168 = vld [vmem:[%s152 + $0x38] sm:$0xff]
                %169 = vst [vmem:[%s153 + $0x38] sm:$0xff] %v168
                %v170 = vld [vmem:[%s152 + $0x40] sm:$0xff]
                %171 = vst [vmem:[%s153 + $0x40] sm:$0xff] %v170
                %v172 = vld [vmem:[%s152 + $0x48] sm:$0xff]
                %173 = vst [vmem:[%s153 + $0x48] sm:$0xff] %v172
                %v174 = vld [vmem:[%s152 + $0x50] sm:$0xff]
                %175 = vst [vmem:[%s153 + $0x50] sm:$0xff] %v174
                %v176 = vld [vmem:[%s152 + $0x58] sm:$0xff]
                %177 = vst [vmem:[%s153 + $0x58] sm:$0xff] %v176
                %v178 = vld [vmem:[%s152 + $0x60] sm:$0xff]
                %179 = vst [vmem:[%s153 + $0x60] sm:$0xff] %v178
                %v180 = vld [vmem:[%s152 + $0x68] sm:$0xff]
                %181 = vst [vmem:[%s153 + $0x68] sm:$0xff] %v180
                %v182 = vld [vmem:[%s152 + $0x70] sm:$0xff]
                %183 = vst [vmem:[%s153 + $0x70] sm:$0xff] %v182
                %v184 = vld [vmem:[%s152 + $0x78] sm:$0xff]
                %185 = vst [vmem:[%s153 + $0x78] sm:$0xff] %v184
                %v186 = vld [vmem:[%s152 + $0x80] sm:$0xff]
                %187 = vst [vmem:[%s153 + $0x80] sm:$0xff] %v186
                %v188 = vld [vmem:[%s152 + $0x88] sm:$0xff]
                %189 = vst [vmem:[%s153 + $0x88] sm:$0xff] %v188
                %v190 = vld [vmem:[%s152 + $0x90] sm:$0xff]
                %191 = vst [vmem:[%s153 + $0x90] sm:$0xff] %v190
                %v192 = vld [vmem:[%s152 + $0x98] sm:$0xff]
                %193 = vst [vmem:[%s153 + $0x98] sm:$0xff] %v192
                %v194 = vld [vmem:[%s152 + $0xa0] sm:$0xff]
                %195 = vst [vmem:[%s153 + $0xa0] sm:$0xff] %v194
                %v196 = vld [vmem:[%s152 + $0xa8] sm:$0xff]
                %197 = vst [vmem:[%s153 + $0xa8] sm:$0xff] %v196
                %v198 = vld [vmem:[%s152 + $0x160] sm:$0xff]
                %199 = vst [vmem:[%s153 + $0xb0] sm:$0xff] %v198
                %v200 = vld [vmem:[%s152 + $0x168] sm:$0xff]
                %201 = vst [vmem:[%s153 + $0xb8] sm:$0xff] %v200
                %v202 = vld [vmem:[%s152 + $0x170] sm:$0xff]
                %203 = vst [vmem:[%s153 + $0xc0] sm:$0xff] %v202
                %v204 = vld [vmem:[%s152 + $0x178] sm:$0xff]
                %205 = vst [vmem:[%s153 + $0xc8] sm:$0xff] %v204
                %v206 = vld [vmem:[%s152 + $0x180] sm:$0xff]
                %207 = vst [vmem:[%s153 + $0xd0] sm:$0xff] %v206
                %v208 = vld [vmem:[%s152 + $0x188] sm:$0xff]
                %209 = vst [vmem:[%s153 + $0xd8] sm:$0xff] %v208
                %v210 = vld [vmem:[%s152 + $0x190] sm:$0xff]
                %211 = vst [vmem:[%s153 + $0xe0] sm:$0xff] %v210
                %v212 = vld [vmem:[%s152 + $0x198] sm:$0xff]
                %213 = vst [vmem:[%s153 + $0xe8] sm:$0xff] %v212
                %v214 = vld [vmem:[%s152 + $0x1a0] sm:$0xff]
                %215 = vst [vmem:[%s153 + $0xf0] sm:$0xff] %v214
                %v216 = vld [vmem:[%s152 + $0x1a8] sm:$0xff]
                %217 = vst [vmem:[%s153 + $0xf8] sm:$0xff] %v216
                %v218 = vld [vmem:[%s152 + $0x1b0] sm:$0xff]
                %219 = vst [vmem:[%s153 + $0x100] sm:$0xff] %v218
                %v220 = vld [vmem:[%s152 + $0x1b8] sm:$0xff]
                %221 = vst [vmem:[%s153 + $0x108] sm:$0xff] %v220
                %v222 = vld [vmem:[%s152 + $0x1c0] sm:$0xff]
                %223 = vst [vmem:[%s153 + $0x110] sm:$0xff] %v222
                %v224 = vld [vmem:[%s152 + $0x1c8] sm:$0xff]
                %225 = vst [vmem:[%s153 + $0x118] sm:$0xff] %v224
                %v226 = vld [vmem:[%s152 + $0x1d0] sm:$0xff]
                %227 = vst [vmem:[%s153 + $0x120] sm:$0xff] %v226
                %v228 = vld [vmem:[%s152 + $0x1d8] sm:$0xff]
                %229 = vst [vmem:[%s153 + $0x128] sm:$0xff] %v228
                %v230 = vld [vmem:[%s152 + $0x1e0] sm:$0xff]
                %231 = vst [vmem:[%s153 + $0x130] sm:$0xff] %v230
                %v232 = vld [vmem:[%s152 + $0x1e8] sm:$0xff]
                %233 = vst [vmem:[%s153 + $0x138] sm:$0xff] %v232
                %v234 = vld [vmem:[%s152 + $0x1f0] sm:$0xff]
                %235 = vst [vmem:[%s153 + $0x140] sm:$0xff] %v234
                %v236 = vld [vmem:[%s152 + $0x1f8] sm:$0xff]
                %237 = vst [vmem:[%s153 + $0x148] sm:$0xff] %v236
                %v238 = vld [vmem:[%s152 + $0x200] sm:$0xff]
                %239 = vst [vmem:[%s153 + $0x150] sm:$0xff] %v238
                %v240 = vld [vmem:[%s152 + $0x208] sm:$0xff]
                %241 = vst [vmem:[%s153 + $0x158] sm:$0xff] %v240
                %v242 = vld [vmem:[%s152 + $0x2c0] sm:$0xff]
                %243 = vst [vmem:[%s153 + $0x160] sm:$0xff] %v242
                %v244 = vld [vmem:[%s152 + $0x2c8] sm:$0xff]
                %245 = vst [vmem:[%s153 + $0x168] sm:$0xff] %v244
                %v246 = vld [vmem:[%s152 + $0x2d0] sm:$0xff]
                %247 = vst [vmem:[%s153 + $0x170] sm:$0xff] %v246
                %v248 = vld [vmem:[%s152 + $0x2d8] sm:$0xff]
                %249 = vst [vmem:[%s153 + $0x178] sm:$0xff] %v248
                %v250 = vld [vmem:[%s152 + $0x2e0] sm:$0xff]
                %251 = vst [vmem:[%s153 + $0x180] sm:$0xff] %v250
                %v252 = vld [vmem:[%s152 + $0x2e8] sm:$0xff]
                %253 = vst [vmem:[%s153 + $0x188] sm:$0xff] %v252
                %v254 = vld [vmem:[%s152 + $0x2f0] sm:$0xff]
                %255 = vst [vmem:[%s153 + $0x190] sm:$0xff] %v254
                %v256 = vld [vmem:[%s152 + $0x2f8] sm:$0xff]
                %257 = vst [vmem:[%s153 + $0x198] sm:$0xff] %v256
                %v258 = vld [vmem:[%s152 + $0x300] sm:$0xff]
                %259 = vst [vmem:[%s153 + $0x1a0] sm:$0xff] %v258
                %v260 = vld [vmem:[%s152 + $0x308] sm:$0xff]
                %261 = vst [vmem:[%s153 + $0x1a8] sm:$0xff] %v260
                %v262 = vld [vmem:[%s152 + $0x310] sm:$0xff]
                %263 = vst [vmem:[%s153 + $0x1b0] sm:$0xff] %v262
                %v264 = vld [vmem:[%s152 + $0x318] sm:$0xff]
                %265 = vst [vmem:[%s153 + $0x1b8] sm:$0xff] %v264
                %v266 = vld [vmem:[%s152 + $0x320] sm:$0xff]
                %267 = vst [vmem:[%s153 + $0x1c0] sm:$0xff] %v266
                %v268 = vld [vmem:[%s152 + $0x328] sm:$0xff]
                %269 = vst [vmem:[%s153 + $0x1c8] sm:$0xff] %v268
                %v270 = vld [vmem:[%s152 + $0x330] sm:$0xff]
                %271 = vst [vmem:[%s153 + $0x1d0] sm:$0xff] %v270
                %v272 = vld [vmem:[%s152 + $0x338] sm:$0xff]
                %273 = vst [vmem:[%s153 + $0x1d8] sm:$0xff] %v272
                %v274 = vld [vmem:[%s152 + $0x340] sm:$0xff]
                %275 = vst [vmem:[%s153 + $0x1e0] sm:$0xff] %v274
                %v276 = vld [vmem:[%s152 + $0x348] sm:$0xff]
                %277 = vst [vmem:[%s153 + $0x1e8] sm:$0xff] %v276
                %v278 = vld [vmem:[%s152 + $0x350] sm:$0xff]
                %279 = vst [vmem:[%s153 + $0x1f0] sm:$0xff] %v278
                %v280 = vld [vmem:[%s152 + $0x358] sm:$0xff]
                %281 = vst [vmem:[%s153 + $0x1f8] sm:$0xff] %v280
                %v282 = vld [vmem:[%s152 + $0x360] sm:$0xff]
                %283 = vst [vmem:[%s153 + $0x200] sm:$0xff] %v282
                %v284 = vld [vmem:[%s152 + $0x368] sm:$0xff]
                %285 = vst [vmem:[%s153 + $0x208] sm:$0xff] %v284
                %v286 = vld [vmem:[%s152 + $0x420] sm:$0xff]
                %287 = vst [vmem:[%s153 + $0x210] sm:$0xff] %v286
                %v288 = vld [vmem:[%s152 + $0x428] sm:$0xff]
                %289 = vst [vmem:[%s153 + $0x218] sm:$0xff] %v288
                %v290 = vld [vmem:[%s152 + $0x430] sm:$0xff]
                %291 = vst [vmem:[%s153 + $0x220] sm:$0xff] %v290
                %v292 = vld [vmem:[%s152 + $0x438] sm:$0xff]
                %293 = vst [vmem:[%s153 + $0x228] sm:$0xff] %v292
                %v294 = vld [vmem:[%s152 + $0x440] sm:$0xff]
                %295 = vst [vmem:[%s153 + $0x230] sm:$0xff] %v294
                %v296 = vld [vmem:[%s152 + $0x448] sm:$0xff]
                %297 = vst [vmem:[%s153 + $0x238] sm:$0xff] %v296
                %v298 = vld [vmem:[%s152 + $0x450] sm:$0xff]
                %299 = vst [vmem:[%s153 + $0x240] sm:$0xff] %v298
                %v300 = vld [vmem:[%s152 + $0x458] sm:$0xff]
                %301 = vst [vmem:[%s153 + $0x248] sm:$0xff] %v300
                %v302 = vld [vmem:[%s152 + $0x460] sm:$0xff]
                %303 = vst [vmem:[%s153 + $0x250] sm:$0xff] %v302
                %v304 = vld [vmem:[%s152 + $0x468] sm:$0xff]
                %305 = vst [vmem:[%s153 + $0x258] sm:$0xff] %v304
                %v306 = vld [vmem:[%s152 + $0x470] sm:$0xff]
                %307 = vst [vmem:[%s153 + $0x260] sm:$0xff] %v306
                %v308 = vld [vmem:[%s152 + $0x478] sm:$0xff]
                %309 = vst [vmem:[%s153 + $0x268] sm:$0xff] %v308
                %v310 = vld [vmem:[%s152 + $0x480] sm:$0xff]
                %311 = vst [vmem:[%s153 + $0x270] sm:$0xff] %v310
                %v312 = vld [vmem:[%s152 + $0x488] sm:$0xff]
                %313 = vst [vmem:[%s153 + $0x278] sm:$0xff] %v312
                %v314 = vld [vmem:[%s152 + $0x490] sm:$0xff]
                %315 = vst [vmem:[%s153 + $0x280] sm:$0xff] %v314
                %v316 = vld [vmem:[%s152 + $0x498] sm:$0xff]
                %317 = vst [vmem:[%s153 + $0x288] sm:$0xff] %v316
                %v318 = vld [vmem:[%s152 + $0x4a0] sm:$0xff]
                %319 = vst [vmem:[%s153 + $0x290] sm:$0xff] %v318
                %v320 = vld [vmem:[%s152 + $0x4a8] sm:$0xff]
                %321 = vst [vmem:[%s153 + $0x298] sm:$0xff] %v320
                %v322 = vld [vmem:[%s152 + $0x4b0] sm:$0xff]
                %323 = vst [vmem:[%s153 + $0x2a0] sm:$0xff] %v322
                %v324 = vld [vmem:[%s152 + $0x4b8] sm:$0xff]
                %325 = vst [vmem:[%s153 + $0x2a8] sm:$0xff] %v324
                %v326 = vld [vmem:[%s152 + $0x4c0] sm:$0xff]
                %327 = vst [vmem:[%s153 + $0x2b0] sm:$0xff] %v326
                %v328 = vld [vmem:[%s152 + $0x4c8] sm:$0xff]
                %329 = vst [vmem:[%s153 + $0x2b8] sm:$0xff] %v328
              $region45: #{simple_cnn_forward.2} parent=39 // loop_footer
                %s151 = sadd.s32 1, %s147
              $region46: #{simple_cnn_forward.2} parent=39 // loop_footer_branch
                %146 = sbr.rel target = $region42
              $region47: #{simple_cnn_forward.2} parent=39 // loop_exit
                _
            $region40: #{simple_cnn_forward.2} parent=31 // pred_fallthru
              _
          $region32: #{simple_cnn_forward.2} parent=27 // pred_fallthru
            _
          %518 = vnop
        $region28: #{simple_cnn_forward.2} parent=23 // pred_fallthru
          _
      $region24: #{simple_cnn_forward.2} parent=5 // pred_fallthru
        _
      %p519 = scmp.le.s32.totalorder 1, %s9
      %p520 = scmp.lt.s32.totalorder %s9, 3
      %p521 = pnand %p519, %p520
      %p522 = pneg %p521
      // Predicated region
      $region63: #{simple_cnn_forward.2} parent=5 // pred_check
        _
      $region64: #{simple_cnn_forward.2} parent=5 // pred_check_branch
        %524 = sbr.rel (%p521) target = $region66
      $region65: #{simple_cnn_forward.2} parent=5 // pred_region
        %s525 = ssub.s32 %s9, 1
        %s526 = sand.u32 %s22, 1
        %s527 = sand.u32 %s22, 1
        %s528 = smul.addr %s527, 704
        %s529 = scalar_lea.vmem [#allocation2], %s528
        // Predicated region
        $region67: #{simple_cnn_forward.2} parent=65 // pred_check
          %p530 = pneg %p35
        $region68: #{simple_cnn_forward.2} parent=65 // pred_check_branch
          %532 = sbr.rel (%p530) target = $region70
        $region69: #{simple_cnn_forward.2} parent=65 // pred_region
          _
        $region70: #{simple_cnn_forward.2} parent=65 // pred_fallthru
          _
        %s533 = sand.u32 %s22, 1
        %s534 = sand.u32 %s22, 1
        %s535 = smul.addr %s534, 704
        %s536 = scalar_lea.vmem [#allocation2], %s535
        %p537 = pneg %p35
        %p538 = pneg %p32
        %p539 = pneg %p56
        %p540 = pneg %p53
        %p541 = pneg %p77
        %p542 = pneg %p74
        %p543 = pneg %p103
        %p544 = pneg %p100
        %s545 = smul.u32 22, %s14
        %p546 = scmp.lt.s32.totalorder %s545, 43
        %s547 = scalar_select %p546, %s545, 43
        %s548 = smul.addr %s547, 4
        %s549 = scalar_lea.vmem %s3, %s548
        %s550 = smul.u32 22, %s14
        %s551 = smul.u32 22, %s14
        %p552 = scmp.lt.s32.totalorder %s551, 43
        %s553 = scalar_select %p552, %s551, 43
        %s554 = smul.addr %s553, 4
        %s555 = scalar_lea.vmem %s3, %s554
        %s556 = smul.u32 22, %s14
        %v558 = vld [vmem:[%s529] sm:$0xff]
        %v559 = vld [vmem:[%s529 + $0x8] sm:$0xff]
        %v560 = vld [vmem:[%s529 + $0x10] sm:$0xff]
        %v561 = vld [vmem:[%s529 + $0x18] sm:$0xff]
        %v562 = vld [vmem:[%s529 + $0x20] sm:$0xff]
        %v563 = vld [vmem:[%s529 + $0x28] sm:$0xff]
        %v564 = vld [vmem:[%s529 + $0x30] sm:$0xff]
        %v565 = vld [vmem:[%s529 + $0x38] sm:$0xff]
        %v566 = vld [vmem:[%s529 + $0x40] sm:$0xff]
        %v567 = vld [vmem:[%s529 + $0x48] sm:$0xff]
        %v568 = vld [vmem:[%s529 + $0x50] sm:$0xff]
        %v569 = vld [vmem:[%s529 + $0x58] sm:$0xff]
        %v570 = vld [vmem:[%s529 + $0x60] sm:$0xff]
        %v571 = vld [vmem:[%s529 + $0x68] sm:$0xff]
        %v572 = vld [vmem:[%s529 + $0x70] sm:$0xff]
        %v573 = vld [vmem:[%s529 + $0x78] sm:$0xff]
        %v574 = vld [vmem:[%s529 + $0x80] sm:$0xff]
        %v575 = vld [vmem:[%s529 + $0x88] sm:$0xff]
        %v576 = vld [vmem:[%s529 + $0x90] sm:$0xff]
        %v577 = vld [vmem:[%s529 + $0x98] sm:$0xff]
        %v578 = vld [vmem:[%s529 + $0xa0] sm:$0xff]
        %v579 = vld [vmem:[%s529 + $0xa8] sm:$0xff]
        %v580 = vld [vmem:[%s529 + $0xb0] sm:$0xff]
        %v581 = vld [vmem:[%s529 + $0xb8] sm:$0xff]
        %v582 = vld [vmem:[%s529 + $0xc0] sm:$0xff]
        %v583 = vld [vmem:[%s529 + $0xc8] sm:$0xff]
        %v584 = vld [vmem:[%s529 + $0xd0] sm:$0xff]
        %v585 = vld [vmem:[%s529 + $0xd8] sm:$0xff]
        %v586 = vld [vmem:[%s529 + $0xe0] sm:$0xff]
        %v587 = vld [vmem:[%s529 + $0xe8] sm:$0xff]
        %v588 = vld [vmem:[%s529 + $0xf0] sm:$0xff]
        %v589 = vld [vmem:[%s529 + $0xf8] sm:$0xff]
        %v590 = vld [vmem:[%s529 + $0x100] sm:$0xff]
        %v591 = vld [vmem:[%s529 + $0x108] sm:$0xff]
        %v592 = vld [vmem:[%s529 + $0x110] sm:$0xff]
        %v593 = vld [vmem:[%s529 + $0x118] sm:$0xff]
        %v594 = vld [vmem:[%s529 + $0x120] sm:$0xff]
        %v595 = vld [vmem:[%s529 + $0x128] sm:$0xff]
        %v596 = vld [vmem:[%s529 + $0x130] sm:$0xff]
        %v597 = vld [vmem:[%s529 + $0x138] sm:$0xff]
        %v598 = vld [vmem:[%s529 + $0x140] sm:$0xff]
        %v599 = vld [vmem:[%s529 + $0x148] sm:$0xff]
        %v600 = vld [vmem:[%s529 + $0x150] sm:$0xff]
        %v601 = vld [vmem:[%s529 + $0x158] sm:$0xff]
        %v602 = vld [vmem:[%s529 + $0x160] sm:$0xff]
        %v603 = vld [vmem:[%s529 + $0x168] sm:$0xff]
        %v604 = vld [vmem:[%s529 + $0x170] sm:$0xff]
        %v605 = vld [vmem:[%s529 + $0x178] sm:$0xff]
        %v606 = vld [vmem:[%s529 + $0x180] sm:$0xff]
        %v607 = vld [vmem:[%s529 + $0x188] sm:$0xff]
        %v608 = vld [vmem:[%s529 + $0x190] sm:$0xff]
        %v609 = vld [vmem:[%s529 + $0x198] sm:$0xff]
        %v610 = vld [vmem:[%s529 + $0x1a0] sm:$0xff]
        %v611 = vld [vmem:[%s529 + $0x1a8] sm:$0xff]
        %v612 = vld [vmem:[%s529 + $0x1b0] sm:$0xff]
        %v613 = vld [vmem:[%s529 + $0x1b8] sm:$0xff]
        %v614 = vld [vmem:[%s529 + $0x1c0] sm:$0xff]
        %v615 = vld [vmem:[%s529 + $0x1c8] sm:$0xff]
        %v616 = vld [vmem:[%s529 + $0x1d0] sm:$0xff]
        %v617 = vld [vmem:[%s529 + $0x1d8] sm:$0xff]
        %v618 = vld [vmem:[%s529 + $0x1e0] sm:$0xff]
        %v619 = vld [vmem:[%s529 + $0x1e8] sm:$0xff]
        %v620 = vld [vmem:[%s529 + $0x1f0] sm:$0xff]
        %v621 = vld [vmem:[%s529 + $0x1f8] sm:$0xff]
        %v622 = vld [vmem:[%s529 + $0x200] sm:$0xff]
        %v623 = vld [vmem:[%s529 + $0x208] sm:$0xff]
        %v624 = vld [vmem:[%s529 + $0x210] sm:$0xff]
        %v625 = vld [vmem:[%s529 + $0x218] sm:$0xff]
        %v626 = vld [vmem:[%s529 + $0x220] sm:$0xff]
        %v627 = vld [vmem:[%s529 + $0x228] sm:$0xff]
        %v628 = vld [vmem:[%s529 + $0x230] sm:$0xff]
        %v629 = vld [vmem:[%s529 + $0x238] sm:$0xff]
        %v630 = vld [vmem:[%s529 + $0x240] sm:$0xff]
        %v631 = vld [vmem:[%s529 + $0x248] sm:$0xff]
        %v632 = vld [vmem:[%s529 + $0x250] sm:$0xff]
        %v633 = vld [vmem:[%s529 + $0x258] sm:$0xff]
        %v634 = vld [vmem:[%s529 + $0x260] sm:$0xff]
        %v635 = vld [vmem:[%s529 + $0x268] sm:$0xff]
        %v636 = vld [vmem:[%s529 + $0x270] sm:$0xff]
        %v637 = vld [vmem:[%s529 + $0x278] sm:$0xff]
        %v638 = vld [vmem:[%s529 + $0x280] sm:$0xff]
        %v639 = vld [vmem:[%s529 + $0x288] sm:$0xff]
        %v640 = vld [vmem:[%s529 + $0x290] sm:$0xff]
        %v641 = vld [vmem:[%s529 + $0x298] sm:$0xff]
        %v642 = vld [vmem:[%s529 + $0x2a0] sm:$0xff]
        %v643 = vld [vmem:[%s529 + $0x2a8] sm:$0xff]
        %v644 = vld [vmem:[%s529 + $0x2b0] sm:$0xff]
        %v645 = vld [vmem:[%s529 + $0x2b8] sm:$0xff]
        %v646 = vld [vmem:[%s1] sm:$0xf]
        %v647 = vld [vmem:[%s1 + $0x4] sm:$0xf]
        %v648 = vld [vmem:[%s1 + $0x8] sm:$0xf]
        %v649 = vld [vmem:[%s1 + $0xc] sm:$0xf]
        %v650 = vld [vmem:[%s1 + $0x10] sm:$0xf]
        %v651 = vld [vmem:[%s1 + $0x14] sm:$0xf]
        %v652 = vld [vmem:[%s1 + $0x18] sm:$0xf]
        %v653 = vld [vmem:[%s1 + $0x1c] sm:$0xf]
        %v654 = vld [vmem:[%s1 + $0x20] sm:$0xf]
        %v655 = vld [vmem:[%s1 + $0x24] sm:$0xf]
        %v656 = vld [vmem:[%s1 + $0x28] sm:$0xf]
        %v657 = vld [vmem:[%s1 + $0x2c] sm:$0xf]
        %v658 = vld [vmem:[%s1 + $0x30] sm:$0xf]
        %v659 = vld [vmem:[%s1 + $0x34] sm:$0xf]
        %v660 = vld [vmem:[%s1 + $0x38] sm:$0xf]
        %v661 = vld [vmem:[%s1 + $0x3c] sm:$0xf]
        %v662 = vld [vmem:[%s1 + $0x40] sm:$0xf]
        %v663 = vld [vmem:[%s1 + $0x44] sm:$0xf]
        %v664 = vld [vmem:[%s1 + $0x48] sm:$0x3]
        %v753 = vunpack.c.l.b16 %v558
        %v754 = vunpack.c.h.b16 %v558
        %v755 = vunpack.c.l.b16 %v559
        %v756 = vunpack.c.h.b16 %v559
        %v757 = vunpack.c.l.b16 %v560
        %v758 = vunpack.c.h.b16 %v560
        %v759 = vunpack.c.l.b16 %v561
        %v760 = vunpack.c.h.b16 %v561
        %v761 = vunpack.c.l.b16 %v562
        %v762 = vunpack.c.h.b16 %v562
        %v763 = vunpack.c.l.b16 %v563
        %v764 = vunpack.c.h.b16 %v563
        %v765 = vunpack.c.l.b16 %v564
        %v766 = vunpack.c.h.b16 %v564
        %v767 = vunpack.c.l.b16 %v565
        %v768 = vunpack.c.h.b16 %v565
        %v769 = vunpack.c.l.b16 %v566
        %v770 = vunpack.c.h.b16 %v566
        %v771 = vunpack.c.l.b16 %v567
        %v772 = vunpack.c.h.b16 %v567
        %v773 = vunpack.c.l.b16 %v568
        %v774 = vunpack.c.h.b16 %v568
        %v775 = vunpack.c.l.b16 %v569
        %v776 = vunpack.c.h.b16 %v569
        %v777 = vunpack.c.l.b16 %v570
        %v778 = vunpack.c.h.b16 %v570
        %v779 = vunpack.c.l.b16 %v571
        %v780 = vunpack.c.h.b16 %v571
        %v781 = vunpack.c.l.b16 %v572
        %v782 = vunpack.c.h.b16 %v572
        %v783 = vunpack.c.l.b16 %v573
        %v784 = vunpack.c.h.b16 %v573
        %v785 = vunpack.c.l.b16 %v574
        %v786 = vunpack.c.h.b16 %v574
        %v787 = vunpack.c.l.b16 %v575
        %v788 = vunpack.c.h.b16 %v575
        %v789 = vunpack.c.l.b16 %v576
        %v790 = vunpack.c.h.b16 %v576
        %v791 = vunpack.c.l.b16 %v577
        %v792 = vunpack.c.h.b16 %v577
        %v793 = vunpack.c.l.b16 %v578
        %v794 = vunpack.c.h.b16 %v578
        %v795 = vunpack.c.l.b16 %v579
        %v796 = vunpack.c.h.b16 %v579
        %v797 = vunpack.c.l.b16 %v580
        %v798 = vunpack.c.h.b16 %v580
        %v799 = vunpack.c.l.b16 %v581
        %v800 = vunpack.c.h.b16 %v581
        %v801 = vunpack.c.l.b16 %v582
        %v802 = vunpack.c.h.b16 %v582
        %v803 = vunpack.c.l.b16 %v583
        %v804 = vunpack.c.h.b16 %v583
        %v805 = vunpack.c.l.b16 %v584
        %v806 = vunpack.c.h.b16 %v584
        %v807 = vunpack.c.l.b16 %v585
        %v808 = vunpack.c.h.b16 %v585
        %v809 = vunpack.c.l.b16 %v586
        %v810 = vunpack.c.h.b16 %v586
        %v811 = vunpack.c.l.b16 %v587
        %v812 = vunpack.c.h.b16 %v587
        %v813 = vunpack.c.l.b16 %v588
        %v814 = vunpack.c.h.b16 %v588
        %v815 = vunpack.c.l.b16 %v589
        %v816 = vunpack.c.h.b16 %v589
        %v817 = vunpack.c.l.b16 %v590
        %v818 = vunpack.c.h.b16 %v590
        %v819 = vunpack.c.l.b16 %v591
        %v820 = vunpack.c.h.b16 %v591
        %v821 = vunpack.c.l.b16 %v592
        %v822 = vunpack.c.h.b16 %v592
        %v823 = vunpack.c.l.b16 %v593
        %v824 = vunpack.c.h.b16 %v593
        %v825 = vunpack.c.l.b16 %v594
        %v826 = vunpack.c.h.b16 %v594
        %v827 = vunpack.c.l.b16 %v595
        %v828 = vunpack.c.h.b16 %v595
        %v829 = vunpack.c.l.b16 %v596
        %v830 = vunpack.c.h.b16 %v596
        %v831 = vunpack.c.l.b16 %v597
        %v832 = vunpack.c.h.b16 %v597
        %v833 = vunpack.c.l.b16 %v598
        %v834 = vunpack.c.h.b16 %v598
        %v835 = vunpack.c.l.b16 %v599
        %v836 = vunpack.c.h.b16 %v599
        %v837 = vunpack.c.l.b16 %v600
        %v838 = vunpack.c.h.b16 %v600
        %v839 = vunpack.c.l.b16 %v601
        %v840 = vunpack.c.h.b16 %v601
        %v841 = vunpack.c.l.b16 %v602
        %v842 = vunpack.c.h.b16 %v602
        %v843 = vunpack.c.l.b16 %v603
        %v844 = vunpack.c.h.b16 %v603
        %v845 = vunpack.c.l.b16 %v604
        %v846 = vunpack.c.h.b16 %v604
        %v847 = vunpack.c.l.b16 %v605
        %v848 = vunpack.c.h.b16 %v605
        %v849 = vunpack.c.l.b16 %v606
        %v850 = vunpack.c.h.b16 %v606
        %v851 = vunpack.c.l.b16 %v607
        %v852 = vunpack.c.h.b16 %v607
        %v853 = vunpack.c.l.b16 %v608
        %v854 = vunpack.c.h.b16 %v608
        %v855 = vunpack.c.l.b16 %v609
        %v856 = vunpack.c.h.b16 %v609
        %v857 = vunpack.c.l.b16 %v610
        %v858 = vunpack.c.h.b16 %v610
        %v859 = vunpack.c.l.b16 %v611
        %v860 = vunpack.c.h.b16 %v611
        %v861 = vunpack.c.l.b16 %v612
        %v862 = vunpack.c.h.b16 %v612
        %v863 = vunpack.c.l.b16 %v613
        %v864 = vunpack.c.h.b16 %v613
        %v865 = vunpack.c.l.b16 %v614
        %v866 = vunpack.c.h.b16 %v614
        %v867 = vunpack.c.l.b16 %v615
        %v868 = vunpack.c.h.b16 %v615
        %v869 = vunpack.c.l.b16 %v616
        %v870 = vunpack.c.h.b16 %v616
        %v871 = vunpack.c.l.b16 %v617
        %v872 = vunpack.c.h.b16 %v617
        %v873 = vunpack.c.l.b16 %v618
        %v874 = vunpack.c.h.b16 %v618
        %v875 = vunpack.c.l.b16 %v619
        %v876 = vunpack.c.h.b16 %v619
        %v877 = vunpack.c.l.b16 %v620
        %v878 = vunpack.c.h.b16 %v620
        %v879 = vunpack.c.l.b16 %v621
        %v880 = vunpack.c.h.b16 %v621
        %v881 = vunpack.c.l.b16 %v622
        %v882 = vunpack.c.h.b16 %v622
        %v883 = vunpack.c.l.b16 %v623
        %v884 = vunpack.c.h.b16 %v623
        %v885 = vunpack.c.l.b16 %v624
        %v886 = vunpack.c.h.b16 %v624
        %v887 = vunpack.c.l.b16 %v625
        %v888 = vunpack.c.h.b16 %v625
        %v889 = vunpack.c.l.b16 %v626
        %v890 = vunpack.c.h.b16 %v626
        %v891 = vunpack.c.l.b16 %v627
        %v892 = vunpack.c.h.b16 %v627
        %v893 = vunpack.c.l.b16 %v628
        %v894 = vunpack.c.h.b16 %v628
        %v895 = vunpack.c.l.b16 %v629
        %v896 = vunpack.c.h.b16 %v629
        %v897 = vunpack.c.l.b16 %v630
        %v898 = vunpack.c.h.b16 %v630
        %v899 = vunpack.c.l.b16 %v631
        %v900 = vunpack.c.h.b16 %v631
        %v901 = vunpack.c.l.b16 %v632
        %v902 = vunpack.c.h.b16 %v632
        %v903 = vunpack.c.l.b16 %v633
        %v904 = vunpack.c.h.b16 %v633
        %v905 = vunpack.c.l.b16 %v634
        %v906 = vunpack.c.h.b16 %v634
        %v907 = vunpack.c.l.b16 %v635
        %v908 = vunpack.c.h.b16 %v635
        %v909 = vunpack.c.l.b16 %v636
        %v910 = vunpack.c.h.b16 %v636
        %v911 = vunpack.c.l.b16 %v637
        %v912 = vunpack.c.h.b16 %v637
        %v913 = vunpack.c.l.b16 %v638
        %v914 = vunpack.c.h.b16 %v638
        %v915 = vunpack.c.l.b16 %v639
        %v916 = vunpack.c.h.b16 %v639
        %v917 = vunpack.c.l.b16 %v640
        %v918 = vunpack.c.h.b16 %v640
        %v919 = vunpack.c.l.b16 %v641
        %v920 = vunpack.c.h.b16 %v641
        %v921 = vunpack.c.l.b16 %v642
        %v922 = vunpack.c.h.b16 %v642
        %v923 = vunpack.c.l.b16 %v643
        %v924 = vunpack.c.h.b16 %v643
        %v925 = vunpack.c.l.b16 %v644
        %v926 = vunpack.c.h.b16 %v644
        %v927 = vunpack.c.l.b16 %v645
        %v928 = vunpack.c.h.b16 %v645
        %v929 = vpack.c.b16 %v755, %v753
        %v930 = vpack.c.b16 %v756, %v754
        %v931 = vpack.c.b16 %v759, %v757
        %v932 = vpack.c.b16 %v760, %v758
        %v933 = vpack.c.b16 %v763, %v761
        %v934 = vpack.c.b16 %v764, %v762
        %v935 = vpack.c.b16 %v767, %v765
        %v936 = vpack.c.b16 %v768, %v766
        %v937 = vpack.c.b16 %v771, %v769
        %v938 = vpack.c.b16 %v772, %v770
        %v939 = vpack.c.b16 %v775, %v773
        %v940 = vpack.c.b16 %v776, %v774
        %v941 = vpack.c.b16 %v779, %v777
        %v942 = vpack.c.b16 %v780, %v778
        %v943 = vpack.c.b16 %v783, %v781
        %v944 = vpack.c.b16 %v784, %v782
        %v945 = vpack.c.b16 %v787, %v785
        %v946 = vpack.c.b16 %v788, %v786
        %v947 = vpack.c.b16 %v791, %v789
        %v948 = vpack.c.b16 %v792, %v790
        %v949 = vpack.c.b16 %v795, %v793
        %v950 = vpack.c.b16 %v796, %v794
        %v951 = vpack.c.b16 %v799, %v797
        %v952 = vpack.c.b16 %v800, %v798
        %v953 = vpack.c.b16 %v803, %v801
        %v954 = vpack.c.b16 %v804, %v802
        %v955 = vpack.c.b16 %v807, %v805
        %v956 = vpack.c.b16 %v808, %v806
        %v957 = vpack.c.b16 %v811, %v809
        %v958 = vpack.c.b16 %v812, %v810
        %v959 = vpack.c.b16 %v815, %v813
        %v960 = vpack.c.b16 %v816, %v814
        %v961 = vpack.c.b16 %v819, %v817
        %v962 = vpack.c.b16 %v820, %v818
        %v963 = vpack.c.b16 %v823, %v821
        %v964 = vpack.c.b16 %v824, %v822
        %v965 = vpack.c.b16 %v827, %v825
        %v966 = vpack.c.b16 %v828, %v826
        %v967 = vpack.c.b16 %v831, %v829
        %v968 = vpack.c.b16 %v832, %v830
        %v969 = vpack.c.b16 %v835, %v833
        %v970 = vpack.c.b16 %v836, %v834
        %v971 = vpack.c.b16 %v839, %v837
        %v972 = vpack.c.b16 %v840, %v838
        %v973 = vpack.c.b16 %v843, %v841
        %v974 = vpack.c.b16 %v844, %v842
        %v975 = vpack.c.b16 %v847, %v845
        %v976 = vpack.c.b16 %v848, %v846
        %v977 = vpack.c.b16 %v851, %v849
        %v978 = vpack.c.b16 %v852, %v850
        %v979 = vpack.c.b16 %v855, %v853
        %v980 = vpack.c.b16 %v856, %v854
        %v981 = vpack.c.b16 %v859, %v857
        %v982 = vpack.c.b16 %v860, %v858
        %v983 = vpack.c.b16 %v863, %v861
        %v984 = vpack.c.b16 %v864, %v862
        %v985 = vpack.c.b16 %v867, %v865
        %v986 = vpack.c.b16 %v868, %v866
        %v987 = vpack.c.b16 %v871, %v869
        %v988 = vpack.c.b16 %v872, %v870
        %v989 = vpack.c.b16 %v875, %v873
        %v990 = vpack.c.b16 %v876, %v874
        %v991 = vpack.c.b16 %v879, %v877
        %v992 = vpack.c.b16 %v880, %v878
        %v993 = vpack.c.b16 %v883, %v881
        %v994 = vpack.c.b16 %v884, %v882
        %v995 = vpack.c.b16 %v887, %v885
        %v996 = vpack.c.b16 %v888, %v886
        %v997 = vpack.c.b16 %v891, %v889
        %v998 = vpack.c.b16 %v892, %v890
        %v999 = vpack.c.b16 %v895, %v893
        %v1000 = vpack.c.b16 %v896, %v894
        %v1001 = vpack.c.b16 %v899, %v897
        %v1002 = vpack.c.b16 %v900, %v898
        %v1003 = vpack.c.b16 %v903, %v901
        %v1004 = vpack.c.b16 %v904, %v902
        %v1005 = vpack.c.b16 %v907, %v905
        %v1006 = vpack.c.b16 %v908, %v906
        %v1007 = vpack.c.b16 %v911, %v909
        %v1008 = vpack.c.b16 %v912, %v910
        %v1009 = vpack.c.b16 %v915, %v913
        %v1010 = vpack.c.b16 %v916, %v914
        %v1011 = vpack.c.b16 %v919, %v917
        %v1012 = vpack.c.b16 %v920, %v918
        %v1013 = vpack.c.b16 %v923, %v921
        %v1014 = vpack.c.b16 %v924, %v922
        %v1015 = vpack.c.b16 %v927, %v925
        %v1016 = vpack.c.b16 %v928, %v926
        %v1080 = vunpack.c.l.b16 %v646
        %v1081 = vunpack.c.l.b16 %v647
        %v1082 = vunpack.c.l.b16 %v648
        %v1083 = vunpack.c.l.b16 %v649
        %v1084 = vunpack.c.l.b16 %v650
        %v1085 = vunpack.c.l.b16 %v651
        %v1086 = vunpack.c.l.b16 %v652
        %v1087 = vunpack.c.l.b16 %v653
        %v1088 = vunpack.c.l.b16 %v654
        %v1089 = vunpack.c.l.b16 %v655
        %v1090 = vunpack.c.l.b16 %v656
        %v1091 = vunpack.c.l.b16 %v657
        %v1092 = vunpack.c.l.b16 %v658
        %v1093 = vunpack.c.l.b16 %v659
        %v1094 = vunpack.c.l.b16 %v660
        %v1095 = vunpack.c.l.b16 %v661
        %v1096 = vunpack.c.l.b16 %v662
        %v1097 = vunpack.c.l.b16 %v663
        %v1098 = vunpack.c.l.b16 %v664
        %v1099 = vpack.c.b16 %v1081, %v1080
        %v1100 = vpack.c.b16 %v1083, %v1082
        %v1101 = vpack.c.b16 %v1085, %v1084
        %v1102 = vpack.c.b16 %v1087, %v1086
        %v1103 = vpack.c.b16 %v1089, %v1088
        %v1104 = vpack.c.b16 %v1091, %v1090
        %v1105 = vpack.c.b16 %v1093, %v1092
        %v1106 = vpack.c.b16 %v1095, %v1094
        %v1107 = vpack.c.b16 %v1097, %v1096
        %v1108 = vpack.c.b16 %v1098, %v1098
        %vm1118 = vcmask 154624
        %v1120 = vsel %vm1118, %v930, 0
        %v1123 = vsel %vm1118, %v932, 0
        %v1126 = vsel %vm1118, %v934, 0
        %v1129 = vsel %vm1118, %v936, 0
        %v1132 = vsel %vm1118, %v938, 0
        %v1135 = vsel %vm1118, %v940, 0
        %v1138 = vsel %vm1118, %v942, 0
        %v1141 = vsel %vm1118, %v944, 0
        %v1144 = vsel %vm1118, %v946, 0
        %v1147 = vsel %vm1118, %v948, 0
        %v1150 = vsel %vm1118, %v950, 0
        %v1153 = vsel %vm1118, %v952, 0
        %v1156 = vsel %vm1118, %v954, 0
        %v1159 = vsel %vm1118, %v956, 0
        %v1162 = vsel %vm1118, %v958, 0
        %v1165 = vsel %vm1118, %v960, 0
        %v1168 = vsel %vm1118, %v962, 0
        %v1171 = vsel %vm1118, %v964, 0
        %v1174 = vsel %vm1118, %v966, 0
        %v1177 = vsel %vm1118, %v968, 0
        %v1180 = vsel %vm1118, %v970, 0
        %v1183 = vsel %vm1118, %v972, 0
        %v1186 = vsel %vm1118, %v974, 0
        %v1189 = vsel %vm1118, %v976, 0
        %v1192 = vsel %vm1118, %v978, 0
        %v1195 = vsel %vm1118, %v980, 0
        %v1198 = vsel %vm1118, %v982, 0
        %v1201 = vsel %vm1118, %v984, 0
        %v1204 = vsel %vm1118, %v986, 0
        %v1207 = vsel %vm1118, %v988, 0
        %v1210 = vsel %vm1118, %v990, 0
        %v1213 = vsel %vm1118, %v992, 0
        %v1216 = vsel %vm1118, %v994, 0
        %v1219 = vsel %vm1118, %v996, 0
        %v1222 = vsel %vm1118, %v998, 0
        %v1225 = vsel %vm1118, %v1000, 0
        %v1228 = vsel %vm1118, %v1002, 0
        %v1231 = vsel %vm1118, %v1004, 0
        %v1234 = vsel %vm1118, %v1006, 0
        %v1237 = vsel %vm1118, %v1008, 0
        %v1240 = vsel %vm1118, %v1010, 0
        %v1243 = vsel %vm1118, %v1012, 0
        %v1246 = vsel %vm1118, %v1014, 0
        %v1249 = vsel %vm1118, %v1016, 0
        %vm1251 = vcmask 1040384
        %vm1252 = vcmask 1041408
        %v1253 = vsel %vm1251, 4294967295, 65535
        %v1254 = vsel %vm1252, %v1253, 0
        %v1256 = vand.u32 %v1108, %v1254
        %1258 = vmatprep.subr.bf16.mxu0 0
        %1259 = vmatpush1.bf16.msra.mxu0 %v1099
        %1260 = vmatprep.subr.bf16.mxu0 0
        %1261 = vmatpush1.bf16.msra.mxu0 %v1100
        %1262 = vmatprep.subr.bf16.mxu0 0
        %1263 = vmatpush1.bf16.msra.mxu0 %v1101
        %1264 = vmatprep.subr.bf16.mxu0 0
        %1265 = vmatpush1.bf16.msra.mxu0 %v1102
        %1266 = vmatprep.subr.bf16.mxu0 0
        %1267 = vmatpush1.bf16.msra.mxu0 %v1103
        %1268 = vmatprep.subr.bf16.mxu0 0
        %1269 = vmatpush1.bf16.msra.mxu0 %v1104
        %1270 = vmatprep.subr.bf16.mxu0 0
        %1271 = vmatpush1.bf16.msra.mxu0 %v1105
        %1272 = vmatprep.subr.bf16.mxu0 0
        %1273 = vmatpush1.bf16.msra.mxu0 %v1106
        %1274 = vmatprep.subr.bf16.mxu0 0
        %1275 = vmatpush1.bf16.msra.mxu0 %v1107
        %1276 = vmatprep.subr.bf16.mxu0 0
        %1277 = vmatpush1.bf16.msra.mxu0 %v1256
        %1278 = vmatprep.subr.bf16.mxu0 0
        %1279 = vmatpush1.bf16.msra.mxu0 0
        %1280 = vmatprep.subr.bf16.mxu0 0
        %1281 = vmatpush1.bf16.msra.mxu0 0
        %1282 = vmatprep.subr.bf16.mxu0 0
        %1283 = vmatpush1.bf16.msra.mxu0 0
        %1284 = vmatprep.subr.bf16.mxu0 0
        %1285 = vmatpush1.bf16.msra.mxu0 0
        %1286 = vmatprep.subr.bf16.mxu0 0
        %1287 = vmatpush1.bf16.msra.mxu0 0
        %1288 = vmatprep.subr.bf16.mxu0 0
        %1289 = vmatpush1.bf16.msra.mxu0 0
        %1290 = vmatprep.mubr.bf16.mxu0 %v1120
        %1291 = vmatmul.mubr.bf16.gmra.mrb[0].mxu0 %v929
        %v1292 = vpop.f32.mrb[0].mxu0
        %v1293 = vadd.f32 0.0, %v1292
        %v1294 = vpop.f32.mrb[0].mxu0
        %v1295 = vpop.f32.mrb[0].mxu0
        %v1296 = vadd.f32 0.0, %v1295
        %v1297 = vpop.f32.mrb[0].mxu0
        %1298 = vmatprep.mubr.bf16.mxu0 %v1123
        %1299 = vmatmul.mubr.bf16.gmra.mrb[0].mxu0 %v931
        %v1300 = vpop.f32.mrb[0].mxu0
        %v1301 = vadd.f32 0.0, %v1300
        %v1302 = vpop.f32.mrb[0].mxu0
        %v1303 = vpop.f32.mrb[0].mxu0
        %v1304 = vadd.f32 0.0, %v1303
        %v1305 = vpop.f32.mrb[0].mxu0
        %1306 = vmatprep.mubr.bf16.mxu0 %v1126
        %1307 = vmatmul.mubr.bf16.gmra.mrb[0].mxu0 %v933
        %v1308 = vpop.f32.mrb[0].mxu0
        %v1309 = vadd.f32 0.0, %v1308
        %v1310 = vpop.f32.mrb[0].mxu0
        %v1311 = vpop.f32.mrb[0].mxu0
        %v1312 = vadd.f32 0.0, %v1311
        %v1313 = vpop.f32.mrb[0].mxu0
        %1314 = vmatprep.mubr.bf16.mxu0 %v1129
        %1315 = vmatmul.mubr.bf16.gmra.mrb[0].mxu0 %v935
        %v1316 = vpop.f32.mrb[0].mxu0
        %v1317 = vadd.f32 0.0, %v1316
        %v1318 = vpop.f32.mrb[0].mxu0
        %v1319 = vpop.f32.mrb[0].mxu0
        %v1320 = vadd.f32 0.0, %v1319
        %v1321 = vpop.f32.mrb[0].mxu0
        %1322 = vmatprep.mubr.bf16.mxu0 %v1132
        %1323 = vmatmul.mubr.bf16.gmra.mrb[0].mxu0 %v937
        %v1324 = vpop.f32.mrb[0].mxu0
        %v1325 = vadd.f32 0.0, %v1324
        %v1326 = vpop.f32.mrb[0].mxu0
        %v1327 = vpop.f32.mrb[0].mxu0
        %v1328 = vadd.f32 0.0, %v1327
        %v1329 = vpop.f32.mrb[0].mxu0
        %1330 = vmatprep.mubr.bf16.mxu0 %v1135
        %1331 = vmatmul.mubr.bf16.gmra.mrb[0].mxu0 %v939
        %v1332 = vpop.f32.mrb[0].mxu0
        %v1333 = vadd.f32 0.0, %v1332
        %v1334 = vpop.f32.mrb[0].mxu0
        %v1335 = vpop.f32.mrb[0].mxu0
        %v1336 = vadd.f32 0.0, %v1335
        %v1337 = vpop.f32.mrb[0].mxu0
        %1338 = vmatprep.mubr.bf16.mxu0 %v1138
        %1339 = vmatmul.mubr.bf16.gmra.mrb[0].mxu0 %v941
        %v1340 = vpop.f32.mrb[0].mxu0
        %v1341 = vadd.f32 0.0, %v1340
        %v1342 = vpop.f32.mrb[0].mxu0
        %v1343 = vpop.f32.mrb[0].mxu0
        %v1344 = vadd.f32 0.0, %v1343
        %v1345 = vpop.f32.mrb[0].mxu0
        %1346 = vmatprep.mubr.bf16.mxu0 %v1141
        %1347 = vmatmul.mubr.bf16.gmra.mrb[0].mxu0 %v943
        %v1348 = vpop.f32.mrb[0].mxu0
        %v1349 = vadd.f32 0.0, %v1348
        %v1350 = vpop.f32.mrb[0].mxu0
        %v1351 = vpop.f32.mrb[0].mxu0
        %v1352 = vadd.f32 0.0, %v1351
        %v1353 = vpop.f32.mrb[0].mxu0
        %1354 = vmatprep.mubr.bf16.mxu0 %v1144
        %1355 = vmatmul.mubr.bf16.gmra.mrb[0].mxu0 %v945
        %v1356 = vpop.f32.mrb[0].mxu0
        %v1357 = vadd.f32 0.0, %v1356
        %v1358 = vpop.f32.mrb[0].mxu0
        %v1359 = vpop.f32.mrb[0].mxu0
        %v1360 = vadd.f32 0.0, %v1359
        %v1361 = vpop.f32.mrb[0].mxu0
        %1362 = vmatprep.mubr.bf16.mxu0 %v1147
        %1363 = vmatmul.mubr.bf16.gmra.mrb[0].mxu0 %v947
        %v1364 = vpop.f32.mrb[0].mxu0
        %v1365 = vadd.f32 0.0, %v1364
        %v1366 = vpop.f32.mrb[0].mxu0
        %v1367 = vpop.f32.mrb[0].mxu0
        %v1368 = vadd.f32 0.0, %v1367
        %v1369 = vpop.f32.mrb[0].mxu0
        %1370 = vmatprep.mubr.bf16.mxu0 %v1150
        %1371 = vmatmul.mubr.bf16.gmra.mrb[0].mxu0 %v949
        %v1372 = vpop.f32.mrb[0].mxu0
        %v1373 = vadd.f32 0.0, %v1372
        %v1374 = vpop.f32.mrb[0].mxu0
        %v1375 = vpop.f32.mrb[0].mxu0
        %v1376 = vadd.f32 0.0, %v1375
        %v1377 = vpop.f32.mrb[0].mxu0
        %1378 = vmatprep.mubr.bf16.mxu0 %v1153
        %1379 = vmatmul.mubr.bf16.gmra.mrb[0].mxu0 %v951
        %v1380 = vpop.f32.mrb[0].mxu0
        %v1381 = vadd.f32 0.0, %v1380
        %v1382 = vpop.f32.mrb[0].mxu0
        %v1383 = vpop.f32.mrb[0].mxu0
        %v1384 = vadd.f32 0.0, %v1383
        %v1385 = vpop.f32.mrb[0].mxu0
        %1386 = vmatprep.mubr.bf16.mxu0 %v1156
        %1387 = vmatmul.mubr.bf16.gmra.mrb[0].mxu0 %v953
        %v1388 = vpop.f32.mrb[0].mxu0
        %v1389 = vadd.f32 0.0, %v1388
        %v1390 = vpop.f32.mrb[0].mxu0
        %v1391 = vpop.f32.mrb[0].mxu0
        %v1392 = vadd.f32 0.0, %v1391
        %v1393 = vpop.f32.mrb[0].mxu0
        %1394 = vmatprep.mubr.bf16.mxu0 %v1159
        %1395 = vmatmul.mubr.bf16.gmra.mrb[0].mxu0 %v955
        %v1396 = vpop.f32.mrb[0].mxu0
        %v1397 = vadd.f32 0.0, %v1396
        %v1398 = vpop.f32.mrb[0].mxu0
        %v1399 = vpop.f32.mrb[0].mxu0
        %v1400 = vadd.f32 0.0, %v1399
        %v1401 = vpop.f32.mrb[0].mxu0
        %1402 = vmatprep.mubr.bf16.mxu0 %v1162
        %1403 = vmatmul.mubr.bf16.gmra.mrb[0].mxu0 %v957
        %v1404 = vpop.f32.mrb[0].mxu0
        %v1405 = vadd.f32 0.0, %v1404
        %v1406 = vpop.f32.mrb[0].mxu0
        %v1407 = vpop.f32.mrb[0].mxu0
        %v1408 = vadd.f32 0.0, %v1407
        %v1409 = vpop.f32.mrb[0].mxu0
        %1410 = vmatprep.mubr.bf16.mxu0 %v1165
        %1411 = vmatmul.mubr.bf16.gmra.mrb[0].mxu0 %v959
        %v1412 = vpop.f32.mrb[0].mxu0
        %v1413 = vadd.f32 0.0, %v1412
        %v1414 = vpop.f32.mrb[0].mxu0
        %v1415 = vpop.f32.mrb[0].mxu0
        %v1416 = vadd.f32 0.0, %v1415
        %v1417 = vpop.f32.mrb[0].mxu0
        %1418 = vmatprep.mubr.bf16.mxu0 %v1168
        %1419 = vmatmul.mubr.bf16.gmra.mrb[0].mxu0 %v961
        %v1420 = vpop.f32.mrb[0].mxu0
        %v1421 = vadd.f32 0.0, %v1420
        %v1422 = vpop.f32.mrb[0].mxu0
        %v1423 = vpop.f32.mrb[0].mxu0
        %v1424 = vadd.f32 0.0, %v1423
        %v1425 = vpop.f32.mrb[0].mxu0
        %1426 = vmatprep.mubr.bf16.mxu0 %v1171
        %1427 = vmatmul.mubr.bf16.gmra.mrb[0].mxu0 %v963
        %v1428 = vpop.f32.mrb[0].mxu0
        %v1429 = vadd.f32 0.0, %v1428
        %v1430 = vpop.f32.mrb[0].mxu0
        %v1431 = vpop.f32.mrb[0].mxu0
        %v1432 = vadd.f32 0.0, %v1431
        %v1433 = vpop.f32.mrb[0].mxu0
        %1434 = vmatprep.mubr.bf16.mxu0 %v1174
        %1435 = vmatmul.mubr.bf16.gmra.mrb[0].mxu0 %v965
        %v1436 = vpop.f32.mrb[0].mxu0
        %v1437 = vadd.f32 0.0, %v1436
        %v1438 = vpop.f32.mrb[0].mxu0
        %v1439 = vpop.f32.mrb[0].mxu0
        %v1440 = vadd.f32 0.0, %v1439
        %v1441 = vpop.f32.mrb[0].mxu0
        %1442 = vmatprep.mubr.bf16.mxu0 %v1177
        %1443 = vmatmul.mubr.bf16.gmra.mrb[0].mxu0 %v967
        %v1444 = vpop.f32.mrb[0].mxu0
        %v1445 = vadd.f32 0.0, %v1444
        %v1446 = vpop.f32.mrb[0].mxu0
        %v1447 = vpop.f32.mrb[0].mxu0
        %v1448 = vadd.f32 0.0, %v1447
        %v1449 = vpop.f32.mrb[0].mxu0
        %1450 = vmatprep.mubr.bf16.mxu0 %v1180
        %1451 = vmatmul.mubr.bf16.gmra.mrb[0].mxu0 %v969
        %v1452 = vpop.f32.mrb[0].mxu0
        %v1453 = vadd.f32 0.0, %v1452
        %v1454 = vpop.f32.mrb[0].mxu0
        %v1455 = vpop.f32.mrb[0].mxu0
        %v1456 = vadd.f32 0.0, %v1455
        %v1457 = vpop.f32.mrb[0].mxu0
        %1458 = vmatprep.mubr.bf16.mxu0 %v1183
        %1459 = vmatmul.mubr.bf16.gmra.mrb[0].mxu0 %v971
        %v1460 = vpop.f32.mrb[0].mxu0
        %v1461 = vadd.f32 0.0, %v1460
        %v1462 = vpop.f32.mrb[0].mxu0
        %v1463 = vpop.f32.mrb[0].mxu0
        %v1464 = vadd.f32 0.0, %v1463
        %v1465 = vpop.f32.mrb[0].mxu0
        %1466 = vmatprep.mubr.bf16.mxu0 %v1186
        %1467 = vmatmul.mubr.bf16.gmra.mrb[0].mxu0 %v973
        %v1468 = vpop.f32.mrb[0].mxu0
        %v1469 = vadd.f32 0.0, %v1468
        %v1470 = vpop.f32.mrb[0].mxu0
        %v1471 = vpop.f32.mrb[0].mxu0
        %v1472 = vadd.f32 0.0, %v1471
        %v1473 = vpop.f32.mrb[0].mxu0
        %1474 = vmatprep.mubr.bf16.mxu0 %v1189
        %1475 = vmatmul.mubr.bf16.gmra.mrb[0].mxu0 %v975
        %v1476 = vpop.f32.mrb[0].mxu0
        %v1477 = vadd.f32 0.0, %v1476
        %v1478 = vpop.f32.mrb[0].mxu0
        %v1479 = vpop.f32.mrb[0].mxu0
        %v1480 = vadd.f32 0.0, %v1479
        %v1481 = vpop.f32.mrb[0].mxu0
        %1482 = vmatprep.mubr.bf16.mxu0 %v1192
        %1483 = vmatmul.mubr.bf16.gmra.mrb[0].mxu0 %v977
        %v1484 = vpop.f32.mrb[0].mxu0
        %v1485 = vadd.f32 0.0, %v1484
        %v1486 = vpop.f32.mrb[0].mxu0
        %v1487 = vpop.f32.mrb[0].mxu0
        %v1488 = vadd.f32 0.0, %v1487
        %v1489 = vpop.f32.mrb[0].mxu0
        %1490 = vmatprep.mubr.bf16.mxu0 %v1195
        %1491 = vmatmul.mubr.bf16.gmra.mrb[0].mxu0 %v979
        %v1492 = vpop.f32.mrb[0].mxu0
        %v1493 = vadd.f32 0.0, %v1492
        %v1494 = vpop.f32.mrb[0].mxu0
        %v1495 = vpop.f32.mrb[0].mxu0
        %v1496 = vadd.f32 0.0, %v1495
        %v1497 = vpop.f32.mrb[0].mxu0
        %1498 = vmatprep.mubr.bf16.mxu0 %v1198
        %1499 = vmatmul.mubr.bf16.gmra.mrb[0].mxu0 %v981
        %v1500 = vpop.f32.mrb[0].mxu0
        %v1501 = vadd.f32 0.0, %v1500
        %v1502 = vpop.f32.mrb[0].mxu0
        %v1503 = vpop.f32.mrb[0].mxu0
        %v1504 = vadd.f32 0.0, %v1503
        %v1505 = vpop.f32.mrb[0].mxu0
        %1506 = vmatprep.mubr.bf16.mxu0 %v1201
        %1507 = vmatmul.mubr.bf16.gmra.mrb[0].mxu0 %v983
        %v1508 = vpop.f32.mrb[0].mxu0
        %v1509 = vadd.f32 0.0, %v1508
        %v1510 = vpop.f32.mrb[0].mxu0
        %v1511 = vpop.f32.mrb[0].mxu0
        %v1512 = vadd.f32 0.0, %v1511
        %v1513 = vpop.f32.mrb[0].mxu0
        %1514 = vmatprep.mubr.bf16.mxu0 %v1204
        %1515 = vmatmul.mubr.bf16.gmra.mrb[0].mxu0 %v985
        %v1516 = vpop.f32.mrb[0].mxu0
        %v1517 = vadd.f32 0.0, %v1516
        %v1518 = vpop.f32.mrb[0].mxu0
        %v1519 = vpop.f32.mrb[0].mxu0
        %v1520 = vadd.f32 0.0, %v1519
        %v1521 = vpop.f32.mrb[0].mxu0
        %1522 = vmatprep.mubr.bf16.mxu0 %v1207
        %1523 = vmatmul.mubr.bf16.gmra.mrb[0].mxu0 %v987
        %v1524 = vpop.f32.mrb[0].mxu0
        %v1525 = vadd.f32 0.0, %v1524
        %v1526 = vpop.f32.mrb[0].mxu0
        %v1527 = vpop.f32.mrb[0].mxu0
        %v1528 = vadd.f32 0.0, %v1527
        %v1529 = vpop.f32.mrb[0].mxu0
        %1530 = vmatprep.mubr.bf16.mxu0 %v1210
        %1531 = vmatmul.mubr.bf16.gmra.mrb[0].mxu0 %v989
        %v1532 = vpop.f32.mrb[0].mxu0
        %v1533 = vadd.f32 0.0, %v1532
        %v1534 = vpop.f32.mrb[0].mxu0
        %v1535 = vpop.f32.mrb[0].mxu0
        %v1536 = vadd.f32 0.0, %v1535
        %v1537 = vpop.f32.mrb[0].mxu0
        %1538 = vmatprep.mubr.bf16.mxu0 %v1213
        %1539 = vmatmul.mubr.bf16.gmra.mrb[0].mxu0 %v991
        %v1540 = vpop.f32.mrb[0].mxu0
        %v1541 = vadd.f32 0.0, %v1540
        %v1542 = vpop.f32.mrb[0].mxu0
        %v1543 = vpop.f32.mrb[0].mxu0
        %v1544 = vadd.f32 0.0, %v1543
        %v1545 = vpop.f32.mrb[0].mxu0
        %1546 = vmatprep.mubr.bf16.mxu0 %v1216
        %1547 = vmatmul.mubr.bf16.gmra.mrb[0].mxu0 %v993
        %v1548 = vpop.f32.mrb[0].mxu0
        %v1549 = vadd.f32 0.0, %v1548
        %v1550 = vpop.f32.mrb[0].mxu0
        %v1551 = vpop.f32.mrb[0].mxu0
        %v1552 = vadd.f32 0.0, %v1551
        %v1553 = vpop.f32.mrb[0].mxu0
        %1554 = vmatprep.mubr.bf16.mxu0 %v1219
        %1555 = vmatmul.mubr.bf16.gmra.mrb[0].mxu0 %v995
        %v1556 = vpop.f32.mrb[0].mxu0
        %v1557 = vadd.f32 0.0, %v1556
        %v1558 = vpop.f32.mrb[0].mxu0
        %v1559 = vpop.f32.mrb[0].mxu0
        %v1560 = vadd.f32 0.0, %v1559
        %v1561 = vpop.f32.mrb[0].mxu0
        %1562 = vmatprep.mubr.bf16.mxu0 %v1222
        %1563 = vmatmul.mubr.bf16.gmra.mrb[0].mxu0 %v997
        %v1564 = vpop.f32.mrb[0].mxu0
        %v1565 = vadd.f32 0.0, %v1564
        %v1566 = vpop.f32.mrb[0].mxu0
        %v1567 = vpop.f32.mrb[0].mxu0
        %v1568 = vadd.f32 0.0, %v1567
        %v1569 = vpop.f32.mrb[0].mxu0
        %1570 = vmatprep.mubr.bf16.mxu0 %v1225
        %1571 = vmatmul.mubr.bf16.gmra.mrb[0].mxu0 %v999
        %v1572 = vpop.f32.mrb[0].mxu0
        %v1573 = vadd.f32 0.0, %v1572
        %v1574 = vpop.f32.mrb[0].mxu0
        %v1575 = vpop.f32.mrb[0].mxu0
        %v1576 = vadd.f32 0.0, %v1575
        %v1577 = vpop.f32.mrb[0].mxu0
        %1578 = vmatprep.mubr.bf16.mxu0 %v1228
        %1579 = vmatmul.mubr.bf16.gmra.mrb[0].mxu0 %v1001
        %v1580 = vpop.f32.mrb[0].mxu0
        %v1581 = vadd.f32 0.0, %v1580
        %v1582 = vpop.f32.mrb[0].mxu0
        %v1583 = vpop.f32.mrb[0].mxu0
        %v1584 = vadd.f32 0.0, %v1583
        %v1585 = vpop.f32.mrb[0].mxu0
        %1586 = vmatprep.mubr.bf16.mxu0 %v1231
        %1587 = vmatmul.mubr.bf16.gmra.mrb[0].mxu0 %v1003
        %v1588 = vpop.f32.mrb[0].mxu0
        %v1589 = vadd.f32 0.0, %v1588
        %v1590 = vpop.f32.mrb[0].mxu0
        %v1591 = vpop.f32.mrb[0].mxu0
        %v1592 = vadd.f32 0.0, %v1591
        %v1593 = vpop.f32.mrb[0].mxu0
        %1594 = vmatprep.mubr.bf16.mxu0 %v1234
        %1595 = vmatmul.mubr.bf16.gmra.mrb[0].mxu0 %v1005
        %v1596 = vpop.f32.mrb[0].mxu0
        %v1597 = vadd.f32 0.0, %v1596
        %v1598 = vpop.f32.mrb[0].mxu0
        %v1599 = vpop.f32.mrb[0].mxu0
        %v1600 = vadd.f32 0.0, %v1599
        %v1601 = vpop.f32.mrb[0].mxu0
        %1602 = vmatprep.mubr.bf16.mxu0 %v1237
        %1603 = vmatmul.mubr.bf16.gmra.mrb[0].mxu0 %v1007
        %v1604 = vpop.f32.mrb[0].mxu0
        %v1605 = vadd.f32 0.0, %v1604
        %v1606 = vpop.f32.mrb[0].mxu0
        %v1607 = vpop.f32.mrb[0].mxu0
        %v1608 = vadd.f32 0.0, %v1607
        %v1609 = vpop.f32.mrb[0].mxu0
        %1610 = vmatprep.mubr.bf16.mxu0 %v1240
        %1611 = vmatmul.mubr.bf16.gmra.mrb[0].mxu0 %v1009
        %v1612 = vpop.f32.mrb[0].mxu0
        %v1613 = vadd.f32 0.0, %v1612
        %v1614 = vpop.f32.mrb[0].mxu0
        %v1615 = vpop.f32.mrb[0].mxu0
        %v1616 = vadd.f32 0.0, %v1615
        %v1617 = vpop.f32.mrb[0].mxu0
        %1618 = vmatprep.mubr.bf16.mxu0 %v1243
        %1619 = vmatmul.mubr.bf16.gmra.mrb[0].mxu0 %v1011
        %v1620 = vpop.f32.mrb[0].mxu0
        %v1621 = vadd.f32 0.0, %v1620
        %v1622 = vpop.f32.mrb[0].mxu0
        %v1623 = vpop.f32.mrb[0].mxu0
        %v1624 = vadd.f32 0.0, %v1623
        %v1625 = vpop.f32.mrb[0].mxu0
        %1626 = vmatprep.mubr.bf16.mxu0 %v1246
        %1627 = vmatmul.mubr.bf16.gmra.mrb[0].mxu0 %v1013
        %v1628 = vpop.f32.mrb[0].mxu0
        %v1629 = vadd.f32 0.0, %v1628
        %v1630 = vpop.f32.mrb[0].mxu0
        %v1631 = vpop.f32.mrb[0].mxu0
        %v1632 = vadd.f32 0.0, %v1631
        %v1633 = vpop.f32.mrb[0].mxu0
        %1634 = vmatprep.mubr.bf16.mxu0 %v1249
        %1635 = vmatmul.mubr.bf16.gmra.mrb[0].mxu0 %v1015
        %v1636 = vpop.f32.mrb[0].mxu0
        %v1637 = vadd.f32 0.0, %v1636
        %v1638 = vpop.f32.mrb[0].mxu0
        %v1639 = vpop.f32.mrb[0].mxu0
        %v1640 = vadd.f32 0.0, %v1639
        %v1641 = vpop.f32.mrb[0].mxu0
        %1642 = vdwg.mxu0
        %v1643 = vmax.f32 %v1293, %v1381
        %v1644 = vmax.f32 %v1296, %v1384
        %v1645 = vmax.f32 %v1301, %v1389
        %v1646 = vmax.f32 %v1304, %v1392
        %v1647 = vmax.f32 %v1309, %v1397
        %v1648 = vmax.f32 %v1312, %v1400
        %v1649 = vmax.f32 %v1317, %v1405
        %v1650 = vmax.f32 %v1320, %v1408
        %v1651 = vmax.f32 %v1325, %v1413
        %v1652 = vmax.f32 %v1328, %v1416
        %v1653 = vmax.f32 %v1333, %v1421
        %v1654 = vmax.f32 %v1336, %v1424
        %v1655 = vmax.f32 %v1341, %v1429
        %v1656 = vmax.f32 %v1344, %v1432
        %v1657 = vmax.f32 %v1349, %v1437
        %v1658 = vmax.f32 %v1352, %v1440
        %v1659 = vmax.f32 %v1357, %v1445
        %v1660 = vmax.f32 %v1360, %v1448
        %v1661 = vmax.f32 %v1365, %v1453
        %v1662 = vmax.f32 %v1368, %v1456
        %v1663 = vmax.f32 %v1373, %v1461
        %v1664 = vmax.f32 %v1376, %v1464
        %v1665 = vmax.f32 %v1469, %v1557
        %v1666 = vmax.f32 %v1472, %v1560
        %v1667 = vmax.f32 %v1477, %v1565
        %v1668 = vmax.f32 %v1480, %v1568
        %v1669 = vmax.f32 %v1485, %v1573
        %v1670 = vmax.f32 %v1488, %v1576
        %v1671 = vmax.f32 %v1493, %v1581
        %v1672 = vmax.f32 %v1496, %v1584
        %v1673 = vmax.f32 %v1501, %v1589
        %v1674 = vmax.f32 %v1504, %v1592
        %v1675 = vmax.f32 %v1509, %v1597
        %v1676 = vmax.f32 %v1512, %v1600
        %v1677 = vmax.f32 %v1517, %v1605
        %v1678 = vmax.f32 %v1520, %v1608
        %v1679 = vmax.f32 %v1525, %v1613
        %v1680 = vmax.f32 %v1528, %v1616
        %v1681 = vmax.f32 %v1533, %v1621
        %v1682 = vmax.f32 %v1536, %v1624
        %v1683 = vmax.f32 %v1541, %v1629
        %v1684 = vmax.f32 %v1544, %v1632
        %v1685 = vmax.f32 %v1549, %v1637
        %v1686 = vmax.f32 %v1552, %v1640
        %v1687 = vmax.f32 %v1643, %v1665
        %v1688 = vmax.f32 %v1644, %v1666
        %v1689 = vmax.f32 %v1645, %v1667
        %v1690 = vmax.f32 %v1646, %v1668
        %v1691 = vmax.f32 %v1647, %v1669
        %v1692 = vmax.f32 %v1648, %v1670
        %v1693 = vmax.f32 %v1649, %v1671
        %v1694 = vmax.f32 %v1650, %v1672
        %v1695 = vmax.f32 %v1651, %v1673
        %v1696 = vmax.f32 %v1652, %v1674
        %v1697 = vmax.f32 %v1653, %v1675
        %v1698 = vmax.f32 %v1654, %v1676
        %v1699 = vmax.f32 %v1655, %v1677
        %v1700 = vmax.f32 %v1656, %v1678
        %v1701 = vmax.f32 %v1657, %v1679
        %v1702 = vmax.f32 %v1658, %v1680
        %v1703 = vmax.f32 %v1659, %v1681
        %v1704 = vmax.f32 %v1660, %v1682
        %v1705 = vmax.f32 %v1661, %v1683
        %v1706 = vmax.f32 %v1662, %v1684
        %v1707 = vmax.f32 %v1663, %v1685
        %v1708 = vmax.f32 %v1664, %v1686
        %v1709 = vld [vmem:[%s2] sm:$0x1]
        %v1711 = vlaneseq
        %v1712 = vshrl.u32 %v1711, 7
        %v1713 = vsub.s32 0, %v1712
        %v1714 = vrot.slane %v1709, %v1713
        %v1716 = vadd.f32 %v1687, %v1714
        %v1717 = vadd.f32 %v1688, %v1714
        %v1718 = vadd.f32 %v1689, %v1714
        %v1719 = vadd.f32 %v1690, %v1714
        %v1720 = vadd.f32 %v1691, %v1714
        %v1721 = vadd.f32 %v1692, %v1714
        %v1722 = vadd.f32 %v1693, %v1714
        %v1723 = vadd.f32 %v1694, %v1714
        %v1724 = vadd.f32 %v1695, %v1714
        %v1725 = vadd.f32 %v1696, %v1714
        %v1726 = vadd.f32 %v1697, %v1714
        %v1727 = vadd.f32 %v1698, %v1714
        %v1728 = vadd.f32 %v1699, %v1714
        %v1729 = vadd.f32 %v1700, %v1714
        %v1730 = vadd.f32 %v1701, %v1714
        %v1731 = vadd.f32 %v1702, %v1714
        %v1732 = vadd.f32 %v1703, %v1714
        %v1733 = vadd.f32 %v1704, %v1714
        %v1734 = vadd.f32 %v1705, %v1714
        %v1735 = vadd.f32 %v1706, %v1714
        %v1736 = vadd.f32 %v1707, %v1714
        %v1737 = vadd.f32 %v1708, %v1714
        %v1738 = vmax.f32 %v1716, 0.0
        %v1739 = vmax.f32 %v1717, 0.0
        %v1740 = vmax.f32 %v1718, 0.0
        %v1741 = vmax.f32 %v1719, 0.0
        %v1742 = vmax.f32 %v1720, 0.0
        %v1743 = vmax.f32 %v1721, 0.0
        %v1744 = vmax.f32 %v1722, 0.0
        %v1745 = vmax.f32 %v1723, 0.0
        %v1746 = vmax.f32 %v1724, 0.0
        %v1747 = vmax.f32 %v1725, 0.0
        %v1748 = vmax.f32 %v1726, 0.0
        %v1749 = vmax.f32 %v1727, 0.0
        %v1750 = vmax.f32 %v1728, 0.0
        %v1751 = vmax.f32 %v1729, 0.0
        %v1752 = vmax.f32 %v1730, 0.0
        %v1753 = vmax.f32 %v1731, 0.0
        %v1754 = vmax.f32 %v1732, 0.0
        %v1755 = vmax.f32 %v1733, 0.0
        %v1756 = vmax.f32 %v1734, 0.0
        %v1757 = vmax.f32 %v1735, 0.0
        %v1758 = vmax.f32 %v1736, 0.0
        %v1759 = vmax.f32 %v1737, 0.0
        %v1760 = vpack.c.bf16 %v1739, %v1738
        %v1761 = vpack.c.bf16 %v1741, %v1740
        %v1762 = vpack.c.bf16 %v1743, %v1742
        %v1763 = vpack.c.bf16 %v1745, %v1744
        %v1764 = vpack.c.bf16 %v1747, %v1746
        %v1765 = vpack.c.bf16 %v1749, %v1748
        %v1766 = vpack.c.bf16 %v1751, %v1750
        %v1767 = vpack.c.bf16 %v1753, %v1752
        %v1768 = vpack.c.bf16 %v1755, %v1754
        %v1769 = vpack.c.bf16 %v1757, %v1756
        %v1770 = vpack.c.bf16 %v1759, %v1758
        %v1782 = vunpack.c.l.b16 %v1760
        %v1783 = vunpack.c.h.b16 %v1760
        %v1784 = vunpack.c.l.b16 %v1761
        %v1785 = vunpack.c.h.b16 %v1761
        %v1786 = vunpack.c.l.b16 %v1762
        %v1787 = vunpack.c.h.b16 %v1762
        %v1788 = vunpack.c.l.b16 %v1763
        %v1789 = vunpack.c.h.b16 %v1763
        %v1790 = vunpack.c.l.b16 %v1764
        %v1791 = vunpack.c.h.b16 %v1764
        %v1792 = vunpack.c.l.b16 %v1765
        %v1793 = vunpack.c.h.b16 %v1765
        %v1794 = vunpack.c.l.b16 %v1766
        %v1795 = vunpack.c.h.b16 %v1766
        %v1796 = vunpack.c.l.b16 %v1767
        %v1797 = vunpack.c.h.b16 %v1767
        %v1798 = vunpack.c.l.b16 %v1768
        %v1799 = vunpack.c.h.b16 %v1768
        %v1800 = vunpack.c.l.b16 %v1769
        %v1801 = vunpack.c.h.b16 %v1769
        %v1802 = vunpack.c.l.b16 %v1770
        %v1803 = vunpack.c.h.b16 %v1770
        %v1804 = vpack.c.b16 %v1782, %v1782
        %v1805 = vpack.c.b16 %v1783, %v1783
        %v1806 = vpack.c.b16 %v1784, %v1784
        %v1807 = vpack.c.b16 %v1785, %v1785
        %v1808 = vpack.c.b16 %v1786, %v1786
        %v1809 = vpack.c.b16 %v1787, %v1787
        %v1810 = vpack.c.b16 %v1788, %v1788
        %v1811 = vpack.c.b16 %v1789, %v1789
        %v1812 = vpack.c.b16 %v1790, %v1790
        %v1813 = vpack.c.b16 %v1791, %v1791
        %v1814 = vpack.c.b16 %v1792, %v1792
        %v1815 = vpack.c.b16 %v1793, %v1793
        %v1816 = vpack.c.b16 %v1794, %v1794
        %v1817 = vpack.c.b16 %v1795, %v1795
        %v1818 = vpack.c.b16 %v1796, %v1796
        %v1819 = vpack.c.b16 %v1797, %v1797
        %v1820 = vpack.c.b16 %v1798, %v1798
        %v1821 = vpack.c.b16 %v1799, %v1799
        %v1822 = vpack.c.b16 %v1800, %v1800
        %v1823 = vpack.c.b16 %v1801, %v1801
        %v1824 = vpack.c.b16 %v1802, %v1802
        %v1825 = vpack.c.b16 %v1803, %v1803
        %vm1848 = vcmask 519168
        %1849 = vst.msk [vmem:[%s555] sm:$0xf] %vm1848, %v1804
        %1850 = vst.msk [vmem:[%s555 + $0x4] sm:$0xf] %vm1848, %v1805
        %1851 = vst.msk [vmem:[%s555 + $0x8] sm:$0xf] %vm1848, %v1806
        %1852 = vst.msk [vmem:[%s555 + $0xc] sm:$0xf] %vm1848, %v1807
        %1853 = vst.msk [vmem:[%s555 + $0x10] sm:$0xf] %vm1848, %v1808
        %1854 = vst.msk [vmem:[%s555 + $0x14] sm:$0xf] %vm1848, %v1809
        %1855 = vst.msk [vmem:[%s555 + $0x18] sm:$0xf] %vm1848, %v1810
        %1856 = vst.msk [vmem:[%s555 + $0x1c] sm:$0xf] %vm1848, %v1811
        %1857 = vst.msk [vmem:[%s555 + $0x20] sm:$0xf] %vm1848, %v1812
        %1858 = vst.msk [vmem:[%s555 + $0x24] sm:$0xf] %vm1848, %v1813
        %1859 = vst.msk [vmem:[%s555 + $0x28] sm:$0xf] %vm1848, %v1814
        %1860 = vst.msk [vmem:[%s555 + $0x2c] sm:$0xf] %vm1848, %v1815
        %1861 = vst.msk [vmem:[%s555 + $0x30] sm:$0xf] %vm1848, %v1816
        %1862 = vst.msk [vmem:[%s555 + $0x34] sm:$0xf] %vm1848, %v1817
        %1863 = vst.msk [vmem:[%s555 + $0x38] sm:$0xf] %vm1848, %v1818
        %1864 = vst.msk [vmem:[%s555 + $0x3c] sm:$0xf] %vm1848, %v1819
        %1865 = vst.msk [vmem:[%s555 + $0x40] sm:$0xf] %vm1848, %v1820
        %1866 = vst.msk [vmem:[%s555 + $0x44] sm:$0xf] %vm1848, %v1821
        %1867 = vst.msk [vmem:[%s555 + $0x48] sm:$0xf] %vm1848, %v1822
        %1868 = vst.msk [vmem:[%s555 + $0x4c] sm:$0xf] %vm1848, %v1823
        %1869 = vst.msk [vmem:[%s555 + $0x50] sm:$0xf] %vm1848, %v1824
        %1870 = vst.msk [vmem:[%s555 + $0x54] sm:$0xf] %vm1848, %v1825
        %s1871 = smul.u32 22, %s14
        %p1872 = scmp.lt.s32.totalorder %s1871, 43
        %s1873 = scalar_select %p1872, %s1871, 43
        %s1874 = smul.addr %s1873, 4
        %s1875 = scalar_lea.vmem %s3, %s1874
        // Predicated region
        $region71: #{simple_cnn_forward.2} parent=65 // pred_check
          %p1876 = pneg %p100
        $region72: #{simple_cnn_forward.2} parent=65 // pred_check_branch
          %1878 = sbr.rel (%p1876) target = $region74
        $region73: #{simple_cnn_forward.2} parent=65 // pred_region
          %s1879 = smul.u32 22, %s14
        $region74: #{simple_cnn_forward.2} parent=65 // pred_fallthru
          _
      $region66: #{simple_cnn_forward.2} parent=5 // pred_fallthru
        _
      %p1880 = scmp.le.s32.totalorder 2, %s9
      // Predicated region
      $region75: #{simple_cnn_forward.2} parent=5 // pred_check
        %p1881 = pneg %p1880
      $region76: #{simple_cnn_forward.2} parent=5 // pred_check_branch
        %1883 = sbr.rel (%p1881) target = $region78
      $region77: #{simple_cnn_forward.2} parent=5 // pred_region
        %s1884 = ssub.s32 %s9, 2
        // Predicated region
        $region79: #{simple_cnn_forward.2} parent=77 // pred_check
          %p1885 = pneg %p106
        $region80: #{simple_cnn_forward.2} parent=77 // pred_check_branch
          %1887 = sbr.rel (%p1885) target = $region82
        $region81: #{simple_cnn_forward.2} parent=77 // pred_region
          %s1888 = smul.u32 22, %s15
          %p1889 = scmp.lt.s32.totalorder %s1888, 43
          %s1890 = scalar_select %p1889, %s1888, 43
          %s1891 = smul.addr %s1890, 4
          %s1892 = scalar_lea.vmem %s3, %s1891
        $region82: #{simple_cnn_forward.2} parent=77 // pred_fallthru
          _
      $region78: #{simple_cnn_forward.2} parent=5 // pred_fallthru
        _
    $region6: #{simple_cnn_forward.2} parent=1 // loop_footer
      %s13 = sadd.s32 1, %s9
    $region7: #{simple_cnn_forward.2} parent=1 // loop_footer_branch
      %8 = sbr.rel target = $region3
    $region8: #{simple_cnn_forward.2} parent=1 // loop_exit
      _

// kernel: simple_cnn_forward.3
$region0: #{simple_cnn_forward.3}
  #allocation0 [shape = 'u32[]', space=smem, size = 0x4, offset = 0x4, fixed_abs, tag = 'smem constant byte address 0x4 - core index']
  #allocation1 [shape = 'u32[144,128]{1,0:T(1,128)}', space=vmem, size = 0x12000, scoped, tag = 'internal scratch']
  %s0 = inlined_call_operand.vmem [shape: bf16[4,32,3136], index: 0, kind: input, shape index: {}]
  %s1 = inlined_call_operand.vmem [shape: bf16[3136,128], index: 1, kind: input, shape index: {}]
  %s2 = inlined_call_operand.vmem [shape: f32[1,128], index: 2, kind: input, shape index: {}]
  %s3 = inlined_call_operand.vmem [shape: f32[32,128], index: 3, kind: output, shape index: {}]
  %s4 = sld [smem:[#allocation0]]
  $region71: #{simple_cnn_forward.3} parent=0
    _
  %s6 = ssub.s32 1, %s4
  %s7 = scalar_select 0, %s6, %s4
  $region1: #{simple_cnn_forward.3} parent=0
    #allocation2 [shape = 'u8[819200]{0}', space=vmem, size = 0xc8000, scoped, tag = 'input window, operand 0']
    loop: start=0, step=1, limit=4
    $region2: #{simple_cnn_forward.3} parent=1 // loop_pre_header
      _
    $region3: #{simple_cnn_forward.3} parent=1 // loop_header
      %s9 = sphi 0, %s13
      %p10 = scmp.ge.s32.totalorder %s9, 4
      %s19 = sphi 0, %s21
      %s22 = sphi 0, %s19
      %s23 = sphi 0, %s22
      %s39 = sphi 0, %s23
      %s43 = sphi 0, %s43
      %s45 = sphi 0, %s43
      %s46 = sphi 0, %s45
      %s60 = sphi 0, %s46
      %s64 = sphi 0, %s64
      %s66 = sphi 0, %s64
      %s67 = sphi 0, %s66
      %s81 = sphi 0, %s67
      %s87 = sphi 0, %s89
      %s90 = sphi 0, %s87
      %s91 = sphi 0, %s90
      %s107 = sphi 0, %s91
    $region4: #{simple_cnn_forward.3} parent=1 // loop_header_branch
      %12 = sbr.rel (%p10) target = $region8
    $region5: #{simple_cnn_forward.3} parent=1 // loop_body
      %s14 = ssub.s32 %s9, 1
      %s15 = ssub.s32 %s9, 2
      %s16 = sadd.s32 %s9, 1
      %s17 = ssub.s32 %s9, %s16
      %p18 = scmp.eq.s32.totalorder %s17, 0
      %s20 = sadd.s32 %s19, 1
      %s21 = scalar_select %p18, %s19, %s20
      %p24 = pneg %p18
      %p25 = scmp.eq.s32.totalorder %s9, 1
      %p26 = por %p24, %p25
      %p27 = scmp.ne.s32.totalorder %s19, %s22
      %p28 = scmp.eq.s32.totalorder %s9, 0
      %p29 = por %p27, %p28
      %p30 = scmp.ne.s32.totalorder %s19, %s22
      %p31 = scmp.eq.s32.totalorder %s14, 1
      %p32 = por %p30, %p31
      %p33 = scmp.ne.s32.totalorder %s22, %s23
      %p34 = scmp.eq.s32.totalorder %s14, 0
      %p35 = por %p33, %p34
      %p36 = scmp.ne.s32.totalorder %s22, %s23
      %p37 = scmp.eq.s32.totalorder %s15, 1
      %p38 = por %p36, %p37
      %p40 = scmp.ne.s32.totalorder %s23, %s39
      %p41 = scmp.eq.s32.totalorder %s15, 0
      %p42 = por %p40, %p41
      %s44 = sadd.s32 %s43, 1
      %p47 = scmp.eq.s32.totalorder %s9, 1
      %p48 = scmp.ne.s32.totalorder %s43, %s45
      %p49 = scmp.eq.s32.totalorder %s9, 0
      %p50 = por %p48, %p49
      %p51 = scmp.ne.s32.totalorder %s43, %s45
      %p52 = scmp.eq.s32.totalorder %s14, 1
      %p53 = por %p51, %p52
      %p54 = scmp.ne.s32.totalorder %s45, %s46
      %p55 = scmp.eq.s32.totalorder %s14, 0
      %p56 = por %p54, %p55
      %p57 = scmp.ne.s32.totalorder %s45, %s46
      %p58 = scmp.eq.s32.totalorder %s15, 1
      %p59 = por %p57, %p58
      %p61 = scmp.ne.s32.totalorder %s46, %s60
      %p62 = scmp.eq.s32.totalorder %s15, 0
      %p63 = por %p61, %p62
      %s65 = sadd.s32 %s64, 1
      %p68 = scmp.eq.s32.totalorder %s9, 1
      %p69 = scmp.ne.s32.totalorder %s64, %s66
      %p70 = scmp.eq.s32.totalorder %s9, 0
      %p71 = por %p69, %p70
      %p72 = scmp.ne.s32.totalorder %s64, %s66
      %p73 = scmp.eq.s32.totalorder %s14, 1
      %p74 = por %p72, %p73
      %p75 = scmp.ne.s32.totalorder %s66, %s67
      %p76 = scmp.eq.s32.totalorder %s14, 0
      %p77 = por %p75, %p76
      %p78 = scmp.ne.s32.totalorder %s66, %s67
      %p79 = scmp.eq.s32.totalorder %s15, 1
      %p80 = por %p78, %p79
      %p82 = scmp.ne.s32.totalorder %s67, %s81
      %p83 = scmp.eq.s32.totalorder %s15, 0
      %p84 = por %p82, %p83
      %s85 = ssub.s32 %s9, %s16
      %p86 = scmp.eq.s32.totalorder %s85, 0
      %s88 = sadd.s32 %s87, 1
      %s89 = scalar_select %p86, %s87, %s88
      %p92 = pneg %p86
      %p93 = scmp.eq.s32.totalorder %s9, 1
      %p94 = por %p92, %p93
      %p95 = scmp.ne.s32.totalorder %s87, %s90
      %p96 = scmp.eq.s32.totalorder %s9, 0
      %p97 = por %p95, %p96
      %p98 = scmp.ne.s32.totalorder %s87, %s90
      %p99 = scmp.eq.s32.totalorder %s14, 1
      %p100 = por %p98, %p99
      %p101 = scmp.ne.s32.totalorder %s90, %s91
      %p102 = scmp.eq.s32.totalorder %s14, 0
      %p103 = por %p101, %p102
      %p104 = scmp.ne.s32.totalorder %s90, %s91
      %p105 = scmp.eq.s32.totalorder %s15, 1
      %p106 = por %p104, %p105
      %p108 = scmp.ne.s32.totalorder %s91, %s107
      %p109 = scmp.eq.s32.totalorder %s15, 0
      %p110 = por %p108, %p109
      %p111 = scmp.le.s32.totalorder 1, %s9
      %p112 = scmp.lt.s32.totalorder %s9, 3
      %p113 = pnand %p111, %p112
      %p114 = pneg %p113
      // Predicated region
      $region9: #{simple_cnn_forward.3} parent=5 // pred_check
        _
      $region10: #{simple_cnn_forward.3} parent=5 // pred_check_branch
        %116 = sbr.rel (%p113) target = $region12
      $region11: #{simple_cnn_forward.3} parent=5 // pred_region
        %s117 = ssub.s32 %s9, 1
        // Predicated region
        $region13: #{simple_cnn_forward.3} parent=11 // pred_check
          %p118 = pneg %p56
        $region14: #{simple_cnn_forward.3} parent=11 // pred_check_branch
          %120 = sbr.rel (%p118) target = $region16
        $region15: #{simple_cnn_forward.3} parent=11 // pred_region
          _
        $region16: #{simple_cnn_forward.3} parent=11 // pred_fallthru
          _
        // Predicated region
        $region17: #{simple_cnn_forward.3} parent=11 // pred_check
          %p121 = pneg %p77
        $region18: #{simple_cnn_forward.3} parent=11 // pred_check_branch
          %123 = sbr.rel (%p121) target = $region20
        $region19: #{simple_cnn_forward.3} parent=11 // pred_region
          _
        $region20: #{simple_cnn_forward.3} parent=11 // pred_fallthru
          _
      $region12: #{simple_cnn_forward.3} parent=5 // pred_fallthru
        _
      %p124 = scmp.lt.s32.totalorder %s9, 2
      // Predicated region
      $region21: #{simple_cnn_forward.3} parent=5 // pred_check
        %p125 = pneg %p124
      $region22: #{simple_cnn_forward.3} parent=5 // pred_check_branch
        %127 = sbr.rel (%p125) target = $region24
      $region23: #{simple_cnn_forward.3} parent=5 // pred_region
        // Predicated region
        $region25: #{simple_cnn_forward.3} parent=23 // pred_check
          %p128 = pneg %p29
        $region26: #{simple_cnn_forward.3} parent=23 // pred_check_branch
          %130 = sbr.rel (%p128) target = $region28
        $region27: #{simple_cnn_forward.3} parent=23 // pred_region
          %s131 = sand.u32 %s19, 1
          %s132 = sand.u32 %s19, 1
          %s133 = smul.addr %s132, 800
          %s134 = scalar_lea.vmem [#allocation2], %s133
          %s135 = smul.u32 2, %s9
          %s136 = smul.addr %s135, 25
          %s137 = smul.addr %s136, 4
          %s138 = scalar_lea.vmem %s0, %s137
          // Predicated region
          $region29: #{simple_cnn_forward.3} parent=27 // pred_check
            _
          $region30: #{simple_cnn_forward.3} parent=27 // pred_check_branch
            %140 = sbr.rel (0) target = $region32
          $region31: #{simple_cnn_forward.3} parent=27 // pred_region
            // Predicated region
            $region33: #{simple_cnn_forward.3} parent=31 // pred_check
              _
            $region34: #{simple_cnn_forward.3} parent=31 // pred_check_branch
              %142 = sbr.rel (0) target = $region36
            $region35: #{simple_cnn_forward.3} parent=31 // pred_region
              %s143 = scalar_lea.vmem %s138, 96
              %s144 = scalar_lea.vmem %s134, 96 [#allocation2]
              loop: start=0, step=1, limit=1
              $region37: #{simple_cnn_forward.3} parent=35 // loop_pre_header
                _
              $region38: #{simple_cnn_forward.3} parent=35 // loop_header
                %s146 = sphi 0, %s150
                %p147 = scmp.ge.s32.totalorder %s146, 1
                %s151 = sphi %s138, %s138
                %s152 = sphi %s134, %s134
              $region39: #{simple_cnn_forward.3} parent=35 // loop_header_branch
                %149 = sbr.rel (%p147) target = $region43
              $region40: #{simple_cnn_forward.3} parent=35 // loop_body
                %v153 = vld [vmem:[%s151] sm:$0xff]
                %154 = vst [vmem:[%s152] sm:$0xff] %v153
                %v155 = vld [vmem:[%s151 + $0x8] sm:$0xff]
                %156 = vst [vmem:[%s152 + $0x8] sm:$0xff] %v155
                %v157 = vld [vmem:[%s151 + $0x10] sm:$0xff]
                %158 = vst [vmem:[%s152 + $0x10] sm:$0xff] %v157
                %v159 = vld [vmem:[%s151 + $0x18] sm:$0xff]
                %160 = vst [vmem:[%s152 + $0x18] sm:$0xff] %v159
                %v161 = vld [vmem:[%s151 + $0x20] sm:$0xff]
                %162 = vst [vmem:[%s152 + $0x20] sm:$0xff] %v161
                %v163 = vld [vmem:[%s151 + $0x28] sm:$0xff]
                %164 = vst [vmem:[%s152 + $0x28] sm:$0xff] %v163
                %v165 = vld [vmem:[%s151 + $0x30] sm:$0xff]
                %166 = vst [vmem:[%s152 + $0x30] sm:$0xff] %v165
                %v167 = vld [vmem:[%s151 + $0x38] sm:$0xff]
                %168 = vst [vmem:[%s152 + $0x38] sm:$0xff] %v167
                %v169 = vld [vmem:[%s151 + $0x40] sm:$0xff]
                %170 = vst [vmem:[%s152 + $0x40] sm:$0xff] %v169
                %v171 = vld [vmem:[%s151 + $0x48] sm:$0xff]
                %172 = vst [vmem:[%s152 + $0x48] sm:$0xff] %v171
                %v173 = vld [vmem:[%s151 + $0x50] sm:$0xff]
                %174 = vst [vmem:[%s152 + $0x50] sm:$0xff] %v173
                %v175 = vld [vmem:[%s151 + $0x58] sm:$0xff]
                %176 = vst [vmem:[%s152 + $0x58] sm:$0xff] %v175
                %v177 = vld [vmem:[%s151 + $0x64] sm:$0xff]
                %178 = vst [vmem:[%s152 + $0x64] sm:$0xff] %v177
                %v179 = vld [vmem:[%s151 + $0x6c] sm:$0xff]
                %180 = vst [vmem:[%s152 + $0x6c] sm:$0xff] %v179
                %v181 = vld [vmem:[%s151 + $0x74] sm:$0xff]
                %182 = vst [vmem:[%s152 + $0x74] sm:$0xff] %v181
                %v183 = vld [vmem:[%s151 + $0x7c] sm:$0xff]
                %184 = vst [vmem:[%s152 + $0x7c] sm:$0xff] %v183
                %v185 = vld [vmem:[%s151 + $0x84] sm:$0xff]
                %186 = vst [vmem:[%s152 + $0x84] sm:$0xff] %v185
                %v187 = vld [vmem:[%s151 + $0x8c] sm:$0xff]
                %188 = vst [vmem:[%s152 + $0x8c] sm:$0xff] %v187
                %v189 = vld [vmem:[%s151 + $0x94] sm:$0xff]
                %190 = vst [vmem:[%s152 + $0x94] sm:$0xff] %v189
                %v191 = vld [vmem:[%s151 + $0x9c] sm:$0xff]
                %192 = vst [vmem:[%s152 + $0x9c] sm:$0xff] %v191
                %v193 = vld [vmem:[%s151 + $0xa4] sm:$0xff]
                %194 = vst [vmem:[%s152 + $0xa4] sm:$0xff] %v193
                %v195 = vld [vmem:[%s151 + $0xac] sm:$0xff]
                %196 = vst [vmem:[%s152 + $0xac] sm:$0xff] %v195
                %v197 = vld [vmem:[%s151 + $0xb4] sm:$0xff]
                %198 = vst [vmem:[%s152 + $0xb4] sm:$0xff] %v197
                %v199 = vld [vmem:[%s151 + $0xbc] sm:$0xff]
                %200 = vst [vmem:[%s152 + $0xbc] sm:$0xff] %v199
                %v201 = vld [vmem:[%s151 + $0x190] sm:$0xff]
                %202 = vst [vmem:[%s152 + $0xc8] sm:$0xff] %v201
                %v203 = vld [vmem:[%s151 + $0x198] sm:$0xff]
                %204 = vst [vmem:[%s152 + $0xd0] sm:$0xff] %v203
                %v205 = vld [vmem:[%s151 + $0x1a0] sm:$0xff]
                %206 = vst [vmem:[%s152 + $0xd8] sm:$0xff] %v205
                %v207 = vld [vmem:[%s151 + $0x1a8] sm:$0xff]
                %208 = vst [vmem:[%s152 + $0xe0] sm:$0xff] %v207
                %v209 = vld [vmem:[%s151 + $0x1b0] sm:$0xff]
                %210 = vst [vmem:[%s152 + $0xe8] sm:$0xff] %v209
                %v211 = vld [vmem:[%s151 + $0x1b8] sm:$0xff]
                %212 = vst [vmem:[%s152 + $0xf0] sm:$0xff] %v211
                %v213 = vld [vmem:[%s151 + $0x1c0] sm:$0xff]
                %214 = vst [vmem:[%s152 + $0xf8] sm:$0xff] %v213
                %v215 = vld [vmem:[%s151 + $0x1c8] sm:$0xff]
                %216 = vst [vmem:[%s152 + $0x100] sm:$0xff] %v215
                %v217 = vld [vmem:[%s151 + $0x1d0] sm:$0xff]
                %218 = vst [vmem:[%s152 + $0x108] sm:$0xff] %v217
                %v219 = vld [vmem:[%s151 + $0x1d8] sm:$0xff]
                %220 = vst [vmem:[%s152 + $0x110] sm:$0xff] %v219
                %v221 = vld [vmem:[%s151 + $0x1e0] sm:$0xff]
                %222 = vst [vmem:[%s152 + $0x118] sm:$0xff] %v221
                %v223 = vld [vmem:[%s151 + $0x1e8] sm:$0xff]
                %224 = vst [vmem:[%s152 + $0x120] sm:$0xff] %v223
                %v225 = vld [vmem:[%s151 + $0x1f4] sm:$0xff]
                %226 = vst [vmem:[%s152 + $0x12c] sm:$0xff] %v225
                %v227 = vld [vmem:[%s151 + $0x1fc] sm:$0xff]
                %228 = vst [vmem:[%s152 + $0x134] sm:$0xff] %v227
                %v229 = vld [vmem:[%s151 + $0x204] sm:$0xff]
                %230 = vst [vmem:[%s152 + $0x13c] sm:$0xff] %v229
                %v231 = vld [vmem:[%s151 + $0x20c] sm:$0xff]
                %232 = vst [vmem:[%s152 + $0x144] sm:$0xff] %v231
                %v233 = vld [vmem:[%s151 + $0x214] sm:$0xff]
                %234 = vst [vmem:[%s152 + $0x14c] sm:$0xff] %v233
                %v235 = vld [vmem:[%s151 + $0x21c] sm:$0xff]
                %236 = vst [vmem:[%s152 + $0x154] sm:$0xff] %v235
                %v237 = vld [vmem:[%s151 + $0x224] sm:$0xff]
                %238 = vst [vmem:[%s152 + $0x15c] sm:$0xff] %v237
                %v239 = vld [vmem:[%s151 + $0x22c] sm:$0xff]
                %240 = vst [vmem:[%s152 + $0x164] sm:$0xff] %v239
                %v241 = vld [vmem:[%s151 + $0x234] sm:$0xff]
                %242 = vst [vmem:[%s152 + $0x16c] sm:$0xff] %v241
                %v243 = vld [vmem:[%s151 + $0x23c] sm:$0xff]
                %244 = vst [vmem:[%s152 + $0x174] sm:$0xff] %v243
                %v245 = vld [vmem:[%s151 + $0x244] sm:$0xff]
                %246 = vst [vmem:[%s152 + $0x17c] sm:$0xff] %v245
                %v247 = vld [vmem:[%s151 + $0x24c] sm:$0xff]
                %248 = vst [vmem:[%s152 + $0x184] sm:$0xff] %v247
                %v249 = vld [vmem:[%s151 + $0x320] sm:$0xff]
                %250 = vst [vmem:[%s152 + $0x190] sm:$0xff] %v249
                %v251 = vld [vmem:[%s151 + $0x328] sm:$0xff]
                %252 = vst [vmem:[%s152 + $0x198] sm:$0xff] %v251
                %v253 = vld [vmem:[%s151 + $0x330] sm:$0xff]
                %254 = vst [vmem:[%s152 + $0x1a0] sm:$0xff] %v253
                %v255 = vld [vmem:[%s151 + $0x338] sm:$0xff]
                %256 = vst [vmem:[%s152 + $0x1a8] sm:$0xff] %v255
                %v257 = vld [vmem:[%s151 + $0x340] sm:$0xff]
                %258 = vst [vmem:[%s152 + $0x1b0] sm:$0xff] %v257
                %v259 = vld [vmem:[%s151 + $0x348] sm:$0xff]
                %260 = vst [vmem:[%s152 + $0x1b8] sm:$0xff] %v259
                %v261 = vld [vmem:[%s151 + $0x350] sm:$0xff]
                %262 = vst [vmem:[%s152 + $0x1c0] sm:$0xff] %v261
                %v263 = vld [vmem:[%s151 + $0x358] sm:$0xff]
                %264 = vst [vmem:[%s152 + $0x1c8] sm:$0xff] %v263
                %v265 = vld [vmem:[%s151 + $0x360] sm:$0xff]
                %266 = vst [vmem:[%s152 + $0x1d0] sm:$0xff] %v265
                %v267 = vld [vmem:[%s151 + $0x368] sm:$0xff]
                %268 = vst [vmem:[%s152 + $0x1d8] sm:$0xff] %v267
                %v269 = vld [vmem:[%s151 + $0x370] sm:$0xff]
                %270 = vst [vmem:[%s152 + $0x1e0] sm:$0xff] %v269
                %v271 = vld [vmem:[%s151 + $0x378] sm:$0xff]
                %272 = vst [vmem:[%s152 + $0x1e8] sm:$0xff] %v271
                %v273 = vld [vmem:[%s151 + $0x384] sm:$0xff]
                %274 = vst [vmem:[%s152 + $0x1f4] sm:$0xff] %v273
                %v275 = vld [vmem:[%s151 + $0x38c] sm:$0xff]
                %276 = vst [vmem:[%s152 + $0x1fc] sm:$0xff] %v275
                %v277 = vld [vmem:[%s151 + $0x394] sm:$0xff]
                %278 = vst [vmem:[%s152 + $0x204] sm:$0xff] %v277
                %v279 = vld [vmem:[%s151 + $0x39c] sm:$0xff]
                %280 = vst [vmem:[%s152 + $0x20c] sm:$0xff] %v279
                %v281 = vld [vmem:[%s151 + $0x3a4] sm:$0xff]
                %282 = vst [vmem:[%s152 + $0x214] sm:$0xff] %v281
                %v283 = vld [vmem:[%s151 + $0x3ac] sm:$0xff]
                %284 = vst [vmem:[%s152 + $0x21c] sm:$0xff] %v283
                %v285 = vld [vmem:[%s151 + $0x3b4] sm:$0xff]
                %286 = vst [vmem:[%s152 + $0x224] sm:$0xff] %v285
                %v287 = vld [vmem:[%s151 + $0x3bc] sm:$0xff]
                %288 = vst [vmem:[%s152 + $0x22c] sm:$0xff] %v287
                %v289 = vld [vmem:[%s151 + $0x3c4] sm:$0xff]
                %290 = vst [vmem:[%s152 + $0x234] sm:$0xff] %v289
                %v291 = vld [vmem:[%s151 + $0x3cc] sm:$0xff]
                %292 = vst [vmem:[%s152 + $0x23c] sm:$0xff] %v291
                %v293 = vld [vmem:[%s151 + $0x3d4] sm:$0xff]
                %294 = vst [vmem:[%s152 + $0x244] sm:$0xff] %v293
                %v295 = vld [vmem:[%s151 + $0x3dc] sm:$0xff]
                %296 = vst [vmem:[%s152 + $0x24c] sm:$0xff] %v295
                %v297 = vld [vmem:[%s151 + $0x4b0] sm:$0xff]
                %298 = vst [vmem:[%s152 + $0x258] sm:$0xff] %v297
                %v299 = vld [vmem:[%s151 + $0x4b8] sm:$0xff]
                %300 = vst [vmem:[%s152 + $0x260] sm:$0xff] %v299
                %v301 = vld [vmem:[%s151 + $0x4c0] sm:$0xff]
                %302 = vst [vmem:[%s152 + $0x268] sm:$0xff] %v301
                %v303 = vld [vmem:[%s151 + $0x4c8] sm:$0xff]
                %304 = vst [vmem:[%s152 + $0x270] sm:$0xff] %v303
                %v305 = vld [vmem:[%s151 + $0x4d0] sm:$0xff]
                %306 = vst [vmem:[%s152 + $0x278] sm:$0xff] %v305
                %v307 = vld [vmem:[%s151 + $0x4d8] sm:$0xff]
                %308 = vst [vmem:[%s152 + $0x280] sm:$0xff] %v307
                %v309 = vld [vmem:[%s151 + $0x4e0] sm:$0xff]
                %310 = vst [vmem:[%s152 + $0x288] sm:$0xff] %v309
                %v311 = vld [vmem:[%s151 + $0x4e8] sm:$0xff]
                %312 = vst [vmem:[%s152 + $0x290] sm:$0xff] %v311
                %v313 = vld [vmem:[%s151 + $0x4f0] sm:$0xff]
                %314 = vst [vmem:[%s152 + $0x298] sm:$0xff] %v313
                %v315 = vld [vmem:[%s151 + $0x4f8] sm:$0xff]
                %316 = vst [vmem:[%s152 + $0x2a0] sm:$0xff] %v315
                %v317 = vld [vmem:[%s151 + $0x500] sm:$0xff]
                %318 = vst [vmem:[%s152 + $0x2a8] sm:$0xff] %v317
                %v319 = vld [vmem:[%s151 + $0x508] sm:$0xff]
                %320 = vst [vmem:[%s152 + $0x2b0] sm:$0xff] %v319
                %v321 = vld [vmem:[%s151 + $0x514] sm:$0xff]
                %322 = vst [vmem:[%s152 + $0x2bc] sm:$0xff] %v321
                %v323 = vld [vmem:[%s151 + $0x51c] sm:$0xff]
                %324 = vst [vmem:[%s152 + $0x2c4] sm:$0xff] %v323
                %v325 = vld [vmem:[%s151 + $0x524] sm:$0xff]
                %326 = vst [vmem:[%s152 + $0x2cc] sm:$0xff] %v325
                %v327 = vld [vmem:[%s151 + $0x52c] sm:$0xff]
                %328 = vst [vmem:[%s152 + $0x2d4] sm:$0xff] %v327
                %v329 = vld [vmem:[%s151 + $0x534] sm:$0xff]
                %330 = vst [vmem:[%s152 + $0x2dc] sm:$0xff] %v329
                %v331 = vld [vmem:[%s151 + $0x53c] sm:$0xff]
                %332 = vst [vmem:[%s152 + $0x2e4] sm:$0xff] %v331
                %v333 = vld [vmem:[%s151 + $0x544] sm:$0xff]
                %334 = vst [vmem:[%s152 + $0x2ec] sm:$0xff] %v333
                %v335 = vld [vmem:[%s151 + $0x54c] sm:$0xff]
                %336 = vst [vmem:[%s152 + $0x2f4] sm:$0xff] %v335
                %v337 = vld [vmem:[%s151 + $0x554] sm:$0xff]
                %338 = vst [vmem:[%s152 + $0x2fc] sm:$0xff] %v337
                %v339 = vld [vmem:[%s151 + $0x55c] sm:$0xff]
                %340 = vst [vmem:[%s152 + $0x304] sm:$0xff] %v339
                %v341 = vld [vmem:[%s151 + $0x564] sm:$0xff]
                %342 = vst [vmem:[%s152 + $0x30c] sm:$0xff] %v341
                %v343 = vld [vmem:[%s151 + $0x56c] sm:$0xff]
                %344 = vst [vmem:[%s152 + $0x314] sm:$0xff] %v343
              $region41: #{simple_cnn_forward.3} parent=35 // loop_footer
                %s150 = sadd.s32 1, %s146
              $region42: #{simple_cnn_forward.3} parent=35 // loop_footer_branch
                %145 = sbr.rel target = $region38
              $region43: #{simple_cnn_forward.3} parent=35 // loop_exit
                _
              loop: start=0, step=1, limit=1
              $region44: #{simple_cnn_forward.3} parent=35 // loop_pre_header
                _
              $region45: #{simple_cnn_forward.3} parent=35 // loop_header
                %s347 = sphi 0, %s351
                %p348 = scmp.ge.s32.totalorder %s347, 1
                %s352 = sphi %s143, %s143
                %s353 = sphi %s144, %s144
              $region46: #{simple_cnn_forward.3} parent=35 // loop_header_branch
                %350 = sbr.rel (%p348) target = $region50
              $region47: #{simple_cnn_forward.3} parent=35 // loop_body
                %v354 = vld [vmem:[%s352] sm:$0xf]
                %355 = vst [vmem:[%s353] sm:$0xf] %v354
                %v356 = vld [vmem:[%s352 + $0x64] sm:$0xf]
                %357 = vst [vmem:[%s353 + $0x64] sm:$0xf] %v356
                %v358 = vld [vmem:[%s352 + $0x190] sm:$0xf]
                %359 = vst [vmem:[%s353 + $0xc8] sm:$0xf] %v358
                %v360 = vld [vmem:[%s352 + $0x1f4] sm:$0xf]
                %361 = vst [vmem:[%s353 + $0x12c] sm:$0xf] %v360
                %v362 = vld [vmem:[%s352 + $0x320] sm:$0xf]
                %363 = vst [vmem:[%s353 + $0x190] sm:$0xf] %v362
                %v364 = vld [vmem:[%s352 + $0x384] sm:$0xf]
                %365 = vst [vmem:[%s353 + $0x1f4] sm:$0xf] %v364
                %v366 = vld [vmem:[%s352 + $0x4b0] sm:$0xf]
                %367 = vst [vmem:[%s353 + $0x258] sm:$0xf] %v366
                %v368 = vld [vmem:[%s352 + $0x514] sm:$0xf]
                %369 = vst [vmem:[%s353 + $0x2bc] sm:$0xf] %v368
              $region48: #{simple_cnn_forward.3} parent=35 // loop_footer
                %s351 = sadd.s32 1, %s347
              $region49: #{simple_cnn_forward.3} parent=35 // loop_footer_branch
                %346 = sbr.rel target = $region45
              $region50: #{simple_cnn_forward.3} parent=35 // loop_exit
                _
            $region36: #{simple_cnn_forward.3} parent=31 // pred_fallthru
              _
          $region32: #{simple_cnn_forward.3} parent=27 // pred_fallthru
            _
          %370 = vnop
        $region28: #{simple_cnn_forward.3} parent=23 // pred_fallthru
          _
      $region24: #{simple_cnn_forward.3} parent=5 // pred_fallthru
        _
      %p371 = scmp.le.s32.totalorder 1, %s9
      %p372 = scmp.lt.s32.totalorder %s9, 3
      %p373 = pnand %p371, %p372
      %p374 = pneg %p373
      // Predicated region
      $region51: #{simple_cnn_forward.3} parent=5 // pred_check
        _
      $region52: #{simple_cnn_forward.3} parent=5 // pred_check_branch
        %376 = sbr.rel (%p373) target = $region54
      $region53: #{simple_cnn_forward.3} parent=5 // pred_region
        %s377 = ssub.s32 %s9, 1
        %s378 = sand.u32 %s22, 1
        %s379 = sand.u32 %s22, 1
        %s380 = smul.addr %s379, 800
        %s381 = scalar_lea.vmem [#allocation2], %s380
        // Predicated region
        $region55: #{simple_cnn_forward.3} parent=53 // pred_check
          %p382 = pneg %p35
        $region56: #{simple_cnn_forward.3} parent=53 // pred_check_branch
          %384 = sbr.rel (%p382) target = $region58
        $region57: #{simple_cnn_forward.3} parent=53 // pred_region
          _
        $region58: #{simple_cnn_forward.3} parent=53 // pred_fallthru
          _
        %s385 = sand.u32 %s22, 1
        %s386 = sand.u32 %s22, 1
        %s387 = smul.addr %s386, 800
        %s388 = scalar_lea.vmem [#allocation2], %s387
        %p389 = pneg %p35
        %p390 = pneg %p32
        %p391 = pneg %p56
        %p392 = pneg %p53
        %p393 = pneg %p77
        %p394 = pneg %p74
        %p395 = pneg %p103
        %p396 = pneg %p100
        %s397 = smul.u32 2, %s14
        %p398 = scmp.lt.s32.totalorder %s397, 3
        %s399 = scalar_select %p398, %s397, 3
        %s400 = smul.addr %s399, 8
        %s401 = scalar_lea.vmem %s3, %s400
        %s402 = smul.u32 2, %s14
        %s403 = smul.u32 2, %s14
        %p404 = scmp.lt.s32.totalorder %s403, 3
        %s405 = scalar_select %p404, %s403, 3
        %s406 = smul.addr %s405, 8
        %s407 = scalar_lea.vmem %s3, %s406
        %s408 = smul.u32 2, %s14
        %v410 = vld [vmem:[%s381] sm:$0xff]
        %v411 = vld [vmem:[%s381 + $0x8] sm:$0xff]
        %v412 = vld [vmem:[%s381 + $0x10] sm:$0xff]
        %v413 = vld [vmem:[%s381 + $0x18] sm:$0xff]
        %v414 = vld [vmem:[%s381 + $0x20] sm:$0xff]
        %v415 = vld [vmem:[%s381 + $0x28] sm:$0xff]
        %v416 = vld [vmem:[%s381 + $0x30] sm:$0xff]
        %v417 = vld [vmem:[%s381 + $0x38] sm:$0xff]
        %v418 = vld [vmem:[%s381 + $0x40] sm:$0xff]
        %v419 = vld [vmem:[%s381 + $0x48] sm:$0xff]
        %v420 = vld [vmem:[%s381 + $0x50] sm:$0xff]
        %v421 = vld [vmem:[%s381 + $0x58] sm:$0xff]
        %v422 = vld [vmem:[%s381 + $0x60] sm:$0xf]
        %v423 = vld [vmem:[%s381 + $0x64] sm:$0xff]
        %v424 = vld [vmem:[%s381 + $0x6c] sm:$0xff]
        %v425 = vld [vmem:[%s381 + $0x74] sm:$0xff]
        %v426 = vld [vmem:[%s381 + $0x7c] sm:$0xff]
        %v427 = vld [vmem:[%s381 + $0x84] sm:$0xff]
        %v428 = vld [vmem:[%s381 + $0x8c] sm:$0xff]
        %v429 = vld [vmem:[%s381 + $0x94] sm:$0xff]
        %v430 = vld [vmem:[%s381 + $0x9c] sm:$0xff]
        %v431 = vld [vmem:[%s381 + $0xa4] sm:$0xff]
        %v432 = vld [vmem:[%s381 + $0xac] sm:$0xff]
        %v433 = vld [vmem:[%s381 + $0xb4] sm:$0xff]
        %v434 = vld [vmem:[%s381 + $0xbc] sm:$0xff]
        %v435 = vld [vmem:[%s381 + $0xc4] sm:$0xf]
        %v436 = vld [vmem:[%s381 + $0xc8] sm:$0xff]
        %v437 = vld [vmem:[%s381 + $0xd0] sm:$0xff]
        %v438 = vld [vmem:[%s381 + $0xd8] sm:$0xff]
        %v439 = vld [vmem:[%s381 + $0xe0] sm:$0xff]
        %v440 = vld [vmem:[%s381 + $0xe8] sm:$0xff]
        %v441 = vld [vmem:[%s381 + $0xf0] sm:$0xff]
        %v442 = vld [vmem:[%s381 + $0xf8] sm:$0xff]
        %v443 = vld [vmem:[%s381 + $0x100] sm:$0xff]
        %v444 = vld [vmem:[%s381 + $0x108] sm:$0xff]
        %v445 = vld [vmem:[%s381 + $0x110] sm:$0xff]
        %v446 = vld [vmem:[%s381 + $0x118] sm:$0xff]
        %v447 = vld [vmem:[%s381 + $0x120] sm:$0xff]
        %v448 = vld [vmem:[%s381 + $0x128] sm:$0xf]
        %v449 = vld [vmem:[%s381 + $0x12c] sm:$0xff]
        %v450 = vld [vmem:[%s381 + $0x134] sm:$0xff]
        %v451 = vld [vmem:[%s381 + $0x13c] sm:$0xff]
        %v452 = vld [vmem:[%s381 + $0x144] sm:$0xff]
        %v453 = vld [vmem:[%s381 + $0x14c] sm:$0xff]
        %v454 = vld [vmem:[%s381 + $0x154] sm:$0xff]
        %v455 = vld [vmem:[%s381 + $0x15c] sm:$0xff]
        %v456 = vld [vmem:[%s381 + $0x164] sm:$0xff]
        %v457 = vld [vmem:[%s381 + $0x16c] sm:$0xff]
        %v458 = vld [vmem:[%s381 + $0x174] sm:$0xff]
        %v459 = vld [vmem:[%s381 + $0x17c] sm:$0xff]
        %v460 = vld [vmem:[%s381 + $0x184] sm:$0xff]
        %v461 = vld [vmem:[%s381 + $0x18c] sm:$0xf]
        %v462 = vld [vmem:[%s381 + $0x190] sm:$0xff]
        %v463 = vld [vmem:[%s381 + $0x198] sm:$0xff]
        %v464 = vld [vmem:[%s381 + $0x1a0] sm:$0xff]
        %v465 = vld [vmem:[%s381 + $0x1a8] sm:$0xff]
        %v466 = vld [vmem:[%s381 + $0x1b0] sm:$0xff]
        %v467 = vld [vmem:[%s381 + $0x1b8] sm:$0xff]
        %v468 = vld [vmem:[%s381 + $0x1c0] sm:$0xff]
        %v469 = vld [vmem:[%s381 + $0x1c8] sm:$0xff]
        %v470 = vld [vmem:[%s381 + $0x1d0] sm:$0xff]
        %v471 = vld [vmem:[%s381 + $0x1d8] sm:$0xff]
        %v472 = vld [vmem:[%s381 + $0x1e0] sm:$0xff]
        %v473 = vld [vmem:[%s381 + $0x1e8] sm:$0xff]
        %v474 = vld [vmem:[%s381 + $0x1f0] sm:$0xf]
        %v475 = vld [vmem:[%s381 + $0x1f4] sm:$0xff]
        %v476 = vld [vmem:[%s381 + $0x1fc] sm:$0xff]
        %v477 = vld [vmem:[%s381 + $0x204] sm:$0xff]
        %v478 = vld [vmem:[%s381 + $0x20c] sm:$0xff]
        %v479 = vld [vmem:[%s381 + $0x214] sm:$0xff]
        %v480 = vld [vmem:[%s381 + $0x21c] sm:$0xff]
        %v481 = vld [vmem:[%s381 + $0x224] sm:$0xff]
        %v482 = vld [vmem:[%s381 + $0x22c] sm:$0xff]
        %v483 = vld [vmem:[%s381 + $0x234] sm:$0xff]
        %v484 = vld [vmem:[%s381 + $0x23c] sm:$0xff]
        %v485 = vld [vmem:[%s381 + $0x244] sm:$0xff]
        %v486 = vld [vmem:[%s381 + $0x24c] sm:$0xff]
        %v487 = vld [vmem:[%s381 + $0x254] sm:$0xf]
        %v488 = vld [vmem:[%s381 + $0x258] sm:$0xff]
        %v489 = vld [vmem:[%s381 + $0x260] sm:$0xff]
        %v490 = vld [vmem:[%s381 + $0x268] sm:$0xff]
        %v491 = vld [vmem:[%s381 + $0x270] sm:$0xff]
        %v492 = vld [vmem:[%s381 + $0x278] sm:$0xff]
        %v493 = vld [vmem:[%s381 + $0x280] sm:$0xff]
        %v494 = vld [vmem:[%s381 + $0x288] sm:$0xff]
        %v495 = vld [vmem:[%s381 + $0x290] sm:$0xff]
        %v496 = vld [vmem:[%s381 + $0x298] sm:$0xff]
        %v497 = vld [vmem:[%s381 + $0x2a0] sm:$0xff]
        %v498 = vld [vmem:[%s381 + $0x2a8] sm:$0xff]
        %v499 = vld [vmem:[%s381 + $0x2b0] sm:$0xff]
        %v500 = vld [vmem:[%s381 + $0x2b8] sm:$0xf]
        %v501 = vld [vmem:[%s381 + $0x2bc] sm:$0xff]
        %v502 = vld [vmem:[%s381 + $0x2c4] sm:$0xff]
        %v503 = vld [vmem:[%s381 + $0x2cc] sm:$0xff]
        %v504 = vld [vmem:[%s381 + $0x2d4] sm:$0xff]
        %v505 = vld [vmem:[%s381 + $0x2dc] sm:$0xff]
        %v506 = vld [vmem:[%s381 + $0x2e4] sm:$0xff]
        %v507 = vld [vmem:[%s381 + $0x2ec] sm:$0xff]
        %v508 = vld [vmem:[%s381 + $0x2f4] sm:$0xff]
        %v509 = vld [vmem:[%s381 + $0x2fc] sm:$0xff]
        %v510 = vld [vmem:[%s381 + $0x304] sm:$0xff]
        %v511 = vld [vmem:[%s381 + $0x30c] sm:$0xff]
        %v512 = vld [vmem:[%s381 + $0x314] sm:$0xff]
        %v513 = vld [vmem:[%s381 + $0x31c] sm:$0xf]
        %v514 = vld [vmem:[%s1] sm:$0xf]
        %v515 = vld [vmem:[%s1 + $0x4] sm:$0xf]
        %v516 = vld [vmem:[%s1 + $0x8] sm:$0xf]
        %v517 = vld [vmem:[%s1 + $0xc] sm:$0xf]
        %v518 = vld [vmem:[%s1 + $0x10] sm:$0xf]
        %v519 = vld [vmem:[%s1 + $0x14] sm:$0xf]
        %v520 = vld [vmem:[%s1 + $0x18] sm:$0xf]
        %v521 = vld [vmem:[%s1 + $0x1c] sm:$0xf]
        %v522 = vld [vmem:[%s1 + $0x20] sm:$0xf]
        %v523 = vld [vmem:[%s1 + $0x24] sm:$0xf]
        %v524 = vld [vmem:[%s1 + $0x28] sm:$0xf]
        %v525 = vld [vmem:[%s1 + $0x2c] sm:$0xf]
        %v526 = vld [vmem:[%s1 + $0x30] sm:$0xf]
        %v527 = vld [vmem:[%s1 + $0x34] sm:$0xf]
        %v528 = vld [vmem:[%s1 + $0x38] sm:$0xf]
        %v529 = vld [vmem:[%s1 + $0x3c] sm:$0xf]
        %v530 = vld [vmem:[%s1 + $0x40] sm:$0xf]
        %v531 = vld [vmem:[%s1 + $0x44] sm:$0xf]
        %v532 = vld [vmem:[%s1 + $0x48] sm:$0xf]
        %v533 = vld [vmem:[%s1 + $0x4c] sm:$0xf]
        %v534 = vld [vmem:[%s1 + $0x50] sm:$0xf]
        %v535 = vld [vmem:[%s1 + $0x54] sm:$0xf]
        %v536 = vld [vmem:[%s1 + $0x58] sm:$0xf]
        %v537 = vld [vmem:[%s1 + $0x5c] sm:$0xf]
        %v538 = vld [vmem:[%s1 + $0x60] sm:$0xf]
        %v539 = vld [vmem:[%s1 + $0x64] sm:$0xf]
        %v540 = vld [vmem:[%s1 + $0x68] sm:$0xf]
        %v541 = vld [vmem:[%s1 + $0x6c] sm:$0xf]
        %v542 = vld [vmem:[%s1 + $0x70] sm:$0xf]
        %v543 = vld [vmem:[%s1 + $0x74] sm:$0xf]
        %v544 = vld [vmem:[%s1 + $0x78] sm:$0xf]
        %v545 = vld [vmem:[%s1 + $0x7c] sm:$0xf]
        %v546 = vld [vmem:[%s1 + $0x80] sm:$0xf]
        %v547 = vld [vmem:[%s1 + $0x84] sm:$0xf]
        %v548 = vld [vmem:[%s1 + $0x88] sm:$0xf]
        %v549 = vld [vmem:[%s1 + $0x8c] sm:$0xf]
        %v550 = vld [vmem:[%s1 + $0x90] sm:$0xf]
        %v551 = vld [vmem:[%s1 + $0x94] sm:$0xf]
        %v552 = vld [vmem:[%s1 + $0x98] sm:$0xf]
        %v553 = vld [vmem:[%s1 + $0x9c] sm:$0xf]
        %v554 = vld [vmem:[%s1 + $0xa0] sm:$0xf]
        %v555 = vld [vmem:[%s1 + $0xa4] sm:$0xf]
        %v556 = vld [vmem:[%s1 + $0xa8] sm:$0xf]
        %v557 = vld [vmem:[%s1 + $0xac] sm:$0xf]
        %v558 = vld [vmem:[%s1 + $0xb0] sm:$0xf]
        %v559 = vld [vmem:[%s1 + $0xb4] sm:$0xf]
        %v560 = vld [vmem:[%s1 + $0xb8] sm:$0xf]
        %v561 = vld [vmem:[%s1 + $0xbc] sm:$0xf]
        %v562 = vld [vmem:[%s1 + $0xc0] sm:$0xf]
        %v563 = vld [vmem:[%s1 + $0xc4] sm:$0xf]
        %v564 = vld [vmem:[%s1 + $0xc8] sm:$0xf]
        %v565 = vld [vmem:[%s1 + $0xcc] sm:$0xf]
        %v566 = vld [vmem:[%s1 + $0xd0] sm:$0xf]
        %v567 = vld [vmem:[%s1 + $0xd4] sm:$0xf]
        %v568 = vld [vmem:[%s1 + $0xd8] sm:$0xf]
        %v569 = vld [vmem:[%s1 + $0xdc] sm:$0xf]
        %v570 = vld [vmem:[%s1 + $0xe0] sm:$0xf]
        %v571 = vld [vmem:[%s1 + $0xe4] sm:$0xf]
        %v572 = vld [vmem:[%s1 + $0xe8] sm:$0xf]
        %v573 = vld [vmem:[%s1 + $0xec] sm:$0xf]
        %v574 = vld [vmem:[%s1 + $0xf0] sm:$0xf]
        %v575 = vld [vmem:[%s1 + $0xf4] sm:$0xf]
        %v576 = vld [vmem:[%s1 + $0xf8] sm:$0xf]
        %v577 = vld [vmem:[%s1 + $0xfc] sm:$0xf]
        %v578 = vld [vmem:[%s1 + $0x100] sm:$0xf]
        %v579 = vld [vmem:[%s1 + $0x104] sm:$0xf]
        %v580 = vld [vmem:[%s1 + $0x108] sm:$0xf]
        %v581 = vld [vmem:[%s1 + $0x10c] sm:$0xf]
        %v582 = vld [vmem:[%s1 + $0x110] sm:$0xf]
        %v583 = vld [vmem:[%s1 + $0x114] sm:$0xf]
        %v584 = vld [vmem:[%s1 + $0x118] sm:$0xf]
        %v585 = vld [vmem:[%s1 + $0x11c] sm:$0xf]
        %v586 = vld [vmem:[%s1 + $0x120] sm:$0xf]
        %v587 = vld [vmem:[%s1 + $0x124] sm:$0xf]
        %v588 = vld [vmem:[%s1 + $0x128] sm:$0xf]
        %v589 = vld [vmem:[%s1 + $0x12c] sm:$0xf]
        %v590 = vld [vmem:[%s1 + $0x130] sm:$0xf]
        %v591 = vld [vmem:[%s1 + $0x134] sm:$0xf]
        %v592 = vld [vmem:[%s1 + $0x138] sm:$0xf]
        %v593 = vld [vmem:[%s1 + $0x13c] sm:$0xf]
        %v594 = vld [vmem:[%s1 + $0x140] sm:$0xf]
        %v595 = vld [vmem:[%s1 + $0x144] sm:$0xf]
        %v596 = vld [vmem:[%s1 + $0x148] sm:$0xf]
        %v597 = vld [vmem:[%s1 + $0x14c] sm:$0xf]
        %v598 = vld [vmem:[%s1 + $0x150] sm:$0xf]
        %v599 = vld [vmem:[%s1 + $0x154] sm:$0xf]
        %v600 = vld [vmem:[%s1 + $0x158] sm:$0xf]
        %v601 = vld [vmem:[%s1 + $0x15c] sm:$0xf]
        %v602 = vld [vmem:[%s1 + $0x160] sm:$0xf]
        %v603 = vld [vmem:[%s1 + $0x164] sm:$0xf]
        %v604 = vld [vmem:[%s1 + $0x168] sm:$0xf]
        %v605 = vld [vmem:[%s1 + $0x16c] sm:$0xf]
        %v606 = vld [vmem:[%s1 + $0x170] sm:$0xf]
        %v607 = vld [vmem:[%s1 + $0x174] sm:$0xf]
        %v608 = vld [vmem:[%s1 + $0x178] sm:$0xf]
        %v609 = vld [vmem:[%s1 + $0x17c] sm:$0xf]
        %v610 = vld [vmem:[%s1 + $0x180] sm:$0xf]
        %v611 = vld [vmem:[%s1 + $0x184] sm:$0xf]
        %v612 = vld [vmem:[%s1 + $0x188] sm:$0xf]
        %v613 = vld [vmem:[%s1 + $0x18c] sm:$0xf]
        %v614 = vld [vmem:[%s1 + $0x190] sm:$0xf]
        %v615 = vld [vmem:[%s1 + $0x194] sm:$0xf]
        %v616 = vld [vmem:[%s1 + $0x198] sm:$0xf]
        %v617 = vld [vmem:[%s1 + $0x19c] sm:$0xf]
        %v618 = vld [vmem:[%s1 + $0x1a0] sm:$0xf]
        %v619 = vld [vmem:[%s1 + $0x1a4] sm:$0xf]
        %v620 = vld [vmem:[%s1 + $0x1a8] sm:$0xf]
        %v621 = vld [vmem:[%s1 + $0x1ac] sm:$0xf]
        %v622 = vld [vmem:[%s1 + $0x1b0] sm:$0xf]
        %v623 = vld [vmem:[%s1 + $0x1b4] sm:$0xf]
        %v624 = vld [vmem:[%s1 + $0x1b8] sm:$0xf]
        %v625 = vld [vmem:[%s1 + $0x1bc] sm:$0xf]
        %v626 = vld [vmem:[%s1 + $0x1c0] sm:$0xf]
        %v627 = vld [vmem:[%s1 + $0x1c4] sm:$0xf]
        %v628 = vld [vmem:[%s1 + $0x1c8] sm:$0xf]
        %v629 = vld [vmem:[%s1 + $0x1cc] sm:$0xf]
        %v630 = vld [vmem:[%s1 + $0x1d0] sm:$0xf]
        %v631 = vld [vmem:[%s1 + $0x1d4] sm:$0xf]
        %v632 = vld [vmem:[%s1 + $0x1d8] sm:$0xf]
        %v633 = vld [vmem:[%s1 + $0x1dc] sm:$0xf]
        %v634 = vld [vmem:[%s1 + $0x1e0] sm:$0xf]
        %v635 = vld [vmem:[%s1 + $0x1e4] sm:$0xf]
        %v636 = vld [vmem:[%s1 + $0x1e8] sm:$0xf]
        %v637 = vld [vmem:[%s1 + $0x1ec] sm:$0xf]
        %v638 = vld [vmem:[%s1 + $0x1f0] sm:$0xf]
        %v639 = vld [vmem:[%s1 + $0x1f4] sm:$0xf]
        %v640 = vld [vmem:[%s1 + $0x1f8] sm:$0xf]
        %v641 = vld [vmem:[%s1 + $0x1fc] sm:$0xf]
        %v642 = vld [vmem:[%s1 + $0x200] sm:$0xf]
        %v643 = vld [vmem:[%s1 + $0x204] sm:$0xf]
        %v644 = vld [vmem:[%s1 + $0x208] sm:$0xf]
        %v645 = vld [vmem:[%s1 + $0x20c] sm:$0xf]
        %v646 = vld [vmem:[%s1 + $0x210] sm:$0xf]
        %v647 = vld [vmem:[%s1 + $0x214] sm:$0xf]
        %v648 = vld [vmem:[%s1 + $0x218] sm:$0xf]
        %v649 = vld [vmem:[%s1 + $0x21c] sm:$0xf]
        %v650 = vld [vmem:[%s1 + $0x220] sm:$0xf]
        %v651 = vld [vmem:[%s1 + $0x224] sm:$0xf]
        %v652 = vld [vmem:[%s1 + $0x228] sm:$0xf]
        %v653 = vld [vmem:[%s1 + $0x22c] sm:$0xf]
        %v654 = vld [vmem:[%s1 + $0x230] sm:$0xf]
        %v655 = vld [vmem:[%s1 + $0x234] sm:$0xf]
        %v656 = vld [vmem:[%s1 + $0x238] sm:$0xf]
        %v657 = vld [vmem:[%s1 + $0x23c] sm:$0xf]
        %v658 = vld [vmem:[%s1 + $0x240] sm:$0xf]
        %v659 = vld [vmem:[%s1 + $0x244] sm:$0xf]
        %v660 = vld [vmem:[%s1 + $0x248] sm:$0xf]
        %v661 = vld [vmem:[%s1 + $0x24c] sm:$0xf]
        %v662 = vld [vmem:[%s1 + $0x250] sm:$0xf]
        %v663 = vld [vmem:[%s1 + $0x254] sm:$0xf]
        %v664 = vld [vmem:[%s1 + $0x258] sm:$0xf]
        %v665 = vld [vmem:[%s1 + $0x25c] sm:$0xf]
        %v666 = vld [vmem:[%s1 + $0x260] sm:$0xf]
        %v667 = vld [vmem:[%s1 + $0x264] sm:$0xf]
        %v668 = vld [vmem:[%s1 + $0x268] sm:$0xf]
        %v669 = vld [vmem:[%s1 + $0x26c] sm:$0xf]
        %v670 = vld [vmem:[%s1 + $0x270] sm:$0xf]
        %v671 = vld [vmem:[%s1 + $0x274] sm:$0xf]
        %v672 = vld [vmem:[%s1 + $0x278] sm:$0xf]
        %v673 = vld [vmem:[%s1 + $0x27c] sm:$0xf]
        %v674 = vld [vmem:[%s1 + $0x280] sm:$0xf]
        %v675 = vld [vmem:[%s1 + $0x284] sm:$0xf]
        %v676 = vld [vmem:[%s1 + $0x288] sm:$0xf]
        %v677 = vld [vmem:[%s1 + $0x28c] sm:$0xf]
        %v678 = vld [vmem:[%s1 + $0x290] sm:$0xf]
        %v679 = vld [vmem:[%s1 + $0x294] sm:$0xf]
        %v680 = vld [vmem:[%s1 + $0x298] sm:$0xf]
        %v681 = vld [vmem:[%s1 + $0x29c] sm:$0xf]
        %v682 = vld [vmem:[%s1 + $0x2a0] sm:$0xf]
        %v683 = vld [vmem:[%s1 + $0x2a4] sm:$0xf]
        %v684 = vld [vmem:[%s1 + $0x2a8] sm:$0xf]
        %v685 = vld [vmem:[%s1 + $0x2ac] sm:$0xf]
        %v686 = vld [vmem:[%s1 + $0x2b0] sm:$0xf]
        %v687 = vld [vmem:[%s1 + $0x2b4] sm:$0xf]
        %v688 = vld [vmem:[%s1 + $0x2b8] sm:$0xf]
        %v689 = vld [vmem:[%s1 + $0x2bc] sm:$0xf]
        %v690 = vld [vmem:[%s1 + $0x2c0] sm:$0xf]
        %v691 = vld [vmem:[%s1 + $0x2c4] sm:$0xf]
        %v692 = vld [vmem:[%s1 + $0x2c8] sm:$0xf]
        %v693 = vld [vmem:[%s1 + $0x2cc] sm:$0xf]
        %v694 = vld [vmem:[%s1 + $0x2d0] sm:$0xf]
        %v695 = vld [vmem:[%s1 + $0x2d4] sm:$0xf]
        %v696 = vld [vmem:[%s1 + $0x2d8] sm:$0xf]
        %v697 = vld [vmem:[%s1 + $0x2dc] sm:$0xf]
        %v698 = vld [vmem:[%s1 + $0x2e0] sm:$0xf]
        %v699 = vld [vmem:[%s1 + $0x2e4] sm:$0xf]
        %v700 = vld [vmem:[%s1 + $0x2e8] sm:$0xf]
        %v701 = vld [vmem:[%s1 + $0x2ec] sm:$0xf]
        %v702 = vld [vmem:[%s1 + $0x2f0] sm:$0xf]
        %v703 = vld [vmem:[%s1 + $0x2f4] sm:$0xf]
        %v704 = vld [vmem:[%s1 + $0x2f8] sm:$0xf]
        %v705 = vld [vmem:[%s1 + $0x2fc] sm:$0xf]
        %v706 = vld [vmem:[%s1 + $0x300] sm:$0xf]
        %v707 = vld [vmem:[%s1 + $0x304] sm:$0xf]
        %v708 = vld [vmem:[%s1 + $0x308] sm:$0xf]
        %v709 = vld [vmem:[%s1 + $0x30c] sm:$0xf]
        %v710 = vld [vmem:[%s1 + $0x310] sm:$0xf]
        %v711 = vld [vmem:[%s1 + $0x314] sm:$0xf]
        %v712 = vld [vmem:[%s1 + $0x318] sm:$0xf]
        %v713 = vld [vmem:[%s1 + $0x31c] sm:$0xf]
        %v714 = vld [vmem:[%s1 + $0x320] sm:$0xf]
        %v715 = vld [vmem:[%s1 + $0x324] sm:$0xf]
        %v716 = vld [vmem:[%s1 + $0x328] sm:$0xf]
        %v717 = vld [vmem:[%s1 + $0x32c] sm:$0xf]
        %v718 = vld [vmem:[%s1 + $0x330] sm:$0xf]
        %v719 = vld [vmem:[%s1 + $0x334] sm:$0xf]
        %v720 = vld [vmem:[%s1 + $0x338] sm:$0xf]
        %v721 = vld [vmem:[%s1 + $0x33c] sm:$0xf]
        %v722 = vld [vmem:[%s1 + $0x340] sm:$0xf]
        %v723 = vld [vmem:[%s1 + $0x344] sm:$0xf]
        %v724 = vld [vmem:[%s1 + $0x348] sm:$0xf]
        %v725 = vld [vmem:[%s1 + $0x34c] sm:$0xf]
        %v726 = vld [vmem:[%s1 + $0x350] sm:$0xf]
        %v727 = vld [vmem:[%s1 + $0x354] sm:$0xf]
        %v728 = vld [vmem:[%s1 + $0x358] sm:$0xf]
        %v729 = vld [vmem:[%s1 + $0x35c] sm:$0xf]
        %v730 = vld [vmem:[%s1 + $0x360] sm:$0xf]
        %v731 = vld [vmem:[%s1 + $0x364] sm:$0xf]
        %v732 = vld [vmem:[%s1 + $0x368] sm:$0xf]
        %v733 = vld [vmem:[%s1 + $0x36c] sm:$0xf]
        %v734 = vld [vmem:[%s1 + $0x370] sm:$0xf]
        %v735 = vld [vmem:[%s1 + $0x374] sm:$0xf]
        %v736 = vld [vmem:[%s1 + $0x378] sm:$0xf]
        %v737 = vld [vmem:[%s1 + $0x37c] sm:$0xf]
        %v738 = vld [vmem:[%s1 + $0x380] sm:$0xf]
        %v739 = vld [vmem:[%s1 + $0x384] sm:$0xf]
        %v740 = vld [vmem:[%s1 + $0x388] sm:$0xf]
        %v741 = vld [vmem:[%s1 + $0x38c] sm:$0xf]
        %v742 = vld [vmem:[%s1 + $0x390] sm:$0xf]
        %v743 = vld [vmem:[%s1 + $0x394] sm:$0xf]
        %v744 = vld [vmem:[%s1 + $0x398] sm:$0xf]
        %v745 = vld [vmem:[%s1 + $0x39c] sm:$0xf]
        %v746 = vld [vmem:[%s1 + $0x3a0] sm:$0xf]
        %v747 = vld [vmem:[%s1 + $0x3a4] sm:$0xf]
        %v748 = vld [vmem:[%s1 + $0x3a8] sm:$0xf]
        %v749 = vld [vmem:[%s1 + $0x3ac] sm:$0xf]
        %v750 = vld [vmem:[%s1 + $0x3b0] sm:$0xf]
        %v751 = vld [vmem:[%s1 + $0x3b4] sm:$0xf]
        %v752 = vld [vmem:[%s1 + $0x3b8] sm:$0xf]
        %v753 = vld [vmem:[%s1 + $0x3bc] sm:$0xf]
        %v754 = vld [vmem:[%s1 + $0x3c0] sm:$0xf]
        %v755 = vld [vmem:[%s1 + $0x3c4] sm:$0xf]
        %v756 = vld [vmem:[%s1 + $0x3c8] sm:$0xf]
        %v757 = vld [vmem:[%s1 + $0x3cc] sm:$0xf]
        %v758 = vld [vmem:[%s1 + $0x3d0] sm:$0xf]
        %v759 = vld [vmem:[%s1 + $0x3d4] sm:$0xf]
        %v760 = vld [vmem:[%s1 + $0x3d8] sm:$0xf]
        %v761 = vld [vmem:[%s1 + $0x3dc] sm:$0xf]
        %v762 = vld [vmem:[%s1 + $0x3e0] sm:$0xf]
        %v763 = vld [vmem:[%s1 + $0x3e4] sm:$0xf]
        %v764 = vld [vmem:[%s1 + $0x3e8] sm:$0xf]
        %v765 = vld [vmem:[%s1 + $0x3ec] sm:$0xf]
        %v766 = vld [vmem:[%s1 + $0x3f0] sm:$0xf]
        %v767 = vld [vmem:[%s1 + $0x3f4] sm:$0xf]
        %v768 = vld [vmem:[%s1 + $0x3f8] sm:$0xf]
        %v769 = vld [vmem:[%s1 + $0x3fc] sm:$0xf]
        %v770 = vld [vmem:[%s1 + $0x400] sm:$0xf]
        %v771 = vld [vmem:[%s1 + $0x404] sm:$0xf]
        %v772 = vld [vmem:[%s1 + $0x408] sm:$0xf]
        %v773 = vld [vmem:[%s1 + $0x40c] sm:$0xf]
        %v774 = vld [vmem:[%s1 + $0x410] sm:$0xf]
        %v775 = vld [vmem:[%s1 + $0x414] sm:$0xf]
        %v776 = vld [vmem:[%s1 + $0x418] sm:$0xf]
        %v777 = vld [vmem:[%s1 + $0x41c] sm:$0xf]
        %v778 = vld [vmem:[%s1 + $0x420] sm:$0xf]
        %v779 = vld [vmem:[%s1 + $0x424] sm:$0xf]
        %v780 = vld [vmem:[%s1 + $0x428] sm:$0xf]
        %v781 = vld [vmem:[%s1 + $0x42c] sm:$0xf]
        %v782 = vld [vmem:[%s1 + $0x430] sm:$0xf]
        %v783 = vld [vmem:[%s1 + $0x434] sm:$0xf]
        %v784 = vld [vmem:[%s1 + $0x438] sm:$0xf]
        %v785 = vld [vmem:[%s1 + $0x43c] sm:$0xf]
        %v786 = vld [vmem:[%s1 + $0x440] sm:$0xf]
        %v787 = vld [vmem:[%s1 + $0x444] sm:$0xf]
        %v788 = vld [vmem:[%s1 + $0x448] sm:$0xf]
        %v789 = vld [vmem:[%s1 + $0x44c] sm:$0xf]
        %v790 = vld [vmem:[%s1 + $0x450] sm:$0xf]
        %v791 = vld [vmem:[%s1 + $0x454] sm:$0xf]
        %v792 = vld [vmem:[%s1 + $0x458] sm:$0xf]
        %v793 = vld [vmem:[%s1 + $0x45c] sm:$0xf]
        %v794 = vld [vmem:[%s1 + $0x460] sm:$0xf]
        %v795 = vld [vmem:[%s1 + $0x464] sm:$0xf]
        %v796 = vld [vmem:[%s1 + $0x468] sm:$0xf]
        %v797 = vld [vmem:[%s1 + $0x46c] sm:$0xf]
        %v798 = vld [vmem:[%s1 + $0x470] sm:$0xf]
        %v799 = vld [vmem:[%s1 + $0x474] sm:$0xf]
        %v800 = vld [vmem:[%s1 + $0x478] sm:$0xf]
        %v801 = vld [vmem:[%s1 + $0x47c] sm:$0xf]
        %v802 = vld [vmem:[%s1 + $0x480] sm:$0xf]
        %v803 = vld [vmem:[%s1 + $0x484] sm:$0xf]
        %v804 = vld [vmem:[%s1 + $0x488] sm:$0xf]
        %v805 = vld [vmem:[%s1 + $0x48c] sm:$0xf]
        %v806 = vld [vmem:[%s1 + $0x490] sm:$0xf]
        %v807 = vld [vmem:[%s1 + $0x494] sm:$0xf]
        %v808 = vld [vmem:[%s1 + $0x498] sm:$0xf]
        %v809 = vld [vmem:[%s1 + $0x49c] sm:$0xf]
        %v810 = vld [vmem:[%s1 + $0x4a0] sm:$0xf]
        %v811 = vld [vmem:[%s1 + $0x4a4] sm:$0xf]
        %v812 = vld [vmem:[%s1 + $0x4a8] sm:$0xf]
        %v813 = vld [vmem:[%s1 + $0x4ac] sm:$0xf]
        %v814 = vld [vmem:[%s1 + $0x4b0] sm:$0xf]
        %v815 = vld [vmem:[%s1 + $0x4b4] sm:$0xf]
        %v816 = vld [vmem:[%s1 + $0x4b8] sm:$0xf]
        %v817 = vld [vmem:[%s1 + $0x4bc] sm:$0xf]
        %v818 = vld [vmem:[%s1 + $0x4c0] sm:$0xf]
        %v819 = vld [vmem:[%s1 + $0x4c4] sm:$0xf]
        %v820 = vld [vmem:[%s1 + $0x4c8] sm:$0xf]
        %v821 = vld [vmem:[%s1 + $0x4cc] sm:$0xf]
        %v822 = vld [vmem:[%s1 + $0x4d0] sm:$0xf]
        %v823 = vld [vmem:[%s1 + $0x4d4] sm:$0xf]
        %v824 = vld [vmem:[%s1 + $0x4d8] sm:$0xf]
        %v825 = vld [vmem:[%s1 + $0x4dc] sm:$0xf]
        %v826 = vld [vmem:[%s1 + $0x4e0] sm:$0xf]
        %v827 = vld [vmem:[%s1 + $0x4e4] sm:$0xf]
        %v828 = vld [vmem:[%s1 + $0x4e8] sm:$0xf]
        %v829 = vld [vmem:[%s1 + $0x4ec] sm:$0xf]
        %v830 = vld [vmem:[%s1 + $0x4f0] sm:$0xf]
        %v831 = vld [vmem:[%s1 + $0x4f4] sm:$0xf]
        %v832 = vld [vmem:[%s1 + $0x4f8] sm:$0xf]
        %v833 = vld [vmem:[%s1 + $0x4fc] sm:$0xf]
        %v834 = vld [vmem:[%s1 + $0x500] sm:$0xf]
        %v835 = vld [vmem:[%s1 + $0x504] sm:$0xf]
        %v836 = vld [vmem:[%s1 + $0x508] sm:$0xf]
        %v837 = vld [vmem:[%s1 + $0x50c] sm:$0xf]
        %v838 = vld [vmem:[%s1 + $0x510] sm:$0xf]
        %v839 = vld [vmem:[%s1 + $0x514] sm:$0xf]
        %v840 = vld [vmem:[%s1 + $0x518] sm:$0xf]
        %v841 = vld [vmem:[%s1 + $0x51c] sm:$0xf]
        %v842 = vld [vmem:[%s1 + $0x520] sm:$0xf]
        %v843 = vld [vmem:[%s1 + $0x524] sm:$0xf]
        %v844 = vld [vmem:[%s1 + $0x528] sm:$0xf]
        %v845 = vld [vmem:[%s1 + $0x52c] sm:$0xf]
        %v846 = vld [vmem:[%s1 + $0x530] sm:$0xf]
        %v847 = vld [vmem:[%s1 + $0x534] sm:$0xf]
        %v848 = vld [vmem:[%s1 + $0x538] sm:$0xf]
        %v849 = vld [vmem:[%s1 + $0x53c] sm:$0xf]
        %v850 = vld [vmem:[%s1 + $0x540] sm:$0xf]
        %v851 = vld [vmem:[%s1 + $0x544] sm:$0xf]
        %v852 = vld [vmem:[%s1 + $0x548] sm:$0xf]
        %v853 = vld [vmem:[%s1 + $0x54c] sm:$0xf]
        %v854 = vld [vmem:[%s1 + $0x550] sm:$0xf]
        %v855 = vld [vmem:[%s1 + $0x554] sm:$0xf]
        %v856 = vld [vmem:[%s1 + $0x558] sm:$0xf]
        %v857 = vld [vmem:[%s1 + $0x55c] sm:$0xf]
        %v858 = vld [vmem:[%s1 + $0x560] sm:$0xf]
        %v859 = vld [vmem:[%s1 + $0x564] sm:$0xf]
        %v860 = vld [vmem:[%s1 + $0x568] sm:$0xf]
        %v861 = vld [vmem:[%s1 + $0x56c] sm:$0xf]
        %v862 = vld [vmem:[%s1 + $0x570] sm:$0xf]
        %v863 = vld [vmem:[%s1 + $0x574] sm:$0xf]
        %v864 = vld [vmem:[%s1 + $0x578] sm:$0xf]
        %v865 = vld [vmem:[%s1 + $0x57c] sm:$0xf]
        %v866 = vld [vmem:[%s1 + $0x580] sm:$0xf]
        %v867 = vld [vmem:[%s1 + $0x584] sm:$0xf]
        %v868 = vld [vmem:[%s1 + $0x588] sm:$0xf]
        %v869 = vld [vmem:[%s1 + $0x58c] sm:$0xf]
        %v870 = vld [vmem:[%s1 + $0x590] sm:$0xf]
        %v871 = vld [vmem:[%s1 + $0x594] sm:$0xf]
        %v872 = vld [vmem:[%s1 + $0x598] sm:$0xf]
        %v873 = vld [vmem:[%s1 + $0x59c] sm:$0xf]
        %v874 = vld [vmem:[%s1 + $0x5a0] sm:$0xf]
        %v875 = vld [vmem:[%s1 + $0x5a4] sm:$0xf]
        %v876 = vld [vmem:[%s1 + $0x5a8] sm:$0xf]
        %v877 = vld [vmem:[%s1 + $0x5ac] sm:$0xf]
        %v878 = vld [vmem:[%s1 + $0x5b0] sm:$0xf]
        %v879 = vld [vmem:[%s1 + $0x5b4] sm:$0xf]
        %v880 = vld [vmem:[%s1 + $0x5b8] sm:$0xf]
        %v881 = vld [vmem:[%s1 + $0x5bc] sm:$0xf]
        %v882 = vld [vmem:[%s1 + $0x5c0] sm:$0xf]
        %v883 = vld [vmem:[%s1 + $0x5c4] sm:$0xf]
        %v884 = vld [vmem:[%s1 + $0x5c8] sm:$0xf]
        %v885 = vld [vmem:[%s1 + $0x5cc] sm:$0xf]
        %v886 = vld [vmem:[%s1 + $0x5d0] sm:$0xf]
        %v887 = vld [vmem:[%s1 + $0x5d4] sm:$0xf]
        %v888 = vld [vmem:[%s1 + $0x5d8] sm:$0xf]
        %v889 = vld [vmem:[%s1 + $0x5dc] sm:$0xf]
        %v890 = vld [vmem:[%s1 + $0x5e0] sm:$0xf]
        %v891 = vld [vmem:[%s1 + $0x5e4] sm:$0xf]
        %v892 = vld [vmem:[%s1 + $0x5e8] sm:$0xf]
        %v893 = vld [vmem:[%s1 + $0x5ec] sm:$0xf]
        %v894 = vld [vmem:[%s1 + $0x5f0] sm:$0xf]
        %v895 = vld [vmem:[%s1 + $0x5f4] sm:$0xf]
        %v896 = vld [vmem:[%s1 + $0x5f8] sm:$0xf]
        %v897 = vld [vmem:[%s1 + $0x5fc] sm:$0xf]
        %v898 = vld [vmem:[%s1 + $0x600] sm:$0xf]
        %v899 = vld [vmem:[%s1 + $0x604] sm:$0xf]
        %v900 = vld [vmem:[%s1 + $0x608] sm:$0xf]
        %v901 = vld [vmem:[%s1 + $0x60c] sm:$0xf]
        %v902 = vld [vmem:[%s1 + $0x610] sm:$0xf]
        %v903 = vld [vmem:[%s1 + $0x614] sm:$0xf]
        %v904 = vld [vmem:[%s1 + $0x618] sm:$0xf]
        %v905 = vld [vmem:[%s1 + $0x61c] sm:$0xf]
        %v1010 = vunpack.c.l.b16 %v410
        %v1011 = vunpack.c.h.b16 %v410
        %v1012 = vunpack.c.l.b16 %v411
        %v1013 = vunpack.c.h.b16 %v411
        %v1014 = vunpack.c.l.b16 %v412
        %v1015 = vunpack.c.h.b16 %v412
        %v1016 = vunpack.c.l.b16 %v413
        %v1017 = vunpack.c.h.b16 %v413
        %v1018 = vunpack.c.l.b16 %v414
        %v1019 = vunpack.c.h.b16 %v414
        %v1020 = vunpack.c.l.b16 %v415
        %v1021 = vunpack.c.h.b16 %v415
        %v1022 = vunpack.c.l.b16 %v416
        %v1023 = vunpack.c.h.b16 %v416
        %v1024 = vunpack.c.l.b16 %v417
        %v1025 = vunpack.c.h.b16 %v417
        %v1026 = vunpack.c.l.b16 %v418
        %v1027 = vunpack.c.h.b16 %v418
        %v1028 = vunpack.c.l.b16 %v419
        %v1029 = vunpack.c.h.b16 %v419
        %v1030 = vunpack.c.l.b16 %v420
        %v1031 = vunpack.c.h.b16 %v420
        %v1032 = vunpack.c.l.b16 %v421
        %v1033 = vunpack.c.h.b16 %v421
        %v1034 = vunpack.c.l.b16 %v422
        %v1035 = vunpack.c.l.b16 %v423
        %v1036 = vunpack.c.h.b16 %v423
        %v1037 = vunpack.c.l.b16 %v424
        %v1038 = vunpack.c.h.b16 %v424
        %v1039 = vunpack.c.l.b16 %v425
        %v1040 = vunpack.c.h.b16 %v425
        %v1041 = vunpack.c.l.b16 %v426
        %v1042 = vunpack.c.h.b16 %v426
        %v1043 = vunpack.c.l.b16 %v427
        %v1044 = vunpack.c.h.b16 %v427
        %v1045 = vunpack.c.l.b16 %v428
        %v1046 = vunpack.c.h.b16 %v428
        %v1047 = vunpack.c.l.b16 %v429
        %v1048 = vunpack.c.h.b16 %v429
        %v1049 = vunpack.c.l.b16 %v430
        %v1050 = vunpack.c.h.b16 %v430
        %v1051 = vunpack.c.l.b16 %v431
        %v1052 = vunpack.c.h.b16 %v431
        %v1053 = vunpack.c.l.b16 %v432
        %v1054 = vunpack.c.h.b16 %v432
        %v1055 = vunpack.c.l.b16 %v433
        %v1056 = vunpack.c.h.b16 %v433
        %v1057 = vunpack.c.l.b16 %v434
        %v1058 = vunpack.c.h.b16 %v434
        %v1059 = vunpack.c.l.b16 %v435
        %v1060 = vunpack.c.l.b16 %v436
        %v1061 = vunpack.c.h.b16 %v436
        %v1062 = vunpack.c.l.b16 %v437
        %v1063 = vunpack.c.h.b16 %v437
        %v1064 = vunpack.c.l.b16 %v438
        %v1065 = vunpack.c.h.b16 %v438
        %v1066 = vunpack.c.l.b16 %v439
        %v1067 = vunpack.c.h.b16 %v439
        %v1068 = vunpack.c.l.b16 %v440
        %v1069 = vunpack.c.h.b16 %v440
        %v1070 = vunpack.c.l.b16 %v441
        %v1071 = vunpack.c.h.b16 %v441
        %v1072 = vunpack.c.l.b16 %v442
        %v1073 = vunpack.c.h.b16 %v442
        %v1074 = vunpack.c.l.b16 %v443
        %v1075 = vunpack.c.h.b16 %v443
        %v1076 = vunpack.c.l.b16 %v444
        %v1077 = vunpack.c.h.b16 %v444
        %v1078 = vunpack.c.l.b16 %v445
        %v1079 = vunpack.c.h.b16 %v445
        %v1080 = vunpack.c.l.b16 %v446
        %v1081 = vunpack.c.h.b16 %v446
        %v1082 = vunpack.c.l.b16 %v447
        %v1083 = vunpack.c.h.b16 %v447
        %v1084 = vunpack.c.l.b16 %v448
        %v1085 = vunpack.c.l.b16 %v449
        %v1086 = vunpack.c.h.b16 %v449
        %v1087 = vunpack.c.l.b16 %v450
        %v1088 = vunpack.c.h.b16 %v450
        %v1089 = vunpack.c.l.b16 %v451
        %v1090 = vunpack.c.h.b16 %v451
        %v1091 = vunpack.c.l.b16 %v452
        %v1092 = vunpack.c.h.b16 %v452
        %v1093 = vunpack.c.l.b16 %v453
        %v1094 = vunpack.c.h.b16 %v453
        %v1095 = vunpack.c.l.b16 %v454
        %v1096 = vunpack.c.h.b16 %v454
        %v1097 = vunpack.c.l.b16 %v455
        %v1098 = vunpack.c.h.b16 %v455
        %v1099 = vunpack.c.l.b16 %v456
        %v1100 = vunpack.c.h.b16 %v456
        %v1101 = vunpack.c.l.b16 %v457
        %v1102 = vunpack.c.h.b16 %v457
        %v1103 = vunpack.c.l.b16 %v458
        %v1104 = vunpack.c.h.b16 %v458
        %v1105 = vunpack.c.l.b16 %v459
        %v1106 = vunpack.c.h.b16 %v459
        %v1107 = vunpack.c.l.b16 %v460
        %v1108 = vunpack.c.h.b16 %v460
        %v1109 = vunpack.c.l.b16 %v461
        %v1110 = vunpack.c.l.b16 %v462
        %v1111 = vunpack.c.h.b16 %v462
        %v1112 = vunpack.c.l.b16 %v463
        %v1113 = vunpack.c.h.b16 %v463
        %v1114 = vunpack.c.l.b16 %v464
        %v1115 = vunpack.c.h.b16 %v464
        %v1116 = vunpack.c.l.b16 %v465
        %v1117 = vunpack.c.h.b16 %v465
        %v1118 = vunpack.c.l.b16 %v466
        %v1119 = vunpack.c.h.b16 %v466
        %v1120 = vunpack.c.l.b16 %v467
        %v1121 = vunpack.c.h.b16 %v467
        %v1122 = vunpack.c.l.b16 %v468
        %v1123 = vunpack.c.h.b16 %v468
        %v1124 = vunpack.c.l.b16 %v469
        %v1125 = vunpack.c.h.b16 %v469
        %v1126 = vunpack.c.l.b16 %v470
        %v1127 = vunpack.c.h.b16 %v470
        %v1128 = vunpack.c.l.b16 %v471
        %v1129 = vunpack.c.h.b16 %v471
        %v1130 = vunpack.c.l.b16 %v472
        %v1131 = vunpack.c.h.b16 %v472
        %v1132 = vunpack.c.l.b16 %v473
        %v1133 = vunpack.c.h.b16 %v473
        %v1134 = vunpack.c.l.b16 %v474
        %v1135 = vunpack.c.l.b16 %v475
        %v1136 = vunpack.c.h.b16 %v475
        %v1137 = vunpack.c.l.b16 %v476
        %v1138 = vunpack.c.h.b16 %v476
        %v1139 = vunpack.c.l.b16 %v477
        %v1140 = vunpack.c.h.b16 %v477
        %v1141 = vunpack.c.l.b16 %v478
        %v1142 = vunpack.c.h.b16 %v478
        %v1143 = vunpack.c.l.b16 %v479
        %v1144 = vunpack.c.h.b16 %v479
        %v1145 = vunpack.c.l.b16 %v480
        %v1146 = vunpack.c.h.b16 %v480
        %v1147 = vunpack.c.l.b16 %v481
        %v1148 = vunpack.c.h.b16 %v481
        %v1149 = vunpack.c.l.b16 %v482
        %v1150 = vunpack.c.h.b16 %v482
        %v1151 = vunpack.c.l.b16 %v483
        %v1152 = vunpack.c.h.b16 %v483
        %v1153 = vunpack.c.l.b16 %v484
        %v1154 = vunpack.c.h.b16 %v484
        %v1155 = vunpack.c.l.b16 %v485
        %v1156 = vunpack.c.h.b16 %v485
        %v1157 = vunpack.c.l.b16 %v486
        %v1158 = vunpack.c.h.b16 %v486
        %v1159 = vunpack.c.l.b16 %v487
        %v1160 = vunpack.c.l.b16 %v488
        %v1161 = vunpack.c.h.b16 %v488
        %v1162 = vunpack.c.l.b16 %v489
        %v1163 = vunpack.c.h.b16 %v489
        %v1164 = vunpack.c.l.b16 %v490
        %v1165 = vunpack.c.h.b16 %v490
        %v1166 = vunpack.c.l.b16 %v491
        %v1167 = vunpack.c.h.b16 %v491
        %v1168 = vunpack.c.l.b16 %v492
        %v1169 = vunpack.c.h.b16 %v492
        %v1170 = vunpack.c.l.b16 %v493
        %v1171 = vunpack.c.h.b16 %v493
        %v1172 = vunpack.c.l.b16 %v494
        %v1173 = vunpack.c.h.b16 %v494
        %v1174 = vunpack.c.l.b16 %v495
        %v1175 = vunpack.c.h.b16 %v495
        %v1176 = vunpack.c.l.b16 %v496
        %v1177 = vunpack.c.h.b16 %v496
        %v1178 = vunpack.c.l.b16 %v497
        %v1179 = vunpack.c.h.b16 %v497
        %v1180 = vunpack.c.l.b16 %v498
        %v1181 = vunpack.c.h.b16 %v498
        %v1182 = vunpack.c.l.b16 %v499
        %v1183 = vunpack.c.h.b16 %v499
        %v1184 = vunpack.c.l.b16 %v500
        %v1185 = vunpack.c.l.b16 %v501
        %v1186 = vunpack.c.h.b16 %v501
        %v1187 = vunpack.c.l.b16 %v502
        %v1188 = vunpack.c.h.b16 %v502
        %v1189 = vunpack.c.l.b16 %v503
        %v1190 = vunpack.c.h.b16 %v503
        %v1191 = vunpack.c.l.b16 %v504
        %v1192 = vunpack.c.h.b16 %v504
        %v1193 = vunpack.c.l.b16 %v505
        %v1194 = vunpack.c.h.b16 %v505
        %v1195 = vunpack.c.l.b16 %v506
        %v1196 = vunpack.c.h.b16 %v506
        %v1197 = vunpack.c.l.b16 %v507
        %v1198 = vunpack.c.h.b16 %v507
        %v1199 = vunpack.c.l.b16 %v508
        %v1200 = vunpack.c.h.b16 %v508
        %v1201 = vunpack.c.l.b16 %v509
        %v1202 = vunpack.c.h.b16 %v509
        %v1203 = vunpack.c.l.b16 %v510
        %v1204 = vunpack.c.h.b16 %v510
        %v1205 = vunpack.c.l.b16 %v511
        %v1206 = vunpack.c.h.b16 %v511
        %v1207 = vunpack.c.l.b16 %v512
        %v1208 = vunpack.c.h.b16 %v512
        %v1209 = vunpack.c.l.b16 %v513
        %v1210 = vpack.c.b16 %v1035, %v1010
        %v1211 = vpack.c.b16 %v1036, %v1011
        %v1212 = vpack.c.b16 %v1037, %v1012
        %v1213 = vpack.c.b16 %v1038, %v1013
        %v1214 = vpack.c.b16 %v1039, %v1014
        %v1215 = vpack.c.b16 %v1040, %v1015
        %v1216 = vpack.c.b16 %v1041, %v1016
        %v1217 = vpack.c.b16 %v1042, %v1017
        %v1218 = vpack.c.b16 %v1043, %v1018
        %v1219 = vpack.c.b16 %v1044, %v1019
        %v1220 = vpack.c.b16 %v1045, %v1020
        %v1221 = vpack.c.b16 %v1046, %v1021
        %v1222 = vpack.c.b16 %v1047, %v1022
        %v1223 = vpack.c.b16 %v1048, %v1023
        %v1224 = vpack.c.b16 %v1049, %v1024
        %v1225 = vpack.c.b16 %v1050, %v1025
        %v1226 = vpack.c.b16 %v1051, %v1026
        %v1227 = vpack.c.b16 %v1052, %v1027
        %v1228 = vpack.c.b16 %v1053, %v1028
        %v1229 = vpack.c.b16 %v1054, %v1029
        %v1230 = vpack.c.b16 %v1055, %v1030
        %v1231 = vpack.c.b16 %v1056, %v1031
        %v1232 = vpack.c.b16 %v1057, %v1032
        %v1233 = vpack.c.b16 %v1058, %v1033
        %v1234 = vpack.c.b16 %v1059, %v1034
        %v1235 = vpack.c.b16 %v1085, %v1060
        %v1236 = vpack.c.b16 %v1086, %v1061
        %v1237 = vpack.c.b16 %v1087, %v1062
        %v1238 = vpack.c.b16 %v1088, %v1063
        %v1239 = vpack.c.b16 %v1089, %v1064
        %v1240 = vpack.c.b16 %v1090, %v1065
        %v1241 = vpack.c.b16 %v1091, %v1066
        %v1242 = vpack.c.b16 %v1092, %v1067
        %v1243 = vpack.c.b16 %v1093, %v1068
        %v1244 = vpack.c.b16 %v1094, %v1069
        %v1245 = vpack.c.b16 %v1095, %v1070
        %v1246 = vpack.c.b16 %v1096, %v1071
        %v1247 = vpack.c.b16 %v1097, %v1072
        %v1248 = vpack.c.b16 %v1098, %v1073
        %v1249 = vpack.c.b16 %v1099, %v1074
        %v1250 = vpack.c.b16 %v1100, %v1075
        %v1251 = vpack.c.b16 %v1101, %v1076
        %v1252 = vpack.c.b16 %v1102, %v1077
        %v1253 = vpack.c.b16 %v1103, %v1078
        %v1254 = vpack.c.b16 %v1104, %v1079
        %v1255 = vpack.c.b16 %v1105, %v1080
        %v1256 = vpack.c.b16 %v1106, %v1081
        %v1257 = vpack.c.b16 %v1107, %v1082
        %v1258 = vpack.c.b16 %v1108, %v1083
        %v1259 = vpack.c.b16 %v1109, %v1084
        %v1260 = vpack.c.b16 %v1135, %v1110
        %v1261 = vpack.c.b16 %v1136, %v1111
        %v1262 = vpack.c.b16 %v1137, %v1112
        %v1263 = vpack.c.b16 %v1138, %v1113
        %v1264 = vpack.c.b16 %v1139, %v1114
        %v1265 = vpack.c.b16 %v1140, %v1115
        %v1266 = vpack.c.b16 %v1141, %v1116
        %v1267 = vpack.c.b16 %v1142, %v1117
        %v1268 = vpack.c.b16 %v1143, %v1118
        %v1269 = vpack.c.b16 %v1144, %v1119
        %v1270 = vpack.c.b16 %v1145, %v1120
        %v1271 = vpack.c.b16 %v1146, %v1121
        %v1272 = vpack.c.b16 %v1147, %v1122
        %v1273 = vpack.c.b16 %v1148, %v1123
        %v1274 = vpack.c.b16 %v1149, %v1124
        %v1275 = vpack.c.b16 %v1150, %v1125
        %v1276 = vpack.c.b16 %v1151, %v1126
        %v1277 = vpack.c.b16 %v1152, %v1127
        %v1278 = vpack.c.b16 %v1153, %v1128
        %v1279 = vpack.c.b16 %v1154, %v1129
        %v1280 = vpack.c.b16 %v1155, %v1130
        %v1281 = vpack.c.b16 %v1156, %v1131
        %v1282 = vpack.c.b16 %v1157, %v1132
        %v1283 = vpack.c.b16 %v1158, %v1133
        %v1284 = vpack.c.b16 %v1159, %v1134
        %v1285 = vpack.c.b16 %v1185, %v1160
        %v1286 = vpack.c.b16 %v1186, %v1161
        %v1287 = vpack.c.b16 %v1187, %v1162
        %v1288 = vpack.c.b16 %v1188, %v1163
        %v1289 = vpack.c.b16 %v1189, %v1164
        %v1290 = vpack.c.b16 %v1190, %v1165
        %v1291 = vpack.c.b16 %v1191, %v1166
        %v1292 = vpack.c.b16 %v1192, %v1167
        %v1293 = vpack.c.b16 %v1193, %v1168
        %v1294 = vpack.c.b16 %v1194, %v1169
        %v1295 = vpack.c.b16 %v1195, %v1170
        %v1296 = vpack.c.b16 %v1196, %v1171
        %v1297 = vpack.c.b16 %v1197, %v1172
        %v1298 = vpack.c.b16 %v1198, %v1173
        %v1299 = vpack.c.b16 %v1199, %v1174
        %v1300 = vpack.c.b16 %v1200, %v1175
        %v1301 = vpack.c.b16 %v1201, %v1176
        %v1302 = vpack.c.b16 %v1202, %v1177
        %v1303 = vpack.c.b16 %v1203, %v1178
        %v1304 = vpack.c.b16 %v1204, %v1179
        %v1305 = vpack.c.b16 %v1205, %v1180
        %v1306 = vpack.c.b16 %v1206, %v1181
        %v1307 = vpack.c.b16 %v1207, %v1182
        %v1308 = vpack.c.b16 %v1208, %v1183
        %v1309 = vpack.c.b16 %v1209, %v1184
        %v1798 = vunpack.c.l.b16 %v514
        %v1799 = vunpack.c.l.b16 %v515
        %v1800 = vunpack.c.l.b16 %v516
        %v1801 = vunpack.c.l.b16 %v517
        %v1802 = vunpack.c.l.b16 %v518
        %v1803 = vunpack.c.l.b16 %v519
        %v1804 = vunpack.c.l.b16 %v520
        %v1805 = vunpack.c.l.b16 %v521
        %v1806 = vunpack.c.l.b16 %v522
        %v1807 = vunpack.c.l.b16 %v523
        %v1808 = vunpack.c.l.b16 %v524
        %v1809 = vunpack.c.l.b16 %v525
        %v1810 = vunpack.c.l.b16 %v526
        %v1811 = vunpack.c.l.b16 %v527
        %v1812 = vunpack.c.l.b16 %v528
        %v1813 = vunpack.c.l.b16 %v529
        %v1814 = vunpack.c.l.b16 %v530
        %v1815 = vunpack.c.l.b16 %v531
        %v1816 = vunpack.c.l.b16 %v532
        %v1817 = vunpack.c.l.b16 %v533
        %v1818 = vunpack.c.l.b16 %v534
        %v1819 = vunpack.c.l.b16 %v535
        %v1820 = vunpack.c.l.b16 %v536
        %v1821 = vunpack.c.l.b16 %v537
        %v1822 = vunpack.c.l.b16 %v538
        %v1823 = vunpack.c.l.b16 %v539
        %v1824 = vunpack.c.l.b16 %v540
        %v1825 = vunpack.c.l.b16 %v541
        %v1826 = vunpack.c.l.b16 %v542
        %v1827 = vunpack.c.l.b16 %v543
        %v1828 = vunpack.c.l.b16 %v544
        %v1829 = vunpack.c.l.b16 %v545
        %v1830 = vunpack.c.l.b16 %v546
        %v1831 = vunpack.c.l.b16 %v547
        %v1832 = vunpack.c.l.b16 %v548
        %v1833 = vunpack.c.l.b16 %v549
        %v1834 = vunpack.c.l.b16 %v550
        %v1835 = vunpack.c.l.b16 %v551
        %v1836 = vunpack.c.l.b16 %v552
        %v1837 = vunpack.c.l.b16 %v553
        %v1838 = vunpack.c.l.b16 %v554
        %v1839 = vunpack.c.l.b16 %v555
        %v1840 = vunpack.c.l.b16 %v556
        %v1841 = vunpack.c.l.b16 %v557
        %v1842 = vunpack.c.l.b16 %v558
        %v1843 = vunpack.c.l.b16 %v559
        %v1844 = vunpack.c.l.b16 %v560
        %v1845 = vunpack.c.l.b16 %v561
        %v1846 = vunpack.c.l.b16 %v562
        %v1847 = vunpack.c.l.b16 %v563
        %v1848 = vunpack.c.l.b16 %v564
        %v1849 = vunpack.c.l.b16 %v565
        %v1850 = vunpack.c.l.b16 %v566
        %v1851 = vunpack.c.l.b16 %v567
        %v1852 = vunpack.c.l.b16 %v568
        %v1853 = vunpack.c.l.b16 %v569
        %v1854 = vunpack.c.l.b16 %v570
        %v1855 = vunpack.c.l.b16 %v571
        %v1856 = vunpack.c.l.b16 %v572
        %v1857 = vunpack.c.l.b16 %v573
        %v1858 = vunpack.c.l.b16 %v574
        %v1859 = vunpack.c.l.b16 %v575
        %v1860 = vunpack.c.l.b16 %v576
        %v1861 = vunpack.c.l.b16 %v577
        %v1862 = vunpack.c.l.b16 %v578
        %v1863 = vunpack.c.l.b16 %v579
        %v1864 = vunpack.c.l.b16 %v580
        %v1865 = vunpack.c.l.b16 %v581
        %v1866 = vunpack.c.l.b16 %v582
        %v1867 = vunpack.c.l.b16 %v583
        %v1868 = vunpack.c.l.b16 %v584
        %v1869 = vunpack.c.l.b16 %v585
        %v1870 = vunpack.c.l.b16 %v586
        %v1871 = vunpack.c.l.b16 %v587
        %v1872 = vunpack.c.l.b16 %v588
        %v1873 = vunpack.c.l.b16 %v589
        %v1874 = vunpack.c.l.b16 %v590
        %v1875 = vunpack.c.l.b16 %v591
        %v1876 = vunpack.c.l.b16 %v592
        %v1877 = vunpack.c.l.b16 %v593
        %v1878 = vunpack.c.l.b16 %v594
        %v1879 = vunpack.c.l.b16 %v595
        %v1880 = vunpack.c.l.b16 %v596
        %v1881 = vunpack.c.l.b16 %v597
        %v1882 = vunpack.c.l.b16 %v598
        %v1883 = vunpack.c.l.b16 %v599
        %v1884 = vunpack.c.l.b16 %v600
        %v1885 = vunpack.c.l.b16 %v601
        %v1886 = vunpack.c.l.b16 %v602
        %v1887 = vunpack.c.l.b16 %v603
        %v1888 = vunpack.c.l.b16 %v604
        %v1889 = vunpack.c.l.b16 %v605
        %v1890 = vunpack.c.l.b16 %v606
        %v1891 = vunpack.c.l.b16 %v607
        %v1892 = vunpack.c.l.b16 %v608
        %v1893 = vunpack.c.l.b16 %v609
        %v1894 = vunpack.c.l.b16 %v610
        %v1895 = vunpack.c.l.b16 %v611
        %v1896 = vunpack.c.l.b16 %v612
        %v1897 = vunpack.c.l.b16 %v613
        %v1898 = vunpack.c.l.b16 %v614
        %v1899 = vunpack.c.l.b16 %v615
        %v1900 = vunpack.c.l.b16 %v616
        %v1901 = vunpack.c.l.b16 %v617
        %v1902 = vunpack.c.l.b16 %v618
        %v1903 = vunpack.c.l.b16 %v619
        %v1904 = vunpack.c.l.b16 %v620
        %v1905 = vunpack.c.l.b16 %v621
        %v1906 = vunpack.c.l.b16 %v622
        %v1907 = vunpack.c.l.b16 %v623
        %v1908 = vunpack.c.l.b16 %v624
        %v1909 = vunpack.c.l.b16 %v625
        %v1910 = vunpack.c.l.b16 %v626
        %v1911 = vunpack.c.l.b16 %v627
        %v1912 = vunpack.c.l.b16 %v628
        %v1913 = vunpack.c.l.b16 %v629
        %v1914 = vunpack.c.l.b16 %v630
        %v1915 = vunpack.c.l.b16 %v631
        %v1916 = vunpack.c.l.b16 %v632
        %v1917 = vunpack.c.l.b16 %v633
        %v1918 = vunpack.c.l.b16 %v634
        %v1919 = vunpack.c.l.b16 %v635
        %v1920 = vunpack.c.l.b16 %v636
        %v1921 = vunpack.c.l.b16 %v637
        %v1922 = vunpack.c.l.b16 %v638
        %v1923 = vunpack.c.l.b16 %v639
        %v1924 = vunpack.c.l.b16 %v640
        %v1925 = vunpack.c.l.b16 %v641
        %v1926 = vunpack.c.l.b16 %v642
        %v1927 = vunpack.c.l.b16 %v643
        %v1928 = vunpack.c.l.b16 %v644
        %v1929 = vunpack.c.l.b16 %v645
        %v1930 = vunpack.c.l.b16 %v646
        %v1931 = vunpack.c.l.b16 %v647
        %v1932 = vunpack.c.l.b16 %v648
        %v1933 = vunpack.c.l.b16 %v649
        %v1934 = vunpack.c.l.b16 %v650
        %v1935 = vunpack.c.l.b16 %v651
        %v1936 = vunpack.c.l.b16 %v652
        %v1937 = vunpack.c.l.b16 %v653
        %v1938 = vunpack.c.l.b16 %v654
        %v1939 = vunpack.c.l.b16 %v655
        %v1940 = vunpack.c.l.b16 %v656
        %v1941 = vunpack.c.l.b16 %v657
        %v1942 = vunpack.c.l.b16 %v658
        %v1943 = vunpack.c.l.b16 %v659
        %v1944 = vunpack.c.l.b16 %v660
        %v1945 = vunpack.c.l.b16 %v661
        %v1946 = vunpack.c.l.b16 %v662
        %v1947 = vunpack.c.l.b16 %v663
        %v1948 = vunpack.c.l.b16 %v664
        %v1949 = vunpack.c.l.b16 %v665
        %v1950 = vunpack.c.l.b16 %v666
        %v1951 = vunpack.c.l.b16 %v667
        %v1952 = vunpack.c.l.b16 %v668
        %v1953 = vunpack.c.l.b16 %v669
        %v1954 = vunpack.c.l.b16 %v670
        %v1955 = vunpack.c.l.b16 %v671
        %v1956 = vunpack.c.l.b16 %v672
        %v1957 = vunpack.c.l.b16 %v673
        %v1958 = vunpack.c.l.b16 %v674
        %v1959 = vunpack.c.l.b16 %v675
        %v1960 = vunpack.c.l.b16 %v676
        %v1961 = vunpack.c.l.b16 %v677
        %v1962 = vunpack.c.l.b16 %v678
        %v1963 = vunpack.c.l.b16 %v679
        %v1964 = vunpack.c.l.b16 %v680
        %v1965 = vunpack.c.l.b16 %v681
        %v1966 = vunpack.c.l.b16 %v682
        %v1967 = vunpack.c.l.b16 %v683
        %v1968 = vunpack.c.l.b16 %v684
        %v1969 = vunpack.c.l.b16 %v685
        %v1970 = vunpack.c.l.b16 %v686
        %v1971 = vunpack.c.l.b16 %v687
        %v1972 = vunpack.c.l.b16 %v688
        %v1973 = vunpack.c.l.b16 %v689
        %v1974 = vunpack.c.l.b16 %v690
        %v1975 = vunpack.c.l.b16 %v691
        %v1976 = vunpack.c.l.b16 %v692
        %v1977 = vunpack.c.l.b16 %v693
        %v1978 = vunpack.c.l.b16 %v694
        %v1979 = vunpack.c.l.b16 %v695
        %v1980 = vunpack.c.l.b16 %v696
        %v1981 = vunpack.c.l.b16 %v697
        %v1982 = vunpack.c.l.b16 %v698
        %v1983 = vunpack.c.l.b16 %v699
        %v1984 = vunpack.c.l.b16 %v700
        %v1985 = vunpack.c.l.b16 %v701
        %v1986 = vunpack.c.l.b16 %v702
        %v1987 = vunpack.c.l.b16 %v703
        %v1988 = vunpack.c.l.b16 %v704
        %v1989 = vunpack.c.l.b16 %v705
        %v1990 = vunpack.c.l.b16 %v706
        %v1991 = vunpack.c.l.b16 %v707
        %v1992 = vunpack.c.l.b16 %v708
        %v1993 = vunpack.c.l.b16 %v709
        %v1994 = vunpack.c.l.b16 %v710
        %v1995 = vunpack.c.l.b16 %v711
        %v1996 = vunpack.c.l.b16 %v712
        %v1997 = vunpack.c.l.b16 %v713
        %v1998 = vunpack.c.l.b16 %v714
        %v1999 = vunpack.c.l.b16 %v715
        %v2000 = vunpack.c.l.b16 %v716
        %v2001 = vunpack.c.l.b16 %v717
        %v2002 = vunpack.c.l.b16 %v718
        %v2003 = vunpack.c.l.b16 %v719
        %v2004 = vunpack.c.l.b16 %v720
        %v2005 = vunpack.c.l.b16 %v721
        %v2006 = vunpack.c.l.b16 %v722
        %v2007 = vunpack.c.l.b16 %v723
        %v2008 = vunpack.c.l.b16 %v724
        %v2009 = vunpack.c.l.b16 %v725
        %v2010 = vunpack.c.l.b16 %v726
        %v2011 = vunpack.c.l.b16 %v727
        %v2012 = vunpack.c.l.b16 %v728
        %v2013 = vunpack.c.l.b16 %v729
        %v2014 = vunpack.c.l.b16 %v730
        %v2015 = vunpack.c.l.b16 %v731
        %v2016 = vunpack.c.l.b16 %v732
        %v2017 = vunpack.c.l.b16 %v733
        %v2018 = vunpack.c.l.b16 %v734
        %v2019 = vunpack.c.l.b16 %v735
        %v2020 = vunpack.c.l.b16 %v736
        %v2021 = vunpack.c.l.b16 %v737
        %v2022 = vunpack.c.l.b16 %v738
        %v2023 = vunpack.c.l.b16 %v739
        %v2024 = vunpack.c.l.b16 %v740
        %v2025 = vunpack.c.l.b16 %v741
        %v2026 = vunpack.c.l.b16 %v742
        %v2027 = vunpack.c.l.b16 %v743
        %v2028 = vunpack.c.l.b16 %v744
        %v2029 = vunpack.c.l.b16 %v745
        %v2030 = vunpack.c.l.b16 %v746
        %v2031 = vunpack.c.l.b16 %v747
        %v2032 = vunpack.c.l.b16 %v748
        %v2033 = vunpack.c.l.b16 %v749
        %v2034 = vunpack.c.l.b16 %v750
        %v2035 = vunpack.c.l.b16 %v751
        %v2036 = vunpack.c.l.b16 %v752
        %v2037 = vunpack.c.l.b16 %v753
        %v2038 = vunpack.c.l.b16 %v754
        %v2039 = vunpack.c.l.b16 %v755
        %v2040 = vunpack.c.l.b16 %v756
        %v2041 = vunpack.c.l.b16 %v757
        %v2042 = vunpack.c.l.b16 %v758
        %v2043 = vunpack.c.l.b16 %v759
        %v2044 = vunpack.c.l.b16 %v760
        %v2045 = vunpack.c.l.b16 %v761
        %v2046 = vunpack.c.l.b16 %v762
        %v2047 = vunpack.c.l.b16 %v763
        %v2048 = vunpack.c.l.b16 %v764
        %v2049 = vunpack.c.l.b16 %v765
        %v2050 = vunpack.c.l.b16 %v766
        %v2051 = vunpack.c.l.b16 %v767
        %v2052 = vunpack.c.l.b16 %v768
        %v2053 = vunpack.c.l.b16 %v769
        %v2054 = vunpack.c.l.b16 %v770
        %v2055 = vunpack.c.l.b16 %v771
        %v2056 = vunpack.c.l.b16 %v772
        %v2057 = vunpack.c.l.b16 %v773
        %v2058 = vunpack.c.l.b16 %v774
        %v2059 = vunpack.c.l.b16 %v775
        %v2060 = vunpack.c.l.b16 %v776
        %v2061 = vunpack.c.l.b16 %v777
        %v2062 = vunpack.c.l.b16 %v778
        %v2063 = vunpack.c.l.b16 %v779
        %v2064 = vunpack.c.l.b16 %v780
        %v2065 = vunpack.c.l.b16 %v781
        %v2066 = vunpack.c.l.b16 %v782
        %v2067 = vunpack.c.l.b16 %v783
        %v2068 = vunpack.c.l.b16 %v784
        %v2069 = vunpack.c.l.b16 %v785
        %v2070 = vunpack.c.l.b16 %v786
        %v2071 = vunpack.c.l.b16 %v787
        %v2072 = vunpack.c.l.b16 %v788
        %v2073 = vunpack.c.l.b16 %v789
        %v2074 = vunpack.c.l.b16 %v790
        %v2075 = vunpack.c.l.b16 %v791
        %v2076 = vunpack.c.l.b16 %v792
        %v2077 = vunpack.c.l.b16 %v793
        %v2078 = vunpack.c.l.b16 %v794
        %v2079 = vunpack.c.l.b16 %v795
        %v2080 = vunpack.c.l.b16 %v796
        %v2081 = vunpack.c.l.b16 %v797
        %v2082 = vunpack.c.l.b16 %v798
        %v2083 = vunpack.c.l.b16 %v799
        %v2084 = vunpack.c.l.b16 %v800
        %v2085 = vunpack.c.l.b16 %v801
        %v2086 = vunpack.c.l.b16 %v802
        %v2087 = vunpack.c.l.b16 %v803
        %v2088 = vunpack.c.l.b16 %v804
        %v2089 = vunpack.c.l.b16 %v805
        %v2090 = vunpack.c.l.b16 %v806
        %v2091 = vunpack.c.l.b16 %v807
        %v2092 = vunpack.c.l.b16 %v808
        %v2093 = vunpack.c.l.b16 %v809
        %v2094 = vunpack.c.l.b16 %v810
        %v2095 = vunpack.c.l.b16 %v811
        %v2096 = vunpack.c.l.b16 %v812
        %v2097 = vunpack.c.l.b16 %v813
        %v2098 = vunpack.c.l.b16 %v814
        %v2099 = vunpack.c.l.b16 %v815
        %v2100 = vunpack.c.l.b16 %v816
        %v2101 = vunpack.c.l.b16 %v817
        %v2102 = vunpack.c.l.b16 %v818
        %v2103 = vunpack.c.l.b16 %v819
        %v2104 = vunpack.c.l.b16 %v820
        %v2105 = vunpack.c.l.b16 %v821
        %v2106 = vunpack.c.l.b16 %v822
        %v2107 = vunpack.c.l.b16 %v823
        %v2108 = vunpack.c.l.b16 %v824
        %v2109 = vunpack.c.l.b16 %v825
        %v2110 = vunpack.c.l.b16 %v826
        %v2111 = vunpack.c.l.b16 %v827
        %v2112 = vunpack.c.l.b16 %v828
        %v2113 = vunpack.c.l.b16 %v829
        %v2114 = vunpack.c.l.b16 %v830
        %v2115 = vunpack.c.l.b16 %v831
        %v2116 = vunpack.c.l.b16 %v832
        %v2117 = vunpack.c.l.b16 %v833
        %v2118 = vunpack.c.l.b16 %v834
        %v2119 = vunpack.c.l.b16 %v835
        %v2120 = vunpack.c.l.b16 %v836
        %v2121 = vunpack.c.l.b16 %v837
        %v2122 = vunpack.c.l.b16 %v838
        %v2123 = vunpack.c.l.b16 %v839
        %v2124 = vunpack.c.l.b16 %v840
        %v2125 = vunpack.c.l.b16 %v841
        %v2126 = vunpack.c.l.b16 %v842
        %v2127 = vunpack.c.l.b16 %v843
        %v2128 = vunpack.c.l.b16 %v844
        %v2129 = vunpack.c.l.b16 %v845
        %v2130 = vunpack.c.l.b16 %v846
        %v2131 = vunpack.c.l.b16 %v847
        %v2132 = vunpack.c.l.b16 %v848
        %v2133 = vunpack.c.l.b16 %v849
        %v2134 = vunpack.c.l.b16 %v850
        %v2135 = vunpack.c.l.b16 %v851
        %v2136 = vunpack.c.l.b16 %v852
        %v2137 = vunpack.c.l.b16 %v853
        %v2138 = vunpack.c.l.b16 %v854
        %v2139 = vunpack.c.l.b16 %v855
        %v2140 = vunpack.c.l.b16 %v856
        %v2141 = vunpack.c.l.b16 %v857
        %v2142 = vunpack.c.l.b16 %v858
        %v2143 = vunpack.c.l.b16 %v859
        %v2144 = vunpack.c.l.b16 %v860
        %v2145 = vunpack.c.l.b16 %v861
        %v2146 = vunpack.c.l.b16 %v862
        %v2147 = vunpack.c.l.b16 %v863
        %v2148 = vunpack.c.l.b16 %v864
        %v2149 = vunpack.c.l.b16 %v865
        %v2150 = vunpack.c.l.b16 %v866
        %v2151 = vunpack.c.l.b16 %v867
        %v2152 = vunpack.c.l.b16 %v868
        %v2153 = vunpack.c.l.b16 %v869
        %v2154 = vunpack.c.l.b16 %v870
        %v2155 = vunpack.c.l.b16 %v871
        %v2156 = vunpack.c.l.b16 %v872
        %v2157 = vunpack.c.l.b16 %v873
        %v2158 = vunpack.c.l.b16 %v874
        %v2159 = vunpack.c.l.b16 %v875
        %v2160 = vunpack.c.l.b16 %v876
        %v2161 = vunpack.c.l.b16 %v877
        %v2162 = vunpack.c.l.b16 %v878
        %v2163 = vunpack.c.l.b16 %v879
        %v2164 = vunpack.c.l.b16 %v880
        %v2165 = vunpack.c.l.b16 %v881
        %v2166 = vunpack.c.l.b16 %v882
        %v2167 = vunpack.c.l.b16 %v883
        %v2168 = vunpack.c.l.b16 %v884
        %v2169 = vunpack.c.l.b16 %v885
        %v2170 = vunpack.c.l.b16 %v886
        %v2171 = vunpack.c.l.b16 %v887
        %v2172 = vunpack.c.l.b16 %v888
        %v2173 = vunpack.c.l.b16 %v889
        %v2174 = vunpack.c.l.b16 %v890
        %v2175 = vunpack.c.l.b16 %v891
        %v2176 = vunpack.c.l.b16 %v892
        %v2177 = vunpack.c.l.b16 %v893
        %v2178 = vunpack.c.l.b16 %v894
        %v2179 = vunpack.c.l.b16 %v895
        %v2180 = vunpack.c.l.b16 %v896
        %v2181 = vunpack.c.l.b16 %v897
        %v2182 = vunpack.c.l.b16 %v898
        %v2183 = vunpack.c.l.b16 %v899
        %v2184 = vunpack.c.l.b16 %v900
        %v2185 = vunpack.c.l.b16 %v901
        %v2186 = vunpack.c.l.b16 %v902
        %v2187 = vunpack.c.l.b16 %v903
        %v2188 = vunpack.c.l.b16 %v904
        %v2189 = vunpack.c.l.b16 %v905
        %v2190 = vpack.c.b16 %v1799, %v1798
        %v2191 = vpack.c.b16 %v1801, %v1800
        %v2192 = vpack.c.b16 %v1803, %v1802
        %v2193 = vpack.c.b16 %v1805, %v1804
        %v2194 = vpack.c.b16 %v1807, %v1806
        %v2195 = vpack.c.b16 %v1809, %v1808
        %v2196 = vpack.c.b16 %v1811, %v1810
        %v2197 = vpack.c.b16 %v1813, %v1812
        %v2198 = vpack.c.b16 %v1815, %v1814
        %v2199 = vpack.c.b16 %v1817, %v1816
        %v2200 = vpack.c.b16 %v1819, %v1818
        %v2201 = vpack.c.b16 %v1821, %v1820
        %v2202 = vpack.c.b16 %v1823, %v1822
        %v2203 = vpack.c.b16 %v1825, %v1824
        %v2204 = vpack.c.b16 %v1827, %v1826
        %v2205 = vpack.c.b16 %v1829, %v1828
        %v2206 = vpack.c.b16 %v1831, %v1830
        %v2207 = vpack.c.b16 %v1833, %v1832
        %v2208 = vpack.c.b16 %v1835, %v1834
        %v2209 = vpack.c.b16 %v1837, %v1836
        %v2210 = vpack.c.b16 %v1839, %v1838
        %v2211 = vpack.c.b16 %v1841, %v1840
        %v2212 = vpack.c.b16 %v1843, %v1842
        %v2213 = vpack.c.b16 %v1845, %v1844
        %v2214 = vpack.c.b16 %v1847, %v1846
        %v2215 = vpack.c.b16 %v1849, %v1848
        %v2216 = vpack.c.b16 %v1851, %v1850
        %v2217 = vpack.c.b16 %v1853, %v1852
        %v2218 = vpack.c.b16 %v1855, %v1854
        %v2219 = vpack.c.b16 %v1857, %v1856
        %v2220 = vpack.c.b16 %v1859, %v1858
        %v2221 = vpack.c.b16 %v1861, %v1860
        %v2222 = vpack.c.b16 %v1863, %v1862
        %v2223 = vpack.c.b16 %v1865, %v1864
        %v2224 = vpack.c.b16 %v1867, %v1866
        %v2225 = vpack.c.b16 %v1869, %v1868
        %v2226 = vpack.c.b16 %v1871, %v1870
        %v2227 = vpack.c.b16 %v1873, %v1872
        %v2228 = vpack.c.b16 %v1875, %v1874
        %v2229 = vpack.c.b16 %v1877, %v1876
        %v2230 = vpack.c.b16 %v1879, %v1878
        %v2231 = vpack.c.b16 %v1881, %v1880
        %v2232 = vpack.c.b16 %v1883, %v1882
        %v2233 = vpack.c.b16 %v1885, %v1884
        %v2234 = vpack.c.b16 %v1887, %v1886
        %v2235 = vpack.c.b16 %v1889, %v1888
        %v2236 = vpack.c.b16 %v1891, %v1890
        %v2237 = vpack.c.b16 %v1893, %v1892
        %v2238 = vpack.c.b16 %v1895, %v1894
        %v2239 = vpack.c.b16 %v1897, %v1896
        %v2240 = vpack.c.b16 %v1899, %v1898
        %v2241 = vpack.c.b16 %v1901, %v1900
        %v2242 = vpack.c.b16 %v1903, %v1902
        %v2243 = vpack.c.b16 %v1905, %v1904
        %v2244 = vpack.c.b16 %v1907, %v1906
        %v2245 = vpack.c.b16 %v1909, %v1908
        %v2246 = vpack.c.b16 %v1911, %v1910
        %v2247 = vpack.c.b16 %v1913, %v1912
        %v2248 = vpack.c.b16 %v1915, %v1914
        %v2249 = vpack.c.b16 %v1917, %v1916
        %v2250 = vpack.c.b16 %v1919, %v1918
        %v2251 = vpack.c.b16 %v1921, %v1920
        %v2252 = vpack.c.b16 %v1923, %v1922
        %v2253 = vpack.c.b16 %v1925, %v1924
        %v2254 = vpack.c.b16 %v1927, %v1926
        %v2255 = vpack.c.b16 %v1929, %v1928
        %v2256 = vpack.c.b16 %v1931, %v1930
        %v2257 = vpack.c.b16 %v1933, %v1932
        %v2258 = vpack.c.b16 %v1935, %v1934
        %v2259 = vpack.c.b16 %v1937, %v1936
        %v2260 = vpack.c.b16 %v1939, %v1938
        %v2261 = vpack.c.b16 %v1941, %v1940
        %v2262 = vpack.c.b16 %v1943, %v1942
        %v2263 = vpack.c.b16 %v1945, %v1944
        %v2264 = vpack.c.b16 %v1947, %v1946
        %v2265 = vpack.c.b16 %v1949, %v1948
        %v2266 = vpack.c.b16 %v1951, %v1950
        %v2267 = vpack.c.b16 %v1953, %v1952
        %v2268 = vpack.c.b16 %v1955, %v1954
        %v2269 = vpack.c.b16 %v1957, %v1956
        %v2270 = vpack.c.b16 %v1959, %v1958
        %v2271 = vpack.c.b16 %v1961, %v1960
        %v2272 = vpack.c.b16 %v1963, %v1962
        %v2273 = vpack.c.b16 %v1965, %v1964
        %v2274 = vpack.c.b16 %v1967, %v1966
        %v2275 = vpack.c.b16 %v1969, %v1968
        %v2276 = vpack.c.b16 %v1971, %v1970
        %v2277 = vpack.c.b16 %v1973, %v1972
        %v2278 = vpack.c.b16 %v1975, %v1974
        %v2279 = vpack.c.b16 %v1977, %v1976
        %v2280 = vpack.c.b16 %v1979, %v1978
        %v2281 = vpack.c.b16 %v1981, %v1980
        %v2282 = vpack.c.b16 %v1983, %v1982
        %v2283 = vpack.c.b16 %v1985, %v1984
        %v2284 = vpack.c.b16 %v1987, %v1986
        %v2285 = vpack.c.b16 %v1989, %v1988
        %v2286 = vpack.c.b16 %v1991, %v1990
        %v2287 = vpack.c.b16 %v1993, %v1992
        %v2288 = vpack.c.b16 %v1995, %v1994
        %v2289 = vpack.c.b16 %v1997, %v1996
        %v2290 = vpack.c.b16 %v1999, %v1998
        %v2291 = vpack.c.b16 %v2001, %v2000
        %v2292 = vpack.c.b16 %v2003, %v2002
        %v2293 = vpack.c.b16 %v2005, %v2004
        %v2294 = vpack.c.b16 %v2007, %v2006
        %v2295 = vpack.c.b16 %v2009, %v2008
        %v2296 = vpack.c.b16 %v2011, %v2010
        %v2297 = vpack.c.b16 %v2013, %v2012
        %v2298 = vpack.c.b16 %v2015, %v2014
        %v2299 = vpack.c.b16 %v2017, %v2016
        %v2300 = vpack.c.b16 %v2019, %v2018
        %v2301 = vpack.c.b16 %v2021, %v2020
        %v2302 = vpack.c.b16 %v2023, %v2022
        %v2303 = vpack.c.b16 %v2025, %v2024
        %v2304 = vpack.c.b16 %v2027, %v2026
        %v2305 = vpack.c.b16 %v2029, %v2028
        %v2306 = vpack.c.b16 %v2031, %v2030
        %v2307 = vpack.c.b16 %v2033, %v2032
        %v2308 = vpack.c.b16 %v2035, %v2034
        %v2309 = vpack.c.b16 %v2037, %v2036
        %v2310 = vpack.c.b16 %v2039, %v2038
        %v2311 = vpack.c.b16 %v2041, %v2040
        %v2312 = vpack.c.b16 %v2043, %v2042
        %v2313 = vpack.c.b16 %v2045, %v2044
        %v2314 = vpack.c.b16 %v2047, %v2046
        %v2315 = vpack.c.b16 %v2049, %v2048
        %v2316 = vpack.c.b16 %v2051, %v2050
        %v2317 = vpack.c.b16 %v2053, %v2052
        %v2318 = vpack.c.b16 %v2055, %v2054
        %v2319 = vpack.c.b16 %v2057, %v2056
        %v2320 = vpack.c.b16 %v2059, %v2058
        %v2321 = vpack.c.b16 %v2061, %v2060
        %v2322 = vpack.c.b16 %v2063, %v2062
        %v2323 = vpack.c.b16 %v2065, %v2064
        %v2324 = vpack.c.b16 %v2067, %v2066
        %v2325 = vpack.c.b16 %v2069, %v2068
        %v2326 = vpack.c.b16 %v2071, %v2070
        %v2327 = vpack.c.b16 %v2073, %v2072
        %v2328 = vpack.c.b16 %v2075, %v2074
        %v2329 = vpack.c.b16 %v2077, %v2076
        %v2330 = vpack.c.b16 %v2079, %v2078
        %v2331 = vpack.c.b16 %v2081, %v2080
        %v2332 = vpack.c.b16 %v2083, %v2082
        %v2333 = vpack.c.b16 %v2085, %v2084
        %v2334 = vpack.c.b16 %v2087, %v2086
        %v2335 = vpack.c.b16 %v2089, %v2088
        %v2336 = vpack.c.b16 %v2091, %v2090
        %v2337 = vpack.c.b16 %v2093, %v2092
        %v2338 = vpack.c.b16 %v2095, %v2094
        %v2339 = vpack.c.b16 %v2097, %v2096
        %v2340 = vpack.c.b16 %v2099, %v2098
        %v2341 = vpack.c.b16 %v2101, %v2100
        %v2342 = vpack.c.b16 %v2103, %v2102
        %v2343 = vpack.c.b16 %v2105, %v2104
        %v2344 = vpack.c.b16 %v2107, %v2106
        %v2345 = vpack.c.b16 %v2109, %v2108
        %v2346 = vpack.c.b16 %v2111, %v2110
        %v2347 = vpack.c.b16 %v2113, %v2112
        %v2348 = vpack.c.b16 %v2115, %v2114
        %v2349 = vpack.c.b16 %v2117, %v2116
        %v2350 = vpack.c.b16 %v2119, %v2118
        %v2351 = vpack.c.b16 %v2121, %v2120
        %v2352 = vpack.c.b16 %v2123, %v2122
        %v2353 = vpack.c.b16 %v2125, %v2124
        %v2354 = vpack.c.b16 %v2127, %v2126
        %v2355 = vpack.c.b16 %v2129, %v2128
        %v2356 = vpack.c.b16 %v2131, %v2130
        %v2357 = vpack.c.b16 %v2133, %v2132
        %v2358 = vpack.c.b16 %v2135, %v2134
        %v2359 = vpack.c.b16 %v2137, %v2136
        %v2360 = vpack.c.b16 %v2139, %v2138
        %v2361 = vpack.c.b16 %v2141, %v2140
        %v2362 = vpack.c.b16 %v2143, %v2142
        %v2363 = vpack.c.b16 %v2145, %v2144
        %v2364 = vpack.c.b16 %v2147, %v2146
        %v2365 = vpack.c.b16 %v2149, %v2148
        %v2366 = vpack.c.b16 %v2151, %v2150
        %v2367 = vpack.c.b16 %v2153, %v2152
        %v2368 = vpack.c.b16 %v2155, %v2154
        %v2369 = vpack.c.b16 %v2157, %v2156
        %v2370 = vpack.c.b16 %v2159, %v2158
        %v2371 = vpack.c.b16 %v2161, %v2160
        %v2372 = vpack.c.b16 %v2163, %v2162
        %v2373 = vpack.c.b16 %v2165, %v2164
        %v2374 = vpack.c.b16 %v2167, %v2166
        %v2375 = vpack.c.b16 %v2169, %v2168
        %v2376 = vpack.c.b16 %v2171, %v2170
        %v2377 = vpack.c.b16 %v2173, %v2172
        %v2378 = vpack.c.b16 %v2175, %v2174
        %v2379 = vpack.c.b16 %v2177, %v2176
        %v2380 = vpack.c.b16 %v2179, %v2178
        %v2381 = vpack.c.b16 %v2181, %v2180
        %v2382 = vpack.c.b16 %v2183, %v2182
        %v2383 = vpack.c.b16 %v2185, %v2184
        %v2384 = vpack.c.b16 %v2187, %v2186
        %v2385 = vpack.c.b16 %v2189, %v2188
        %vm2582 = vcmask 523264
        %v2584 = vsel %vm2582, %v1234, 0
        %v2587 = vsel %vm2582, %v1259, 0
        %v2590 = vsel %vm2582, %v1284, 0
        %v2593 = vsel %vm2582, %v1309, 0
        %2595 = vmatprep.subr.bf16.mxu0 0
        %2596 = vmatpush1.bf16.msra.mxu0 %v2190
        %2597 = vmatprep.subr.bf16.mxu0 0
        %2598 = vmatpush1.bf16.msra.mxu0 %v2191
        %2599 = vmatprep.subr.bf16.mxu0 0
        %2600 = vmatpush1.bf16.msra.mxu0 %v2192
        %2601 = vmatprep.subr.bf16.mxu0 0
        %2602 = vmatpush1.bf16.msra.mxu0 %v2193
        %2603 = vmatprep.subr.bf16.mxu0 0
        %2604 = vmatpush1.bf16.msra.mxu0 %v2194
        %2605 = vmatprep.subr.bf16.mxu0 0
        %2606 = vmatpush1.bf16.msra.mxu0 %v2195
        %2607 = vmatprep.subr.bf16.mxu0 0
        %2608 = vmatpush1.bf16.msra.mxu0 %v2196
        %2609 = vmatprep.subr.bf16.mxu0 0
        %2610 = vmatpush1.bf16.msra.mxu0 %v2197
        %2611 = vmatprep.subr.bf16.mxu0 0
        %2612 = vmatpush1.bf16.msra.mxu0 %v2198
        %2613 = vmatprep.subr.bf16.mxu0 0
        %2614 = vmatpush1.bf16.msra.mxu0 %v2199
        %2615 = vmatprep.subr.bf16.mxu0 0
        %2616 = vmatpush1.bf16.msra.mxu0 %v2200
        %2617 = vmatprep.subr.bf16.mxu0 0
        %2618 = vmatpush1.bf16.msra.mxu0 %v2201
        %2619 = vmatprep.subr.bf16.mxu0 0
        %2620 = vmatpush1.bf16.msra.mxu0 %v2202
        %2621 = vmatprep.subr.bf16.mxu0 0
        %2622 = vmatpush1.bf16.msra.mxu0 %v2203
        %2623 = vmatprep.subr.bf16.mxu0 0
        %2624 = vmatpush1.bf16.msra.mxu0 %v2204
        %2625 = vmatprep.subr.bf16.mxu0 0
        %2626 = vmatpush1.bf16.msra.mxu0 %v2205
        %2627 = vmatprep.mubr.bf16.mxu0 %v1211
        %2628 = vmatmul.mubr.bf16.gmra.mrb[0].mxu0 %v1210
        %v2629 = vpop.f32.mrb[0].mxu0
        %v2630 = vadd.f32 0.0, %v2629
        %v2631 = vpop.f32.mrb[0].mxu0
        %v2632 = vpop.f32.mrb[0].mxu0
        %v2633 = vadd.f32 0.0, %v2632
        %v2634 = vpop.f32.mrb[0].mxu0
        %2635 = vmatprep.mubr.bf16.mxu0 %v1236
        %2636 = vmatmul.mubr.bf16.gmra.mrb[0].mxu0 %v1235
        %v2637 = vpop.f32.mrb[0].mxu0
        %v2638 = vadd.f32 0.0, %v2637
        %v2639 = vpop.f32.mrb[0].mxu0
        %v2640 = vpop.f32.mrb[0].mxu0
        %v2641 = vadd.f32 0.0, %v2640
        %v2642 = vpop.f32.mrb[0].mxu0
        %2643 = vmatprep.mubr.bf16.mxu0 %v1261
        %2644 = vmatmul.mubr.bf16.gmra.mrb[0].mxu0 %v1260
        %v2645 = vpop.f32.mrb[0].mxu0
        %v2646 = vadd.f32 0.0, %v2645
        %v2647 = vpop.f32.mrb[0].mxu0
        %v2648 = vpop.f32.mrb[0].mxu0
        %v2649 = vadd.f32 0.0, %v2648
        %v2650 = vpop.f32.mrb[0].mxu0
        %2651 = vmatprep.mubr.bf16.mxu0 %v1286
        %2652 = vmatmul.mubr.bf16.gmra.mrb[0].mxu0 %v1285
        %v2653 = vpop.f32.mrb[0].mxu0
        %v2654 = vadd.f32 0.0, %v2653
        %v2655 = vpop.f32.mrb[0].mxu0
        %v2656 = vpop.f32.mrb[0].mxu0
        %v2657 = vadd.f32 0.0, %v2656
        %v2658 = vpop.f32.mrb[0].mxu0
        %2659 = vdwg.mxu0
        %2660 = vmatprep.subr.bf16.mxu0 0
        %2661 = vmatpush1.bf16.msra.mxu0 %v2206
        %2662 = vmatprep.subr.bf16.mxu0 0
        %2663 = vmatpush1.bf16.msra.mxu0 %v2207
        %2664 = vmatprep.subr.bf16.mxu0 0
        %2665 = vmatpush1.bf16.msra.mxu0 %v2208
        %2666 = vmatprep.subr.bf16.mxu0 0
        %2667 = vmatpush1.bf16.msra.mxu0 %v2209
        %2668 = vmatprep.subr.bf16.mxu0 0
        %2669 = vmatpush1.bf16.msra.mxu0 %v2210
        %2670 = vmatprep.subr.bf16.mxu0 0
        %2671 = vmatpush1.bf16.msra.mxu0 %v2211
        %2672 = vmatprep.subr.bf16.mxu0 0
        %2673 = vmatpush1.bf16.msra.mxu0 %v2212
        %2674 = vmatprep.subr.bf16.mxu0 0
        %2675 = vmatpush1.bf16.msra.mxu0 %v2213
        %2676 = vmatprep.subr.bf16.mxu0 0
        %2677 = vmatpush1.bf16.msra.mxu0 %v2214
        %2678 = vmatprep.subr.bf16.mxu0 0
        %2679 = vmatpush1.bf16.msra.mxu0 %v2215
        %2680 = vmatprep.subr.bf16.mxu0 0
        %2681 = vmatpush1.bf16.msra.mxu0 %v2216
        %2682 = vmatprep.subr.bf16.mxu0 0
        %2683 = vmatpush1.bf16.msra.mxu0 %v2217
        %2684 = vmatprep.subr.bf16.mxu0 0
        %2685 = vmatpush1.bf16.msra.mxu0 %v2218
        %2686 = vmatprep.subr.bf16.mxu0 0
        %2687 = vmatpush1.bf16.msra.mxu0 %v2219
        %2688 = vmatprep.subr.bf16.mxu0 0
        %2689 = vmatpush1.bf16.msra.mxu0 %v2220
        %2690 = vmatprep.subr.bf16.mxu0 0
        %2691 = vmatpush1.bf16.msra.mxu0 %v2221
        %2692 = vmatprep.mubr.bf16.mxu0 %v1213
        %2693 = vmatmul.mubr.bf16.gmra.mrb[0].mxu0 %v1212
        %v2694 = vpop.f32.mrb[0].mxu0
        %v2695 = vadd.f32 %v2630, %v2694
        %v2696 = vpop.f32.mrb[0].mxu0
        %v2697 = vpop.f32.mrb[0].mxu0
        %v2698 = vadd.f32 %v2633, %v2697
        %v2699 = vpop.f32.mrb[0].mxu0
        %2700 = vmatprep.mubr.bf16.mxu0 %v1238
        %2701 = vmatmul.mubr.bf16.gmra.mrb[0].mxu0 %v1237
        %v2702 = vpop.f32.mrb[0].mxu0
        %v2703 = vadd.f32 %v2638, %v2702
        %v2704 = vpop.f32.mrb[0].mxu0
        %v2705 = vpop.f32.mrb[0].mxu0
        %v2706 = vadd.f32 %v2641, %v2705
        %v2707 = vpop.f32.mrb[0].mxu0
        %2708 = vmatprep.mubr.bf16.mxu0 %v1263
        %2709 = vmatmul.mubr.bf16.gmra.mrb[0].mxu0 %v1262
        %v2710 = vpop.f32.mrb[0].mxu0
        %v2711 = vadd.f32 %v2646, %v2710
        %v2712 = vpop.f32.mrb[0].mxu0
        %v2713 = vpop.f32.mrb[0].mxu0
        %v2714 = vadd.f32 %v2649, %v2713
        %v2715 = vpop.f32.mrb[0].mxu0
        %2716 = vmatprep.mubr.bf16.mxu0 %v1288
        %2717 = vmatmul.mubr.bf16.gmra.mrb[0].mxu0 %v1287
        %v2718 = vpop.f32.mrb[0].mxu0
        %v2719 = vadd.f32 %v2654, %v2718
        %v2720 = vpop.f32.mrb[0].mxu0
        %v2721 = vpop.f32.mrb[0].mxu0
        %v2722 = vadd.f32 %v2657, %v2721
        %v2723 = vpop.f32.mrb[0].mxu0
        %2724 = vdwg.mxu0
        %2725 = vmatprep.subr.bf16.mxu0 0
        %2726 = vmatpush1.bf16.msra.mxu0 %v2222
        %2727 = vmatprep.subr.bf16.mxu0 0
        %2728 = vmatpush1.bf16.msra.mxu0 %v2223
        %2729 = vmatprep.subr.bf16.mxu0 0
        %2730 = vmatpush1.bf16.msra.mxu0 %v2224
        %2731 = vmatprep.subr.bf16.mxu0 0
        %2732 = vmatpush1.bf16.msra.mxu0 %v2225
        %2733 = vmatprep.subr.bf16.mxu0 0
        %2734 = vmatpush1.bf16.msra.mxu0 %v2226
        %2735 = vmatprep.subr.bf16.mxu0 0
        %2736 = vmatpush1.bf16.msra.mxu0 %v2227
        %2737 = vmatprep.subr.bf16.mxu0 0
        %2738 = vmatpush1.bf16.msra.mxu0 %v2228
        %2739 = vmatprep.subr.bf16.mxu0 0
        %2740 = vmatpush1.bf16.msra.mxu0 %v2229
        %2741 = vmatprep.subr.bf16.mxu0 0
        %2742 = vmatpush1.bf16.msra.mxu0 %v2230
        %2743 = vmatprep.subr.bf16.mxu0 0
        %2744 = vmatpush1.bf16.msra.mxu0 %v2231
        %2745 = vmatprep.subr.bf16.mxu0 0
        %2746 = vmatpush1.bf16.msra.mxu0 %v2232
        %2747 = vmatprep.subr.bf16.mxu0 0
        %2748 = vmatpush1.bf16.msra.mxu0 %v2233
        %2749 = vmatprep.subr.bf16.mxu0 0
        %2750 = vmatpush1.bf16.msra.mxu0 %v2234
        %2751 = vmatprep.subr.bf16.mxu0 0
        %2752 = vmatpush1.bf16.msra.mxu0 %v2235
        %2753 = vmatprep.subr.bf16.mxu0 0
        %2754 = vmatpush1.bf16.msra.mxu0 %v2236
        %2755 = vmatprep.subr.bf16.mxu0 0
        %2756 = vmatpush1.bf16.msra.mxu0 %v2237
        %2757 = vmatprep.mubr.bf16.mxu0 %v1215
        %2758 = vmatmul.mubr.bf16.gmra.mrb[0].mxu0 %v1214
        %v2759 = vpop.f32.mrb[0].mxu0
        %v2760 = vadd.f32 %v2695, %v2759
        %v2761 = vpop.f32.mrb[0].mxu0
        %v2762 = vpop.f32.mrb[0].mxu0
        %v2763 = vadd.f32 %v2698, %v2762
        %v2764 = vpop.f32.mrb[0].mxu0
        %2765 = vmatprep.mubr.bf16.mxu0 %v1240
        %2766 = vmatmul.mubr.bf16.gmra.mrb[0].mxu0 %v1239
        %v2767 = vpop.f32.mrb[0].mxu0
        %v2768 = vadd.f32 %v2703, %v2767
        %v2769 = vpop.f32.mrb[0].mxu0
        %v2770 = vpop.f32.mrb[0].mxu0
        %v2771 = vadd.f32 %v2706, %v2770
        %v2772 = vpop.f32.mrb[0].mxu0
        %2773 = vmatprep.mubr.bf16.mxu0 %v1265
        %2774 = vmatmul.mubr.bf16.gmra.mrb[0].mxu0 %v1264
        %v2775 = vpop.f32.mrb[0].mxu0
        %v2776 = vadd.f32 %v2711, %v2775
        %v2777 = vpop.f32.mrb[0].mxu0
        %v2778 = vpop.f32.mrb[0].mxu0
        %v2779 = vadd.f32 %v2714, %v2778
        %v2780 = vpop.f32.mrb[0].mxu0
        %2781 = vmatprep.mubr.bf16.mxu0 %v1290
        %2782 = vmatmul.mubr.bf16.gmra.mrb[0].mxu0 %v1289
        %v2783 = vpop.f32.mrb[0].mxu0
        %v2784 = vadd.f32 %v2719, %v2783
        %v2785 = vpop.f32.mrb[0].mxu0
        %v2786 = vpop.f32.mrb[0].mxu0
        %v2787 = vadd.f32 %v2722, %v2786
        %v2788 = vpop.f32.mrb[0].mxu0
        %2789 = vdwg.mxu0
        %2790 = vmatprep.subr.bf16.mxu0 0
        %2791 = vmatpush1.bf16.msra.mxu0 %v2238
        %2792 = vmatprep.subr.bf16.mxu0 0
        %2793 = vmatpush1.bf16.msra.mxu0 %v2239
        %2794 = vmatprep.subr.bf16.mxu0 0
        %2795 = vmatpush1.bf16.msra.mxu0 %v2240
        %2796 = vmatprep.subr.bf16.mxu0 0
        %2797 = vmatpush1.bf16.msra.mxu0 %v2241
        %2798 = vmatprep.subr.bf16.mxu0 0
        %2799 = vmatpush1.bf16.msra.mxu0 %v2242
        %2800 = vmatprep.subr.bf16.mxu0 0
        %2801 = vmatpush1.bf16.msra.mxu0 %v2243
        %2802 = vmatprep.subr.bf16.mxu0 0
        %2803 = vmatpush1.bf16.msra.mxu0 %v2244
        %2804 = vmatprep.subr.bf16.mxu0 0
        %2805 = vmatpush1.bf16.msra.mxu0 %v2245
        %2806 = vmatprep.subr.bf16.mxu0 0
        %2807 = vmatpush1.bf16.msra.mxu0 %v2246
        %2808 = vmatprep.subr.bf16.mxu0 0
        %2809 = vmatpush1.bf16.msra.mxu0 %v2247
        %2810 = vmatprep.subr.bf16.mxu0 0
        %2811 = vmatpush1.bf16.msra.mxu0 %v2248
        %2812 = vmatprep.subr.bf16.mxu0 0
        %2813 = vmatpush1.bf16.msra.mxu0 %v2249
        %2814 = vmatprep.subr.bf16.mxu0 0
        %2815 = vmatpush1.bf16.msra.mxu0 %v2250
        %2816 = vmatprep.subr.bf16.mxu0 0
        %2817 = vmatpush1.bf16.msra.mxu0 %v2251
        %2818 = vmatprep.subr.bf16.mxu0 0
        %2819 = vmatpush1.bf16.msra.mxu0 %v2252
        %2820 = vmatprep.subr.bf16.mxu0 0
        %2821 = vmatpush1.bf16.msra.mxu0 %v2253
        %2822 = vmatprep.mubr.bf16.mxu0 %v1217
        %2823 = vmatmul.mubr.bf16.gmra.mrb[0].mxu0 %v1216
        %v2824 = vpop.f32.mrb[0].mxu0
        %v2825 = vadd.f32 %v2760, %v2824
        %v2826 = vpop.f32.mrb[0].mxu0
        %v2827 = vpop.f32.mrb[0].mxu0
        %v2828 = vadd.f32 %v2763, %v2827
        %v2829 = vpop.f32.mrb[0].mxu0
        %2830 = vmatprep.mubr.bf16.mxu0 %v1242
        %2831 = vmatmul.mubr.bf16.gmra.mrb[0].mxu0 %v1241
        %v2832 = vpop.f32.mrb[0].mxu0
        %v2833 = vadd.f32 %v2768, %v2832
        %v2834 = vpop.f32.mrb[0].mxu0
        %v2835 = vpop.f32.mrb[0].mxu0
        %v2836 = vadd.f32 %v2771, %v2835
        %v2837 = vpop.f32.mrb[0].mxu0
        %2838 = vmatprep.mubr.bf16.mxu0 %v1267
        %2839 = vmatmul.mubr.bf16.gmra.mrb[0].mxu0 %v1266
        %v2840 = vpop.f32.mrb[0].mxu0
        %v2841 = vadd.f32 %v2776, %v2840
        %v2842 = vpop.f32.mrb[0].mxu0
        %v2843 = vpop.f32.mrb[0].mxu0
        %v2844 = vadd.f32 %v2779, %v2843
        %v2845 = vpop.f32.mrb[0].mxu0
        %2846 = vmatprep.mubr.bf16.mxu0 %v1292
        %2847 = vmatmul.mubr.bf16.gmra.mrb[0].mxu0 %v1291
        %v2848 = vpop.f32.mrb[0].mxu0
        %v2849 = vadd.f32 %v2784, %v2848
        %v2850 = vpop.f32.mrb[0].mxu0
        %v2851 = vpop.f32.mrb[0].mxu0
        %v2852 = vadd.f32 %v2787, %v2851
        %v2853 = vpop.f32.mrb[0].mxu0
        %2854 = vdwg.mxu0
        %2855 = vmatprep.subr.bf16.mxu0 0
        %2856 = vmatpush1.bf16.msra.mxu0 %v2254
        %2857 = vmatprep.subr.bf16.mxu0 0
        %2858 = vmatpush1.bf16.msra.mxu0 %v2255
        %2859 = vmatprep.subr.bf16.mxu0 0
        %2860 = vmatpush1.bf16.msra.mxu0 %v2256
        %2861 = vmatprep.subr.bf16.mxu0 0
        %2862 = vmatpush1.bf16.msra.mxu0 %v2257
        %2863 = vmatprep.subr.bf16.mxu0 0
        %2864 = vmatpush1.bf16.msra.mxu0 %v2258
        %2865 = vmatprep.subr.bf16.mxu0 0
        %2866 = vmatpush1.bf16.msra.mxu0 %v2259
        %2867 = vmatprep.subr.bf16.mxu0 0
        %2868 = vmatpush1.bf16.msra.mxu0 %v2260
        %2869 = vmatprep.subr.bf16.mxu0 0
        %2870 = vmatpush1.bf16.msra.mxu0 %v2261
        %2871 = vmatprep.subr.bf16.mxu0 0
        %2872 = vmatpush1.bf16.msra.mxu0 %v2262
        %2873 = vmatprep.subr.bf16.mxu0 0
        %2874 = vmatpush1.bf16.msra.mxu0 %v2263
        %2875 = vmatprep.subr.bf16.mxu0 0
        %2876 = vmatpush1.bf16.msra.mxu0 %v2264
        %2877 = vmatprep.subr.bf16.mxu0 0
        %2878 = vmatpush1.bf16.msra.mxu0 %v2265
        %2879 = vmatprep.subr.bf16.mxu0 0
        %2880 = vmatpush1.bf16.msra.mxu0 %v2266
        %2881 = vmatprep.subr.bf16.mxu0 0
        %2882 = vmatpush1.bf16.msra.mxu0 %v2267
        %2883 = vmatprep.subr.bf16.mxu0 0
        %2884 = vmatpush1.bf16.msra.mxu0 %v2268
        %2885 = vmatprep.subr.bf16.mxu0 0
        %2886 = vmatpush1.bf16.msra.mxu0 %v2269
        %2887 = vmatprep.mubr.bf16.mxu0 %v1219
        %2888 = vmatmul.mubr.bf16.gmra.mrb[0].mxu0 %v1218
        %v2889 = vpop.f32.mrb[0].mxu0
        %v2890 = vadd.f32 %v2825, %v2889
        %v2891 = vpop.f32.mrb[0].mxu0
        %v2892 = vpop.f32.mrb[0].mxu0
        %v2893 = vadd.f32 %v2828, %v2892
        %v2894 = vpop.f32.mrb[0].mxu0
        %2895 = vmatprep.mubr.bf16.mxu0 %v1244
        %2896 = vmatmul.mubr.bf16.gmra.mrb[0].mxu0 %v1243
        %v2897 = vpop.f32.mrb[0].mxu0
        %v2898 = vadd.f32 %v2833, %v2897
        %v2899 = vpop.f32.mrb[0].mxu0
        %v2900 = vpop.f32.mrb[0].mxu0
        %v2901 = vadd.f32 %v2836, %v2900
        %v2902 = vpop.f32.mrb[0].mxu0
        %2903 = vmatprep.mubr.bf16.mxu0 %v1269
        %2904 = vmatmul.mubr.bf16.gmra.mrb[0].mxu0 %v1268
        %v2905 = vpop.f32.mrb[0].mxu0
        %v2906 = vadd.f32 %v2841, %v2905
        %v2907 = vpop.f32.mrb[0].mxu0
        %v2908 = vpop.f32.mrb[0].mxu0
        %v2909 = vadd.f32 %v2844, %v2908
        %v2910 = vpop.f32.mrb[0].mxu0
        %2911 = vmatprep.mubr.bf16.mxu0 %v1294
        %2912 = vmatmul.mubr.bf16.gmra.mrb[0].mxu0 %v1293
        %v2913 = vpop.f32.mrb[0].mxu0
        %v2914 = vadd.f32 %v2849, %v2913
        %v2915 = vpop.f32.mrb[0].mxu0
        %v2916 = vpop.f32.mrb[0].mxu0
        %v2917 = vadd.f32 %v2852, %v2916
        %v2918 = vpop.f32.mrb[0].mxu0
        %2919 = vdwg.mxu0
        %2920 = vmatprep.subr.bf16.mxu0 0
        %2921 = vmatpush1.bf16.msra.mxu0 %v2270
        %2922 = vmatprep.subr.bf16.mxu0 0
        %2923 = vmatpush1.bf16.msra.mxu0 %v2271
        %2924 = vmatprep.subr.bf16.mxu0 0
        %2925 = vmatpush1.bf16.msra.mxu0 %v2272
        %2926 = vmatprep.subr.bf16.mxu0 0
        %2927 = vmatpush1.bf16.msra.mxu0 %v2273
        %2928 = vmatprep.subr.bf16.mxu0 0
        %2929 = vmatpush1.bf16.msra.mxu0 %v2274
        %2930 = vmatprep.subr.bf16.mxu0 0
        %2931 = vmatpush1.bf16.msra.mxu0 %v2275
        %2932 = vmatprep.subr.bf16.mxu0 0
        %2933 = vmatpush1.bf16.msra.mxu0 %v2276
        %2934 = vmatprep.subr.bf16.mxu0 0
        %2935 = vmatpush1.bf16.msra.mxu0 %v2277
        %2936 = vmatprep.subr.bf16.mxu0 0
        %2937 = vmatpush1.bf16.msra.mxu0 %v2278
        %2938 = vmatprep.subr.bf16.mxu0 0
        %2939 = vmatpush1.bf16.msra.mxu0 %v2279
        %2940 = vmatprep.subr.bf16.mxu0 0
        %2941 = vmatpush1.bf16.msra.mxu0 %v2280
        %2942 = vmatprep.subr.bf16.mxu0 0
        %2943 = vmatpush1.bf16.msra.mxu0 %v2281
        %2944 = vmatprep.subr.bf16.mxu0 0
        %2945 = vmatpush1.bf16.msra.mxu0 %v2282
        %2946 = vmatprep.subr.bf16.mxu0 0
        %2947 = vmatpush1.bf16.msra.mxu0 %v2283
        %2948 = vmatprep.subr.bf16.mxu0 0
        %2949 = vmatpush1.bf16.msra.mxu0 %v2284
        %2950 = vmatprep.subr.bf16.mxu0 0
        %2951 = vmatpush1.bf16.msra.mxu0 %v2285
        %2952 = vmatprep.mubr.bf16.mxu0 %v1221
        %2953 = vmatmul.mubr.bf16.gmra.mrb[0].mxu0 %v1220
        %v2954 = vpop.f32.mrb[0].mxu0
        %v2955 = vadd.f32 %v2890, %v2954
        %v2956 = vpop.f32.mrb[0].mxu0
        %v2957 = vpop.f32.mrb[0].mxu0
        %v2958 = vadd.f32 %v2893, %v2957
        %v2959 = vpop.f32.mrb[0].mxu0
        %2960 = vmatprep.mubr.bf16.mxu0 %v1246
        %2961 = vmatmul.mubr.bf16.gmra.mrb[0].mxu0 %v1245
        %v2962 = vpop.f32.mrb[0].mxu0
        %v2963 = vadd.f32 %v2898, %v2962
        %v2964 = vpop.f32.mrb[0].mxu0
        %v2965 = vpop.f32.mrb[0].mxu0
        %v2966 = vadd.f32 %v2901, %v2965
        %v2967 = vpop.f32.mrb[0].mxu0
        %2968 = vmatprep.mubr.bf16.mxu0 %v1271
        %2969 = vmatmul.mubr.bf16.gmra.mrb[0].mxu0 %v1270
        %v2970 = vpop.f32.mrb[0].mxu0
        %v2971 = vadd.f32 %v2906, %v2970
        %v2972 = vpop.f32.mrb[0].mxu0
        %v2973 = vpop.f32.mrb[0].mxu0
        %v2974 = vadd.f32 %v2909, %v2973
        %v2975 = vpop.f32.mrb[0].mxu0
        %2976 = vmatprep.mubr.bf16.mxu0 %v1296
        %2977 = vmatmul.mubr.bf16.gmra.mrb[0].mxu0 %v1295
        %v2978 = vpop.f32.mrb[0].mxu0
        %v2979 = vadd.f32 %v2914, %v2978
        %v2980 = vpop.f32.mrb[0].mxu0
        %v2981 = vpop.f32.mrb[0].mxu0
        %v2982 = vadd.f32 %v2917, %v2981
        %v2983 = vpop.f32.mrb[0].mxu0
        %2984 = vdwg.mxu0
        %2985 = vmatprep.subr.bf16.mxu0 0
        %2986 = vmatpush1.bf16.msra.mxu0 %v2286
        %2987 = vmatprep.subr.bf16.mxu0 0
        %2988 = vmatpush1.bf16.msra.mxu0 %v2287
        %2989 = vmatprep.subr.bf16.mxu0 0
        %2990 = vmatpush1.bf16.msra.mxu0 %v2288
        %2991 = vmatprep.subr.bf16.mxu0 0
        %2992 = vmatpush1.bf16.msra.mxu0 %v2289
        %2993 = vmatprep.subr.bf16.mxu0 0
        %2994 = vmatpush1.bf16.msra.mxu0 %v2290
        %2995 = vmatprep.subr.bf16.mxu0 0
        %2996 = vmatpush1.bf16.msra.mxu0 %v2291
        %2997 = vmatprep.subr.bf16.mxu0 0
        %2998 = vmatpush1.bf16.msra.mxu0 %v2292
        %2999 = vmatprep.subr.bf16.mxu0 0
        %3000 = vmatpush1.bf16.msra.mxu0 %v2293
        %3001 = vmatprep.subr.bf16.mxu0 0
        %3002 = vmatpush1.bf16.msra.mxu0 %v2294
        %3003 = vmatprep.subr.bf16.mxu0 0
        %3004 = vmatpush1.bf16.msra.mxu0 %v2295
        %3005 = vmatprep.subr.bf16.mxu0 0
        %3006 = vmatpush1.bf16.msra.mxu0 %v2296
        %3007 = vmatprep.subr.bf16.mxu0 0
        %3008 = vmatpush1.bf16.msra.mxu0 %v2297
        %3009 = vmatprep.subr.bf16.mxu0 0
        %3010 = vmatpush1.bf16.msra.mxu0 %v2298
        %3011 = vmatprep.subr.bf16.mxu0 0
        %3012 = vmatpush1.bf16.msra.mxu0 %v2299
        %3013 = vmatprep.subr.bf16.mxu0 0
        %3014 = vmatpush1.bf16.msra.mxu0 %v2300
        %3015 = vmatprep.subr.bf16.mxu0 0
        %3016 = vmatpush1.bf16.msra.mxu0 %v2301
        %3017 = vmatprep.mubr.bf16.mxu0 %v1223
        %3018 = vmatmul.mubr.bf16.gmra.mrb[0].mxu0 %v1222
        %v3019 = vpop.f32.mrb[0].mxu0
        %v3020 = vadd.f32 %v2955, %v3019
        %v3021 = vpop.f32.mrb[0].mxu0
        %v3022 = vpop.f32.mrb[0].mxu0
        %v3023 = vadd.f32 %v2958, %v3022
        %v3024 = vpop.f32.mrb[0].mxu0
        %3025 = vmatprep.mubr.bf16.mxu0 %v1248
        %3026 = vmatmul.mubr.bf16.gmra.mrb[0].mxu0 %v1247
        %v3027 = vpop.f32.mrb[0].mxu0
        %v3028 = vadd.f32 %v2963, %v3027
        %v3029 = vpop.f32.mrb[0].mxu0
        %v3030 = vpop.f32.mrb[0].mxu0
        %v3031 = vadd.f32 %v2966, %v3030
        %v3032 = vpop.f32.mrb[0].mxu0
        %3033 = vmatprep.mubr.bf16.mxu0 %v1273
        %3034 = vmatmul.mubr.bf16.gmra.mrb[0].mxu0 %v1272
        %v3035 = vpop.f32.mrb[0].mxu0
        %v3036 = vadd.f32 %v2971, %v3035
        %v3037 = vpop.f32.mrb[0].mxu0
        %v3038 = vpop.f32.mrb[0].mxu0
        %v3039 = vadd.f32 %v2974, %v3038
        %v3040 = vpop.f32.mrb[0].mxu0
        %3041 = vmatprep.mubr.bf16.mxu0 %v1298
        %3042 = vmatmul.mubr.bf16.gmra.mrb[0].mxu0 %v1297
        %v3043 = vpop.f32.mrb[0].mxu0
        %v3044 = vadd.f32 %v2979, %v3043
        %v3045 = vpop.f32.mrb[0].mxu0
        %v3046 = vpop.f32.mrb[0].mxu0
        %v3047 = vadd.f32 %v2982, %v3046
        %v3048 = vpop.f32.mrb[0].mxu0
        %3049 = vdwg.mxu0
        %3050 = vmatprep.subr.bf16.mxu0 0
        %3051 = vmatpush1.bf16.msra.mxu0 %v2302
        %3052 = vmatprep.subr.bf16.mxu0 0
        %3053 = vmatpush1.bf16.msra.mxu0 %v2303
        %3054 = vmatprep.subr.bf16.mxu0 0
        %3055 = vmatpush1.bf16.msra.mxu0 %v2304
        %3056 = vmatprep.subr.bf16.mxu0 0
        %3057 = vmatpush1.bf16.msra.mxu0 %v2305
        %3058 = vmatprep.subr.bf16.mxu0 0
        %3059 = vmatpush1.bf16.msra.mxu0 %v2306
        %3060 = vmatprep.subr.bf16.mxu0 0
        %3061 = vmatpush1.bf16.msra.mxu0 %v2307
        %3062 = vmatprep.subr.bf16.mxu0 0
        %3063 = vmatpush1.bf16.msra.mxu0 %v2308
        %3064 = vmatprep.subr.bf16.mxu0 0
        %3065 = vmatpush1.bf16.msra.mxu0 %v2309
        %3066 = vmatprep.subr.bf16.mxu0 0
        %3067 = vmatpush1.bf16.msra.mxu0 %v2310
        %3068 = vmatprep.subr.bf16.mxu0 0
        %3069 = vmatpush1.bf16.msra.mxu0 %v2311
        %3070 = vmatprep.subr.bf16.mxu0 0
        %3071 = vmatpush1.bf16.msra.mxu0 %v2312
        %3072 = vmatprep.subr.bf16.mxu0 0
        %3073 = vmatpush1.bf16.msra.mxu0 %v2313
        %3074 = vmatprep.subr.bf16.mxu0 0
        %3075 = vmatpush1.bf16.msra.mxu0 %v2314
        %3076 = vmatprep.subr.bf16.mxu0 0
        %3077 = vmatpush1.bf16.msra.mxu0 %v2315
        %3078 = vmatprep.subr.bf16.mxu0 0
        %3079 = vmatpush1.bf16.msra.mxu0 %v2316
        %3080 = vmatprep.subr.bf16.mxu0 0
        %3081 = vmatpush1.bf16.msra.mxu0 %v2317
        %3082 = vmatprep.mubr.bf16.mxu0 %v1225
        %3083 = vmatmul.mubr.bf16.gmra.mrb[0].mxu0 %v1224
        %v3084 = vpop.f32.mrb[0].mxu0
        %v3085 = vadd.f32 %v3020, %v3084
        %v3086 = vpop.f32.mrb[0].mxu0
        %v3087 = vpop.f32.mrb[0].mxu0
        %v3088 = vadd.f32 %v3023, %v3087
        %v3089 = vpop.f32.mrb[0].mxu0
        %3090 = vmatprep.mubr.bf16.mxu0 %v1250
        %3091 = vmatmul.mubr.bf16.gmra.mrb[0].mxu0 %v1249
        %v3092 = vpop.f32.mrb[0].mxu0
        %v3093 = vadd.f32 %v3028, %v3092
        %v3094 = vpop.f32.mrb[0].mxu0
        %v3095 = vpop.f32.mrb[0].mxu0
        %v3096 = vadd.f32 %v3031, %v3095
        %v3097 = vpop.f32.mrb[0].mxu0
        %3098 = vmatprep.mubr.bf16.mxu0 %v1275
        %3099 = vmatmul.mubr.bf16.gmra.mrb[0].mxu0 %v1274
        %v3100 = vpop.f32.mrb[0].mxu0
        %v3101 = vadd.f32 %v3036, %v3100
        %v3102 = vpop.f32.mrb[0].mxu0
        %v3103 = vpop.f32.mrb[0].mxu0
        %v3104 = vadd.f32 %v3039, %v3103
        %v3105 = vpop.f32.mrb[0].mxu0
        %3106 = vmatprep.mubr.bf16.mxu0 %v1300
        %3107 = vmatmul.mubr.bf16.gmra.mrb[0].mxu0 %v1299
        %v3108 = vpop.f32.mrb[0].mxu0
        %v3109 = vadd.f32 %v3044, %v3108
        %v3110 = vpop.f32.mrb[0].mxu0
        %v3111 = vpop.f32.mrb[0].mxu0
        %v3112 = vadd.f32 %v3047, %v3111
        %v3113 = vpop.f32.mrb[0].mxu0
        %3114 = vdwg.mxu0
        %3115 = vmatprep.subr.bf16.mxu0 0
        %3116 = vmatpush1.bf16.msra.mxu0 %v2318
        %3117 = vmatprep.subr.bf16.mxu0 0
        %3118 = vmatpush1.bf16.msra.mxu0 %v2319
        %3119 = vmatprep.subr.bf16.mxu0 0
        %3120 = vmatpush1.bf16.msra.mxu0 %v2320
        %3121 = vmatprep.subr.bf16.mxu0 0
        %3122 = vmatpush1.bf16.msra.mxu0 %v2321
        %3123 = vmatprep.subr.bf16.mxu0 0
        %3124 = vmatpush1.bf16.msra.mxu0 %v2322
        %3125 = vmatprep.subr.bf16.mxu0 0
        %3126 = vmatpush1.bf16.msra.mxu0 %v2323
        %3127 = vmatprep.subr.bf16.mxu0 0
        %3128 = vmatpush1.bf16.msra.mxu0 %v2324
        %3129 = vmatprep.subr.bf16.mxu0 0
        %3130 = vmatpush1.bf16.msra.mxu0 %v2325
        %3131 = vmatprep.subr.bf16.mxu0 0
        %3132 = vmatpush1.bf16.msra.mxu0 %v2326
        %3133 = vmatprep.subr.bf16.mxu0 0
        %3134 = vmatpush1.bf16.msra.mxu0 %v2327
        %3135 = vmatprep.subr.bf16.mxu0 0
        %3136 = vmatpush1.bf16.msra.mxu0 %v2328
        %3137 = vmatprep.subr.bf16.mxu0 0
        %3138 = vmatpush1.bf16.msra.mxu0 %v2329
        %3139 = vmatprep.subr.bf16.mxu0 0
        %3140 = vmatpush1.bf16.msra.mxu0 %v2330
        %3141 = vmatprep.subr.bf16.mxu0 0
        %3142 = vmatpush1.bf16.msra.mxu0 %v2331
        %3143 = vmatprep.subr.bf16.mxu0 0
        %3144 = vmatpush1.bf16.msra.mxu0 %v2332
        %3145 = vmatprep.subr.bf16.mxu0 0
        %3146 = vmatpush1.bf16.msra.mxu0 %v2333
        %3147 = vmatprep.mubr.bf16.mxu0 %v1227
        %3148 = vmatmul.mubr.bf16.gmra.mrb[0].mxu0 %v1226
        %v3149 = vpop.f32.mrb[0].mxu0
        %v3150 = vadd.f32 %v3085, %v3149
        %v3151 = vpop.f32.mrb[0].mxu0
        %v3152 = vpop.f32.mrb[0].mxu0
        %v3153 = vadd.f32 %v3088, %v3152
        %v3154 = vpop.f32.mrb[0].mxu0
        %3155 = vmatprep.mubr.bf16.mxu0 %v1252
        %3156 = vmatmul.mubr.bf16.gmra.mrb[0].mxu0 %v1251
        %v3157 = vpop.f32.mrb[0].mxu0
        %v3158 = vadd.f32 %v3093, %v3157
        %v3159 = vpop.f32.mrb[0].mxu0
        %v3160 = vpop.f32.mrb[0].mxu0
        %v3161 = vadd.f32 %v3096, %v3160
        %v3162 = vpop.f32.mrb[0].mxu0
        %3163 = vmatprep.mubr.bf16.mxu0 %v1277
        %3164 = vmatmul.mubr.bf16.gmra.mrb[0].mxu0 %v1276
        %v3165 = vpop.f32.mrb[0].mxu0
        %v3166 = vadd.f32 %v3101, %v3165
        %v3167 = vpop.f32.mrb[0].mxu0
        %v3168 = vpop.f32.mrb[0].mxu0
        %v3169 = vadd.f32 %v3104, %v3168
        %v3170 = vpop.f32.mrb[0].mxu0
        %3171 = vmatprep.mubr.bf16.mxu0 %v1302
        %3172 = vmatmul.mubr.bf16.gmra.mrb[0].mxu0 %v1301
        %v3173 = vpop.f32.mrb[0].mxu0
        %v3174 = vadd.f32 %v3109, %v3173
        %v3175 = vpop.f32.mrb[0].mxu0
        %v3176 = vpop.f32.mrb[0].mxu0
        %v3177 = vadd.f32 %v3112, %v3176
        %v3178 = vpop.f32.mrb[0].mxu0
        %3179 = vdwg.mxu0
        %3180 = vmatprep.subr.bf16.mxu0 0
        %3181 = vmatpush1.bf16.msra.mxu0 %v2334
        %3182 = vmatprep.subr.bf16.mxu0 0
        %3183 = vmatpush1.bf16.msra.mxu0 %v2335
        %3184 = vmatprep.subr.bf16.mxu0 0
        %3185 = vmatpush1.bf16.msra.mxu0 %v2336
        %3186 = vmatprep.subr.bf16.mxu0 0
        %3187 = vmatpush1.bf16.msra.mxu0 %v2337
        %3188 = vmatprep.subr.bf16.mxu0 0
        %3189 = vmatpush1.bf16.msra.mxu0 %v2338
        %3190 = vmatprep.subr.bf16.mxu0 0
        %3191 = vmatpush1.bf16.msra.mxu0 %v2339
        %3192 = vmatprep.subr.bf16.mxu0 0
        %3193 = vmatpush1.bf16.msra.mxu0 %v2340
        %3194 = vmatprep.subr.bf16.mxu0 0
        %3195 = vmatpush1.bf16.msra.mxu0 %v2341
        %3196 = vmatprep.subr.bf16.mxu0 0
        %3197 = vmatpush1.bf16.msra.mxu0 %v2342
        %3198 = vmatprep.subr.bf16.mxu0 0
        %3199 = vmatpush1.bf16.msra.mxu0 %v2343
        %3200 = vmatprep.subr.bf16.mxu0 0
        %3201 = vmatpush1.bf16.msra.mxu0 %v2344
        %3202 = vmatprep.subr.bf16.mxu0 0
        %3203 = vmatpush1.bf16.msra.mxu0 %v2345
        %3204 = vmatprep.subr.bf16.mxu0 0
        %3205 = vmatpush1.bf16.msra.mxu0 %v2346
        %3206 = vmatprep.subr.bf16.mxu0 0
        %3207 = vmatpush1.bf16.msra.mxu0 %v2347
        %3208 = vmatprep.subr.bf16.mxu0 0
        %3209 = vmatpush1.bf16.msra.mxu0 %v2348
        %3210 = vmatprep.subr.bf16.mxu0 0
        %3211 = vmatpush1.bf16.msra.mxu0 %v2349
        %3212 = vmatprep.mubr.bf16.mxu0 %v1229
        %3213 = vmatmul.mubr.bf16.gmra.mrb[0].mxu0 %v1228
        %v3214 = vpop.f32.mrb[0].mxu0
        %v3215 = vadd.f32 %v3150, %v3214
        %v3216 = vpop.f32.mrb[0].mxu0
        %v3217 = vpop.f32.mrb[0].mxu0
        %v3218 = vadd.f32 %v3153, %v3217
        %v3219 = vpop.f32.mrb[0].mxu0
        %3220 = vmatprep.mubr.bf16.mxu0 %v1254
        %3221 = vmatmul.mubr.bf16.gmra.mrb[0].mxu0 %v1253
        %v3222 = vpop.f32.mrb[0].mxu0
        %v3223 = vadd.f32 %v3158, %v3222
        %v3224 = vpop.f32.mrb[0].mxu0
        %v3225 = vpop.f32.mrb[0].mxu0
        %v3226 = vadd.f32 %v3161, %v3225
        %v3227 = vpop.f32.mrb[0].mxu0
        %3228 = vmatprep.mubr.bf16.mxu0 %v1279
        %3229 = vmatmul.mubr.bf16.gmra.mrb[0].mxu0 %v1278
        %v3230 = vpop.f32.mrb[0].mxu0
        %v3231 = vadd.f32 %v3166, %v3230
        %v3232 = vpop.f32.mrb[0].mxu0
        %v3233 = vpop.f32.mrb[0].mxu0
        %v3234 = vadd.f32 %v3169, %v3233
        %v3235 = vpop.f32.mrb[0].mxu0
        %3236 = vmatprep.mubr.bf16.mxu0 %v1304
        %3237 = vmatmul.mubr.bf16.gmra.mrb[0].mxu0 %v1303
        %v3238 = vpop.f32.mrb[0].mxu0
        %v3239 = vadd.f32 %v3174, %v3238
        %v3240 = vpop.f32.mrb[0].mxu0
        %v3241 = vpop.f32.mrb[0].mxu0
        %v3242 = vadd.f32 %v3177, %v3241
        %v3243 = vpop.f32.mrb[0].mxu0
        %3244 = vdwg.mxu0
        %3245 = vmatprep.subr.bf16.mxu0 0
        %3246 = vmatpush1.bf16.msra.mxu0 %v2350
        %3247 = vmatprep.subr.bf16.mxu0 0
        %3248 = vmatpush1.bf16.msra.mxu0 %v2351
        %3249 = vmatprep.subr.bf16.mxu0 0
        %3250 = vmatpush1.bf16.msra.mxu0 %v2352
        %3251 = vmatprep.subr.bf16.mxu0 0
        %3252 = vmatpush1.bf16.msra.mxu0 %v2353
        %3253 = vmatprep.subr.bf16.mxu0 0
        %3254 = vmatpush1.bf16.msra.mxu0 %v2354
        %3255 = vmatprep.subr.bf16.mxu0 0
        %3256 = vmatpush1.bf16.msra.mxu0 %v2355
        %3257 = vmatprep.subr.bf16.mxu0 0
        %3258 = vmatpush1.bf16.msra.mxu0 %v2356
        %3259 = vmatprep.subr.bf16.mxu0 0
        %3260 = vmatpush1.bf16.msra.mxu0 %v2357
        %3261 = vmatprep.subr.bf16.mxu0 0
        %3262 = vmatpush1.bf16.msra.mxu0 %v2358
        %3263 = vmatprep.subr.bf16.mxu0 0
        %3264 = vmatpush1.bf16.msra.mxu0 %v2359
        %3265 = vmatprep.subr.bf16.mxu0 0
        %3266 = vmatpush1.bf16.msra.mxu0 %v2360
        %3267 = vmatprep.subr.bf16.mxu0 0
        %3268 = vmatpush1.bf16.msra.mxu0 %v2361
        %3269 = vmatprep.subr.bf16.mxu0 0
        %3270 = vmatpush1.bf16.msra.mxu0 %v2362
        %3271 = vmatprep.subr.bf16.mxu0 0
        %3272 = vmatpush1.bf16.msra.mxu0 %v2363
        %3273 = vmatprep.subr.bf16.mxu0 0
        %3274 = vmatpush1.bf16.msra.mxu0 %v2364
        %3275 = vmatprep.subr.bf16.mxu0 0
        %3276 = vmatpush1.bf16.msra.mxu0 %v2365
        %3277 = vmatprep.mubr.bf16.mxu0 %v1231
        %3278 = vmatmul.mubr.bf16.gmra.mrb[0].mxu0 %v1230
        %v3279 = vpop.f32.mrb[0].mxu0
        %v3280 = vadd.f32 %v3215, %v3279
        %v3281 = vpop.f32.mrb[0].mxu0
        %v3282 = vpop.f32.mrb[0].mxu0
        %v3283 = vadd.f32 %v3218, %v3282
        %v3284 = vpop.f32.mrb[0].mxu0
        %3285 = vmatprep.mubr.bf16.mxu0 %v1256
        %3286 = vmatmul.mubr.bf16.gmra.mrb[0].mxu0 %v1255
        %v3287 = vpop.f32.mrb[0].mxu0
        %v3288 = vadd.f32 %v3223, %v3287
        %v3289 = vpop.f32.mrb[0].mxu0
        %v3290 = vpop.f32.mrb[0].mxu0
        %v3291 = vadd.f32 %v3226, %v3290
        %v3292 = vpop.f32.mrb[0].mxu0
        %3293 = vmatprep.mubr.bf16.mxu0 %v1281
        %3294 = vmatmul.mubr.bf16.gmra.mrb[0].mxu0 %v1280
        %v3295 = vpop.f32.mrb[0].mxu0
        %v3296 = vadd.f32 %v3231, %v3295
        %v3297 = vpop.f32.mrb[0].mxu0
        %v3298 = vpop.f32.mrb[0].mxu0
        %v3299 = vadd.f32 %v3234, %v3298
        %v3300 = vpop.f32.mrb[0].mxu0
        %3301 = vmatprep.mubr.bf16.mxu0 %v1306
        %3302 = vmatmul.mubr.bf16.gmra.mrb[0].mxu0 %v1305
        %v3303 = vpop.f32.mrb[0].mxu0
        %v3304 = vadd.f32 %v3239, %v3303
        %v3305 = vpop.f32.mrb[0].mxu0
        %v3306 = vpop.f32.mrb[0].mxu0
        %v3307 = vadd.f32 %v3242, %v3306
        %v3308 = vpop.f32.mrb[0].mxu0
        %3309 = vdwg.mxu0
        %3310 = vmatprep.subr.bf16.mxu0 0
        %3311 = vmatpush1.bf16.msra.mxu0 %v2366
        %3312 = vmatprep.subr.bf16.mxu0 0
        %3313 = vmatpush1.bf16.msra.mxu0 %v2367
        %3314 = vmatprep.subr.bf16.mxu0 0
        %3315 = vmatpush1.bf16.msra.mxu0 %v2368
        %3316 = vmatprep.subr.bf16.mxu0 0
        %3317 = vmatpush1.bf16.msra.mxu0 %v2369
        %3318 = vmatprep.subr.bf16.mxu0 0
        %3319 = vmatpush1.bf16.msra.mxu0 %v2370
        %3320 = vmatprep.subr.bf16.mxu0 0
        %3321 = vmatpush1.bf16.msra.mxu0 %v2371
        %3322 = vmatprep.subr.bf16.mxu0 0
        %3323 = vmatpush1.bf16.msra.mxu0 %v2372
        %3324 = vmatprep.subr.bf16.mxu0 0
        %3325 = vmatpush1.bf16.msra.mxu0 %v2373
        %3326 = vmatprep.subr.bf16.mxu0 0
        %3327 = vmatpush1.bf16.msra.mxu0 %v2374
        %3328 = vmatprep.subr.bf16.mxu0 0
        %3329 = vmatpush1.bf16.msra.mxu0 %v2375
        %3330 = vmatprep.subr.bf16.mxu0 0
        %3331 = vmatpush1.bf16.msra.mxu0 %v2376
        %3332 = vmatprep.subr.bf16.mxu0 0
        %3333 = vmatpush1.bf16.msra.mxu0 %v2377
        %3334 = vmatprep.subr.bf16.mxu0 0
        %3335 = vmatpush1.bf16.msra.mxu0 %v2378
        %3336 = vmatprep.subr.bf16.mxu0 0
        %3337 = vmatpush1.bf16.msra.mxu0 %v2379
        %3338 = vmatprep.subr.bf16.mxu0 0
        %3339 = vmatpush1.bf16.msra.mxu0 %v2380
        %3340 = vmatprep.subr.bf16.mxu0 0
        %3341 = vmatpush1.bf16.msra.mxu0 %v2381
        %3342 = vmatprep.mubr.bf16.mxu0 %v1233
        %3343 = vmatmul.mubr.bf16.gmra.mrb[0].mxu0 %v1232
        %v3344 = vpop.f32.mrb[0].mxu0
        %v3345 = vadd.f32 %v3280, %v3344
        %v3346 = vpop.f32.mrb[0].mxu0
        %v3347 = vpop.f32.mrb[0].mxu0
        %v3348 = vadd.f32 %v3283, %v3347
        %v3349 = vpop.f32.mrb[0].mxu0
        %3350 = vmatprep.mubr.bf16.mxu0 %v1258
        %3351 = vmatmul.mubr.bf16.gmra.mrb[0].mxu0 %v1257
        %v3352 = vpop.f32.mrb[0].mxu0
        %v3353 = vadd.f32 %v3288, %v3352
        %v3354 = vpop.f32.mrb[0].mxu0
        %v3355 = vpop.f32.mrb[0].mxu0
        %v3356 = vadd.f32 %v3291, %v3355
        %v3357 = vpop.f32.mrb[0].mxu0
        %3358 = vmatprep.mubr.bf16.mxu0 %v1283
        %3359 = vmatmul.mubr.bf16.gmra.mrb[0].mxu0 %v1282
        %v3360 = vpop.f32.mrb[0].mxu0
        %v3361 = vadd.f32 %v3296, %v3360
        %v3362 = vpop.f32.mrb[0].mxu0
        %v3363 = vpop.f32.mrb[0].mxu0
        %v3364 = vadd.f32 %v3299, %v3363
        %v3365 = vpop.f32.mrb[0].mxu0
        %3366 = vmatprep.mubr.bf16.mxu0 %v1308
        %3367 = vmatmul.mubr.bf16.gmra.mrb[0].mxu0 %v1307
        %v3368 = vpop.f32.mrb[0].mxu0
        %v3369 = vadd.f32 %v3304, %v3368
        %v3370 = vpop.f32.mrb[0].mxu0
        %v3371 = vpop.f32.mrb[0].mxu0
        %v3372 = vadd.f32 %v3307, %v3371
        %v3373 = vpop.f32.mrb[0].mxu0
        %3374 = vdwg.mxu0
        %3375 = vmatprep.subr.bf16.mxu0 0
        %3376 = vmatpush1.bf16.msra.mxu0 %v2382
        %3377 = vmatprep.subr.bf16.mxu0 0
        %3378 = vmatpush1.bf16.msra.mxu0 %v2383
        %3379 = vmatprep.subr.bf16.mxu0 0
        %3380 = vmatpush1.bf16.msra.mxu0 %v2384
        %3381 = vmatprep.subr.bf16.mxu0 0
        %3382 = vmatpush1.bf16.msra.mxu0 %v2385
        %3383 = vmatprep.subr.bf16.mxu0 0
        %3384 = vmatpush1.bf16.msra.mxu0 0
        %3385 = vmatprep.subr.bf16.mxu0 0
        %3386 = vmatpush1.bf16.msra.mxu0 0
        %3387 = vmatprep.subr.bf16.mxu0 0
        %3388 = vmatpush1.bf16.msra.mxu0 0
        %3389 = vmatprep.subr.bf16.mxu0 0
        %3390 = vmatpush1.bf16.msra.mxu0 0
        %3391 = vmatprep.subr.bf16.mxu0 0
        %3392 = vmatpush1.bf16.msra.mxu0 0
        %3393 = vmatprep.subr.bf16.mxu0 0
        %3394 = vmatpush1.bf16.msra.mxu0 0
        %3395 = vmatprep.subr.bf16.mxu0 0
        %3396 = vmatpush1.bf16.msra.mxu0 0
        %3397 = vmatprep.subr.bf16.mxu0 0
        %3398 = vmatpush1.bf16.msra.mxu0 0
        %3399 = vmatprep.subr.bf16.mxu0 0
        %3400 = vmatpush1.bf16.msra.mxu0 0
        %3401 = vmatprep.subr.bf16.mxu0 0
        %3402 = vmatpush1.bf16.msra.mxu0 0
        %3403 = vmatprep.subr.bf16.mxu0 0
        %3404 = vmatpush1.bf16.msra.mxu0 0
        %3405 = vmatprep.subr.bf16.mxu0 0
        %3406 = vmatpush1.bf16.msra.mxu0 0
        %3407 = vmatprep.mubr.bf16.mxu0 0
        %3408 = vmatmul.mubr.bf16.gmra.mrb[0].mxu0 %v2584
        %v3409 = vpop.f32.mrb[0].mxu0
        %v3410 = vadd.f32 %v3345, %v3409
        %v3411 = vpop.f32.mrb[0].mxu0
        %v3412 = vpop.f32.mrb[0].mxu0
        %v3413 = vadd.f32 %v3348, %v3412
        %v3414 = vpop.f32.mrb[0].mxu0
        %3415 = vmatprep.mubr.bf16.mxu0 0
        %3416 = vmatmul.mubr.bf16.gmra.mrb[0].mxu0 %v2587
        %v3417 = vpop.f32.mrb[0].mxu0
        %v3418 = vadd.f32 %v3353, %v3417
        %v3419 = vpop.f32.mrb[0].mxu0
        %v3420 = vpop.f32.mrb[0].mxu0
        %v3421 = vadd.f32 %v3356, %v3420
        %v3422 = vpop.f32.mrb[0].mxu0
        %3423 = vmatprep.mubr.bf16.mxu0 0
        %3424 = vmatmul.mubr.bf16.gmra.mrb[0].mxu0 %v2590
        %v3425 = vpop.f32.mrb[0].mxu0
        %v3426 = vadd.f32 %v3361, %v3425
        %v3427 = vpop.f32.mrb[0].mxu0
        %v3428 = vpop.f32.mrb[0].mxu0
        %v3429 = vadd.f32 %v3364, %v3428
        %v3430 = vpop.f32.mrb[0].mxu0
        %3431 = vmatprep.mubr.bf16.mxu0 0
        %3432 = vmatmul.mubr.bf16.gmra.mrb[0].mxu0 %v2593
        %v3433 = vpop.f32.mrb[0].mxu0
        %v3434 = vadd.f32 %v3369, %v3433
        %v3435 = vpop.f32.mrb[0].mxu0
        %v3436 = vpop.f32.mrb[0].mxu0
        %v3437 = vadd.f32 %v3372, %v3436
        %v3438 = vpop.f32.mrb[0].mxu0
        %3439 = vdwg.mxu0
        %v3440 = vmax.f32 %v3410, %v3418
        %v3441 = vmax.f32 %v3413, %v3421
        %v3442 = vmax.f32 %v3426, %v3434
        %v3443 = vmax.f32 %v3429, %v3437
        %v3444 = vmax.f32 %v3440, %v3442
        %v3445 = vmax.f32 %v3441, %v3443
        %v3446 = vld [vmem:[%s2] sm:$0x1]
        %v3448 = vlaneseq
        %v3449 = vshrl.u32 %v3448, 7
        %v3450 = vsub.s32 0, %v3449
        %v3451 = vrot.slane %v3446, %v3450
        %v3453 = vadd.f32 %v3444, %v3451
        %v3454 = vadd.f32 %v3445, %v3451
        %v3455 = vmax.f32 %v3453, 0.0
        %v3456 = vmax.f32 %v3454, 0.0
        %3457 = vst [vmem:[%s407] sm:$0xff] %v3455
        %3458 = vst [vmem:[%s407 + $0x8] sm:$0xff] %v3456
        %s3459 = smul.u32 2, %s14
        %p3460 = scmp.lt.s32.totalorder %s3459, 3
        %s3461 = scalar_select %p3460, %s3459, 3
        %s3462 = smul.addr %s3461, 8
        %s3463 = scalar_lea.vmem %s3, %s3462
        // Predicated region
        $region59: #{simple_cnn_forward.3} parent=53 // pred_check
          %p3464 = pneg %p100
        $region60: #{simple_cnn_forward.3} parent=53 // pred_check_branch
          %3466 = sbr.rel (%p3464) target = $region62
        $region61: #{simple_cnn_forward.3} parent=53 // pred_region
          %s3467 = smul.u32 2, %s14
        $region62: #{simple_cnn_forward.3} parent=53 // pred_fallthru
          _
      $region54: #{simple_cnn_forward.3} parent=5 // pred_fallthru
        _
      %p3468 = scmp.le.s32.totalorder 2, %s9
      // Predicated region
      $region63: #{simple_cnn_forward.3} parent=5 // pred_check
        %p3469 = pneg %p3468
      $region64: #{simple_cnn_forward.3} parent=5 // pred_check_branch
        %3471 = sbr.rel (%p3469) target = $region66
      $region65: #{simple_cnn_forward.3} parent=5 // pred_region
        %s3472 = ssub.s32 %s9, 2
        // Predicated region
        $region67: #{simple_cnn_forward.3} parent=65 // pred_check
          %p3473 = pneg %p106
        $region68: #{simple_cnn_forward.3} parent=65 // pred_check_branch
          %3475 = sbr.rel (%p3473) target = $region70
        $region69: #{simple_cnn_forward.3} parent=65 // pred_region
          %s3476 = smul.u32 2, %s15
          %p3477 = scmp.lt.s32.totalorder %s3476, 3
          %s3478 = scalar_select %p3477, %s3476, 3
          %s3479 = smul.addr %s3478, 8
          %s3480 = scalar_lea.vmem %s3, %s3479
        $region70: #{simple_cnn_forward.3} parent=65 // pred_fallthru
          _
      $region66: #{simple_cnn_forward.3} parent=5 // pred_fallthru
        _
    $region6: #{simple_cnn_forward.3} parent=1 // loop_footer
      %s13 = sadd.s32 1, %s9
    $region7: #{simple_cnn_forward.3} parent=1 // loop_footer_branch
      %8 = sbr.rel target = $region3
    $region8: #{simple_cnn_forward.3} parent=1 // loop_exit
      _

</llo_original>
